<compile_context>
chip_gen: v7x
topology: tpu7x:2x2x1
jax: 0.10.0
libtpu: 0.0.40
codegen_flags: <defaults>
</compile_context>

<pallas_src>
import functools

import jax
import jax.numpy as jnp
from jax.experimental import pallas as pl
from jax.experimental.pallas import tpu as pltpu


# ---------------------------------------------------------------------------
# Single fused decoder kernel (all layers, grid = (B, n_layers))
# ---------------------------------------------------------------------------

def _decoder_kernel(*refs, n_heads, d_k, d_v, scale, eps, write_attn):
    (x_ref, enc_ref, dpad_ref, epad_ref,
     s_wqkv, s_bqkv, s_wo, s_bo, s_g, s_b,
     c_wq, c_bq, c_wkv, c_bkv, c_wo, c_bo, c_g, c_b,
     f_w1, f_b1, f_w2, f_b2, f_g, f_b) = refs[:24]
    if write_attn:
        out_ref, sattn_ref, eattn_ref, h_ref = refs[24:]
    else:
        out_ref, h_ref = refs[24:]
        sattn_ref = eattn_ref = None

    H, dk, dv = n_heads, d_k, d_v
    bf16, f32 = jnp.bfloat16, jnp.float32
    layer = pl.program_id(1)
    n_layers = pl.num_programs(1)

    # Layer 0: load the embedded decoder input into the VMEM-resident activation carry.
    @pl.when(layer == 0)
    def _():
        h_ref[...] = x_ref[0]

    x = h_ref[...]                     # (L, D)  f32, carried across layers in VMEM
    enc = enc_ref[0]                   # (Le, D) f32, resident across the layer axis
    L, D = x.shape
    Le = enc.shape[0]

    # Hoisted mask work: one compare per layer (not per head).
    row = jax.lax.broadcasted_iota(jnp.int32, (L, L), 0)
    col = jax.lax.broadcasted_iota(jnp.int32, (L, L), 1)
    self_masked = (col > row) | (dpad_ref[0] > 0.0)     # (L, L) bool (causal | dec pad)
    enc_masked = epad_ref[0] > 0.0                      # (1, Le) bool

    def layer_norm(v, g, b):
        mu = jnp.mean(v, axis=-1, keepdims=True)
        var = jnp.mean((v - mu) ** 2, axis=-1, keepdims=True)
        return (v - mu) * jax.lax.rsqrt(var + eps) * g + b

    def softmax_masked(s, masked):
        s = jnp.where(masked, -1e9, s)                  # == masked_fill_(mask, -1e9)
        s = s - jnp.max(s, axis=-1, keepdims=True)
        e = jnp.exp(s)
        return e / jnp.sum(e, axis=-1, keepdims=True)

    def attention(q_all, k_all, v_all, masked, wo, bo, attn_out_ref):
        # q_all/k_all/v_all already bf16; heads unrolled, output projection fused.
        ctxs, attns = [], []
        for h in range(H):
            q_h = q_all[:, h * dk:(h + 1) * dk]
            k_h = k_all[:, h * dk:(h + 1) * dk]
            v_h = v_all[:, h * dv:(h + 1) * dv]
            s = jax.lax.dot_general(q_h, k_h, (((1,), (1,)), ((), ())),
                                    preferred_element_type=f32) * scale
            attn = softmax_masked(s, masked)
            if attn_out_ref is not None:
                attns.append(attn)
            ctxs.append(jnp.dot(attn.astype(bf16), v_h, preferred_element_type=f32))
        if attn_out_ref is not None:
            # lane-dense packed store: heads along the last axis, one store per block
            attn_out_ref[0, 0] = jnp.concatenate(attns, axis=-1)
        ctx = jnp.concatenate(ctxs, axis=-1).astype(bf16)            # (L, H*dv)
        return jnp.dot(ctx, wo, preferred_element_type=f32) + bo     # single Wo matmul

    # ---------------- masked self-attention ----------------
    qkv = (jnp.dot(x.astype(bf16), s_wqkv[0], preferred_element_type=f32)
           + s_bqkv[0]).astype(bf16)                                 # cast once
    proj = attention(qkv[:, :H * dk], qkv[:, H * dk:2 * H * dk], qkv[:, 2 * H * dk:],
                     self_masked, s_wo[0], s_bo[0], sattn_ref)
    y1 = layer_norm(x + proj, s_g[0], s_b[0])

    # ---------------- encoder-decoder attention ----------------
    q_all = (jnp.dot(y1.astype(bf16), c_wq[0], preferred_element_type=f32)
             + c_bq[0]).astype(bf16)
    kv = (jnp.dot(enc.astype(bf16), c_wkv[0], preferred_element_type=f32)
          + c_bkv[0]).astype(bf16)
    proj = attention(q_all, kv[:, :H * dk], kv[:, H * dk:],
                     enc_masked, c_wo[0], c_bo[0], eattn_ref)
    y2 = layer_norm(y1 + proj, c_g[0], c_b[0])

    # ---------------- position-wise FFN (Conv1d k=1 == matmul) ----------------
    hdn = jnp.maximum(jnp.dot(y2.astype(bf16), f_w1[0], preferred_element_type=f32)
                      + f_b1[0], 0.0)
    o = jnp.dot(hdn.astype(bf16), f_w2[0], preferred_element_type=f32) + f_b2[0]
    h_new = layer_norm(y2 + o, f_g[0], f_b[0])

    h_ref[...] = h_new                 # carry to next layer (stays in VMEM)

    @pl.when(layer == n_layers - 1)
    def _():
        out_ref[0] = h_new.astype(out_ref.dtype)


# ---------------------------------------------------------------------------
# Parameter setup (deterministic, in-script) -- weights stacked over layers
# ---------------------------------------------------------------------------

def make_pos_table(n_positions, d_model):
    # sinusoidal table with a zero "pad" row at index 0 (index i -> sinusoid(i-1))
    pos = jnp.arange(n_positions, dtype=jnp.float32)[:, None]
    j = jnp.arange(d_model)
    angle = pos / jnp.power(10000.0, (2.0 * (j // 2)).astype(jnp.float32) / d_model)
    pe = jnp.where(j % 2 == 0, jnp.sin(angle), jnp.cos(angle)).astype(jnp.float32)
    pad = jnp.zeros((1, d_model), jnp.float32)
    return jnp.concatenate([pad, pe], axis=0)


def init_params(key, n_layers, d_k, d_v, d_model, d_ff, n_heads,
                max_seq_len, tgt_vocab_size):
    H = n_heads

    def dense(k, fan_in, fan_out):
        # matmul weights stored in bf16 (f32 accumulation in-kernel); bias in f32
        w = (jax.random.normal(k, (fan_in, fan_out), jnp.float32) * 0.02).astype(jnp.bfloat16)
        return w, jnp.zeros((1, fan_out), jnp.float32)

    def ln():
        return (jnp.ones((1, d_model), jnp.float32),
                jnp.zeros((1, d_model), jnp.float32))

    layers = []
    for li in range(n_layers):
        ks = jax.random.split(jax.random.fold_in(key, 100 + li), 7)
        s_wqkv, s_bqkv = dense(ks[0], d_model, H * (2 * d_k + d_v))   # fused Wq|Wk|Wv
        s_wo, s_bo = dense(ks[1], H * d_v, d_model)                   # pre-flattened Wo
        s_g, s_b = ln()
        c_wq, c_bq = dense(ks[2], d_model, H * d_k)
        c_wkv, c_bkv = dense(ks[3], d_model, H * (d_k + d_v))         # fused Wk|Wv
        c_wo, c_bo = dense(ks[4], H * d_v, d_model)
        c_g, c_b = ln()
        f_w1, f_b1 = dense(ks[5], d_model, d_ff)
        f_w2, f_b2 = dense(ks[6], d_ff, d_model)
        f_g, f_b = ln()
        layers.append(dict(
            s_wqkv=s_wqkv, s_bqkv=s_bqkv, s_wo=s_wo, s_bo=s_bo, s_g=s_g, s_b=s_b,
            c_wq=c_wq, c_bq=c_bq, c_wkv=c_wkv, c_bkv=c_bkv, c_wo=c_wo, c_bo=c_bo,
            c_g=c_g, c_b=c_b,
            f_w1=f_w1, f_b1=f_b1, f_w2=f_w2, f_b2=f_b2, f_g=f_g, f_b=f_b))

    # stack every weight over the layer axis -> one pallas_call for the whole decoder
    stacked = jax.tree.map(lambda *xs: jnp.stack(xs), *layers)

    return {
        "tgt_emb": jax.random.normal(jax.random.fold_in(key, 0),
                                     (tgt_vocab_size, d_model), jnp.float32) * 0.02,
        "pos_table": make_pos_table(max_seq_len * 10, d_model),
        "layers": stacked,
    }


_WEIGHT_KEYS = ("s_wqkv", "s_bqkv", "s_wo", "s_bo", "s_g", "s_b",
                "c_wq", "c_bq", "c_wkv", "c_bkv", "c_wo", "c_bo", "c_g", "c_b",
                "f_w1", "f_b1", "f_w2", "f_b2", "f_g", "f_b")


# ---------------------------------------------------------------------------
# Decoder forward (glue: embedding / positional gather / pad masks)
# ---------------------------------------------------------------------------

def decoder_forward(params, dec_inputs, dec_inputs_len, enc_inputs, enc_outputs,
                    n_heads, d_k, d_v, return_attn=True):
    B, L = dec_inputs.shape
    Le = enc_inputs.shape[1]
    D = enc_outputs.shape[-1]
    H = n_heads
    lp = params["layers"]
    NL = lp["s_wqkv"].shape[0]

    # target embedding + positional encoding (gathers stay in plain JAX glue)
    # TODO(synk): a pad token of -1 wraps to the last vocab row (JAX negative
    #   indexing) -- same as the reference behavior; the pad mask handles it.
    x = params["tgt_emb"][dec_inputs]
    ar = jnp.arange(1, L + 1, dtype=jnp.int32)
    pos = jnp.where(ar[None, :] <= dec_inputs_len[:, None], ar[None, :], 0)
    x = x + params["pos_table"][pos]
    # TODO(synk): dropout_emb / attention / FFN dropouts are identity (eval mode).

    # only the pad masks go to HBM; the causal (triu) part is built in-kernel via iota
    dec_pad = (dec_inputs == -1).astype(jnp.float32)[:, None, :]   # (B,1,L)
    enc_pad = (enc_inputs == -1).astype(jnp.float32)[:, None, :]   # (B,1,Le)

    weights = [lp[k] for k in _WEIGHT_KEYS]

    def batch_spec(shape):
        nd = len(shape)
        return pl.BlockSpec((1,) + tuple(shape[1:]),
                            lambda b, l, _nd=nd: (b,) + (0,) * (_nd - 1))

    def layer_spec(shape):
        nd = len(shape)
        return pl.BlockSpec((1,) + tuple(shape[1:]),
                            lambda b, l, _nd=nd: (l,) + (0,) * (_nd - 1))

    in_specs = ([batch_spec(x.shape), batch_spec(enc_outputs.shape),
                 batch_spec(dec_pad.shape), batch_spec(enc_pad.shape)]
                + [layer_spec(w.shape) for w in weights])

    out_spec_x = pl.BlockSpec((1, L, D), lambda b, l: (b, 0, 0))
    if return_attn:
        # attention maps packed lane-dense (heads along the last axis)
        out_shape = [jax.ShapeDtypeStruct((B, L, D), jnp.float32),
                     jax.ShapeDtypeStruct((NL, B, L, H * L), jnp.float32),
                     jax.ShapeDtypeStruct((NL, B, L, H * Le), jnp.float32)]
        out_specs = [out_spec_x,
                     pl.BlockSpec((1, 1, L, H * L), lambda b, l: (l, b, 0, 0)),
                     pl.BlockSpec((1, 1, L, H * Le), lambda b, l: (l, b, 0, 0))]
    else:
        out_shape = jax.ShapeDtypeStruct((B, L, D), jnp.float32)
        out_specs = out_spec_x

    kernel = functools.partial(
        _decoder_kernel, n_heads=H, d_k=d_k, d_v=d_v,
        scale=1.0 / float(d_k) ** 0.5, eps=1e-5, write_attn=return_attn)

    res = pl.pallas_call(
        kernel,
        grid=(B, NL),
        in_specs=in_specs,
        out_specs=out_specs,
        out_shape=out_shape,
        scratch_shapes=[pltpu.VMEM((L, D), jnp.float32)],   # activation carry
        compiler_params=pltpu.CompilerParams(
            dimension_semantics=("parallel", "arbitrary")),  # v7x: TCs split batch
    )(x, enc_outputs, dec_pad, enc_pad, *weights)

    if return_attn:
        dec_out, sattn, eattn = res
        # unpack lane-dense layout back to the reference (B, H, L, Lk) per layer
        sattn = sattn.reshape(NL, B, L, H, L).transpose(0, 1, 3, 2, 4)
        eattn = eattn.reshape(NL, B, L, H, Le).transpose(0, 1, 3, 2, 4)
        return dec_out, [sattn[i] for i in range(NL)], [eattn[i] for i in range(NL)]
    return res, [], []


# ---------------------------------------------------------------------------

if __name__ == "__main__":
    key = jax.random.PRNGKey(0)

    n_layers, d_k, d_v, d_model, d_ff, n_heads = 2, 8, 8, 32, 64, 4
    max_seq_len, tgt_vocab_size = 16, 50
    B, L, Le = 2, 8, 8

    params = init_params(key, n_layers, d_k, d_v, d_model, d_ff, n_heads,
                         max_seq_len, tgt_vocab_size)

    dec_inputs = jax.random.randint(jax.random.fold_in(key, 1), (B, L), 0, tgt_vocab_size)
    dec_inputs_len = jnp.array([L, L - 2], dtype=jnp.int32)   # max(len) == L
    enc_inputs = jax.random.randint(jax.random.fold_in(key, 2), (B, Le), 0, tgt_vocab_size)
    enc_inputs = enc_inputs.at[0, Le - 2:].set(-1)            # some encoder padding (-1)
    enc_outputs = jax.random.normal(jax.random.fold_in(key, 3), (B, Le, d_model),
                                    jnp.float32)

    fwd = jax.jit(functools.partial(decoder_forward, n_heads=n_heads, d_k=d_k,
                                    d_v=d_v, return_attn=True))
    dec_out, self_attns, enc_attns = fwd(params, dec_inputs, dec_inputs_len,
                                         enc_inputs, enc_outputs)

    jax.block_until_ready(dec_out)
    assert dec_out.shape == (B, L, d_model)
    assert self_attns[0].shape == (B, n_heads, L, L)
    assert enc_attns[0].shape == (B, n_heads, L, Le)
    assert bool(jnp.all(jnp.isfinite(dec_out)))
    print("KERNEL_OK")
</pallas_src>

<mosaic_0001>
module attributes {stable_mosaic.version = 11 : i64} {
  func.func @_decoder_kernel(%arg0: i32, %arg1: i32, %arg2: memref<1x8x32xf32, #tpu.memory_space<vmem>>, %arg3: memref<1x8x32xf32, #tpu.memory_space<vmem>>, %arg4: memref<1x1x8xf32, #tpu.memory_space<vmem>>, %arg5: memref<1x1x8xf32, #tpu.memory_space<vmem>>, %arg6: memref<1x32x96xbf16, #tpu.memory_space<vmem>>, %arg7: memref<1x1x96xf32, #tpu.memory_space<vmem>>, %arg8: memref<1x32x32xbf16, #tpu.memory_space<vmem>>, %arg9: memref<1x1x32xf32, #tpu.memory_space<vmem>>, %arg10: memref<1x1x32xf32, #tpu.memory_space<vmem>>, %arg11: memref<1x1x32xf32, #tpu.memory_space<vmem>>, %arg12: memref<1x32x32xbf16, #tpu.memory_space<vmem>>, %arg13: memref<1x1x32xf32, #tpu.memory_space<vmem>>, %arg14: memref<1x32x64xbf16, #tpu.memory_space<vmem>>, %arg15: memref<1x1x64xf32, #tpu.memory_space<vmem>>, %arg16: memref<1x32x32xbf16, #tpu.memory_space<vmem>>, %arg17: memref<1x1x32xf32, #tpu.memory_space<vmem>>, %arg18: memref<1x1x32xf32, #tpu.memory_space<vmem>>, %arg19: memref<1x1x32xf32, #tpu.memory_space<vmem>>, %arg20: memref<1x32x64xbf16, #tpu.memory_space<vmem>>, %arg21: memref<1x1x64xf32, #tpu.memory_space<vmem>>, %arg22: memref<1x64x32xbf16, #tpu.memory_space<vmem>>, %arg23: memref<1x1x32xf32, #tpu.memory_space<vmem>>, %arg24: memref<1x1x32xf32, #tpu.memory_space<vmem>>, %arg25: memref<1x1x32xf32, #tpu.memory_space<vmem>>, %arg26: memref<1x8x32xf32, #tpu.memory_space<vmem>>, %arg27: memref<1x1x8x32xf32, #tpu.memory_space<vmem>>, %arg28: memref<1x1x8x32xf32, #tpu.memory_space<vmem>>, %arg29: memref<8x32xf32, #tpu.memory_space<vmem>>) attributes {dimension_semantics = [#tpu.dimension_semantics<parallel>, #tpu.dimension_semantics<arbitrary>], iteration_bounds = array<i64: 2, 2>, scalar_prefetch = 0 : i64, scratch_operands = 1 : i64, tpu.core_type = #tpu.core_type<tc>, window_params = [{transform_indices = @transform_0, window_bounds = array<i64: 1, 8, 32>}, {transform_indices = @transform_1, window_bounds = array<i64: 1, 8, 32>}, {transform_indices = @transform_2, window_bounds = array<i64: 1, 1, 8>}, {transform_indices = @transform_3, window_bounds = array<i64: 1, 1, 8>}, {transform_indices = @transform_4, window_bounds = array<i64: 1, 32, 96>}, {transform_indices = @transform_5, window_bounds = array<i64: 1, 1, 96>}, {transform_indices = @transform_6, window_bounds = array<i64: 1, 32, 32>}, {transform_indices = @transform_7, window_bounds = array<i64: 1, 1, 32>}, {transform_indices = @transform_8, window_bounds = array<i64: 1, 1, 32>}, {transform_indices = @transform_9, window_bounds = array<i64: 1, 1, 32>}, {transform_indices = @transform_10, window_bounds = array<i64: 1, 32, 32>}, {transform_indices = @transform_11, window_bounds = array<i64: 1, 1, 32>}, {transform_indices = @transform_12, window_bounds = array<i64: 1, 32, 64>}, {transform_indices = @transform_13, window_bounds = array<i64: 1, 1, 64>}, {transform_indices = @transform_14, window_bounds = array<i64: 1, 32, 32>}, {transform_indices = @transform_15, window_bounds = array<i64: 1, 1, 32>}, {transform_indices = @transform_16, window_bounds = array<i64: 1, 1, 32>}, {transform_indices = @transform_17, window_bounds = array<i64: 1, 1, 32>}, {transform_indices = @transform_18, window_bounds = array<i64: 1, 32, 64>}, {transform_indices = @transform_19, window_bounds = array<i64: 1, 1, 64>}, {transform_indices = @transform_20, window_bounds = array<i64: 1, 64, 32>}, {transform_indices = @transform_21, window_bounds = array<i64: 1, 1, 32>}, {transform_indices = @transform_22, window_bounds = array<i64: 1, 1, 32>}, {transform_indices = @transform_23, window_bounds = array<i64: 1, 1, 32>}, {transform_indices = @transform_24, window_bounds = array<i64: 1, 8, 32>}, {transform_indices = @transform_25, window_bounds = array<i64: 1, 1, 8, 32>}, {transform_indices = @transform_26, window_bounds = array<i64: 1, 1, 8, 32>}]} {
    %c0_i32 = arith.constant 0 : i32
    %0 = arith.cmpi eq, %arg1, %c0_i32 : i32
    %1 = arith.extui %0 : i1 to i32
    %c0_i32_0 = arith.constant 0 : i32
    %2 = arith.cmpi ne, %1, %c0_i32_0 : i32
    scf.if %2 {
      %c0_154 = arith.constant 0 : index
      %c0_155 = arith.constant 0 : index
      %c0_156 = arith.constant 0 : index
      %340 = vector.load %arg2[%c0_154, %c0_155, %c0_156] : memref<1x8x32xf32, #tpu.memory_space<vmem>>, vector<1x8x32xf32>
      %341 = vector.shape_cast %340 : vector<1x8x32xf32> to vector<8x32xf32>
      %c0_157 = arith.constant 0 : index
      %c0_158 = arith.constant 0 : index
      %342 = vector.load %arg29[%c0_157, %c0_158] : memref<8x32xf32, #tpu.memory_space<vmem>>, vector<8x32xf32>
      tpu.vector_store %arg29[%c0_157, %c0_158], %341 {strides = array<i32>} : memref<8x32xf32, #tpu.memory_space<vmem>>, vector<8x32xf32>,
    } else {
    }
    %c0 = arith.constant 0 : index
    %c0_1 = arith.constant 0 : index
    %3 = vector.load %arg29[%c0, %c0_1] : memref<8x32xf32, #tpu.memory_space<vmem>>, vector<8x32xf32>
    %c0_2 = arith.constant 0 : index
    %c0_3 = arith.constant 0 : index
    %c0_4 = arith.constant 0 : index
    %4 = vector.load %arg3[%c0_2, %c0_3, %c0_4] : memref<1x8x32xf32, #tpu.memory_space<vmem>>, vector<1x8x32xf32>
    %5 = vector.shape_cast %4 : vector<1x8x32xf32> to vector<8x32xf32>
    %6 = tpu.iota {dimensions = array<i32: 0>} : vector<8x8xi32>
    %7 = tpu.iota {dimensions = array<i32: 1>} : vector<8x8xi32>
    %8 = arith.cmpi sgt, %7, %6 : vector<8x8xi32>
    %c0_5 = arith.constant 0 : index
    %c0_6 = arith.constant 0 : index
    %c0_7 = arith.constant 0 : index
    %9 = vector.load %arg4[%c0_5, %c0_6, %c0_7] : memref<1x1x8xf32, #tpu.memory_space<vmem>>, vector<1x1x8xf32>
    %10 = vector.shape_cast %9 : vector<1x1x8xf32> to vector<1x8xf32>
    %cst = arith.constant 0.000000e+00 : f32
    %11 = vector.broadcast %cst : f32 to vector<1x8xf32>
    %12 = arith.cmpf ogt, %10, %11 : vector<1x8xf32>
    %13 = vector.broadcast %12 : vector<1x8xi1> to vector<8x8xi1>
    %14 = arith.ori %8, %13 : vector<8x8xi1>
    %c0_8 = arith.constant 0 : index
    %c0_9 = arith.constant 0 : index
    %c0_10 = arith.constant 0 : index
    %15 = vector.load %arg5[%c0_8, %c0_9, %c0_10] : memref<1x1x8xf32, #tpu.memory_space<vmem>>, vector<1x1x8xf32>
    %16 = vector.shape_cast %15 : vector<1x1x8xf32> to vector<1x8xf32>
    %cst_11 = arith.constant 0.000000e+00 : f32
    %17 = vector.broadcast %cst_11 : f32 to vector<1x8xf32>
    %18 = arith.cmpf ogt, %16, %17 : vector<1x8xf32>
    %19 = arith.truncf %3 : vector<8x32xf32> to vector<8x32xbf16>
    %c0_12 = arith.constant 0 : index
    %c0_13 = arith.constant 0 : index
    %c0_14 = arith.constant 0 : index
    %20 = vector.load %arg6[%c0_12, %c0_13, %c0_14] : memref<1x32x96xbf16, #tpu.memory_space<vmem>>, vector<1x32x96xbf16>
    %21 = vector.shape_cast %20 : vector<1x32x96xbf16> to vector<32x96xbf16>
    %cst_15 = arith.constant dense<0.000000e+00> : vector<8x96xf32>
    %22 = tpu.matmul %19, %21, %cst_15 {dimension_numbers = #tpu.dot_dimension_numbers<[1], [0], [0], [1], [0, 0, 1, 1], [], []>} : vector<8x32xbf16>, vector<32x96xbf16>, vector<8x96xf32> -> vector<8x96xf32>
    %c0_16 = arith.constant 0 : index
    %c0_17 = arith.constant 0 : index
    %c0_18 = arith.constant 0 : index
    %23 = vector.load %arg7[%c0_16, %c0_17, %c0_18] : memref<1x1x96xf32, #tpu.memory_space<vmem>>, vector<1x1x96xf32>
    %24 = vector.shape_cast %23 : vector<1x1x96xf32> to vector<1x96xf32>
    %25 = vector.broadcast %24 : vector<1x96xf32> to vector<8x96xf32>
    %26 = arith.addf %22, %25 : vector<8x96xf32>
    %27 = arith.truncf %26 : vector<8x96xf32> to vector<8x96xbf16>
    %28 = vector.extract_strided_slice %27 {offsets = [0, 0], sizes = [8, 32], strides = [1, 1]} : vector<8x96xbf16> to vector<8x32xbf16>
    %29 = vector.extract_strided_slice %27 {offsets = [0, 32], sizes = [8, 32], strides = [1, 1]} : vector<8x96xbf16> to vector<8x32xbf16>
    %30 = vector.extract_strided_slice %27 {offsets = [0, 64], sizes = [8, 32], strides = [1, 1]} : vector<8x96xbf16> to vector<8x32xbf16>
    %c0_19 = arith.constant 0 : index
    %c0_20 = arith.constant 0 : index
    %c0_21 = arith.constant 0 : index
    %31 = vector.load %arg8[%c0_19, %c0_20, %c0_21] : memref<1x32x32xbf16, #tpu.memory_space<vmem>>, vector<1x32x32xbf16>
    %32 = vector.shape_cast %31 : vector<1x32x32xbf16> to vector<32x32xbf16>
    %c0_22 = arith.constant 0 : index
    %c0_23 = arith.constant 0 : index
    %c0_24 = arith.constant 0 : index
    %33 = vector.load %arg9[%c0_22, %c0_23, %c0_24] : memref<1x1x32xf32, #tpu.memory_space<vmem>>, vector<1x1x32xf32>
    %34 = vector.shape_cast %33 : vector<1x1x32xf32> to vector<1x32xf32>
    %35 = vector.extract_strided_slice %28 {offsets = [0, 0], sizes = [8, 8], strides = [1, 1]} : vector<8x32xbf16> to vector<8x8xbf16>
    %36 = vector.extract_strided_slice %29 {offsets = [0, 0], sizes = [8, 8], strides = [1, 1]} : vector<8x32xbf16> to vector<8x8xbf16>
    %37 = vector.extract_strided_slice %30 {offsets = [0, 0], sizes = [8, 8], strides = [1, 1]} : vector<8x32xbf16> to vector<8x8xbf16>
    %cst_25 = arith.constant dense<0.000000e+00> : vector<8x8xf32>
    %38 = tpu.matmul %35, %36, %cst_25 {dimension_numbers = #tpu.dot_dimension_numbers<[1], [1], [0], [0], [0, 0, 1, 0], [], []>} : vector<8x8xbf16>, vector<8x8xbf16>, vector<8x8xf32> -> vector<8x8xf32>
    %cst_26 = arith.constant 0.353553385 : f32
    %39 = vector.broadcast %cst_26 : f32 to vector<8x8xf32>
    %40 = arith.mulf %38, %39 : vector<8x8xf32>
    %cst_27 = arith.constant -1.000000e+09 : f32
    %41 = vector.broadcast %cst_27 : f32 to vector<8x8xf32>
    %42 = arith.select %14, %41, %40 : vector<8x8xi1>, vector<8x8xf32>
    %cst_28 = arith.constant dense<0xFF800000> : vector<8xf32>
    %43 = vector.multi_reduction <maximumf>, %42, %cst_28 [1] : vector<8x8xf32> to vector<8xf32>
    %44 = vector.shape_cast %43 : vector<8xf32> to vector<8x1xf32>
    %45 = vector.broadcast %44 : vector<8x1xf32> to vector<8x8xf32>
    %46 = arith.subf %42, %45 : vector<8x8xf32>
    %47 = math.exp %46 : vector<8x8xf32>
    %cst_29 = arith.constant dense<0.000000e+00> : vector<8xf32>
    %48 = vector.multi_reduction <add>, %47, %cst_29 [1] : vector<8x8xf32> to vector<8xf32>
    %49 = vector.shape_cast %48 : vector<8xf32> to vector<8x1xf32>
    %50 = vector.broadcast %49 : vector<8x1xf32> to vector<8x8xf32>
    %51 = arith.divf %47, %50 : vector<8x8xf32>
    %52 = arith.truncf %51 : vector<8x8xf32> to vector<8x8xbf16>
    %cst_30 = arith.constant dense<0.000000e+00> : vector<8x8xf32>
    %53 = tpu.matmul %52, %37, %cst_30 {dimension_numbers = #tpu.dot_dimension_numbers<[1], [0], [0], [1], [0, 0, 1, 1], [], []>} : vector<8x8xbf16>, vector<8x8xbf16>, vector<8x8xf32> -> vector<8x8xf32>
    %54 = vector.extract_strided_slice %28 {offsets = [0, 8], sizes = [8, 8], strides = [1, 1]} : vector<8x32xbf16> to vector<8x8xbf16>
    %55 = vector.extract_strided_slice %29 {offsets = [0, 8], sizes = [8, 8], strides = [1, 1]} : vector<8x32xbf16> to vector<8x8xbf16>
    %56 = vector.extract_strided_slice %30 {offsets = [0, 8], sizes = [8, 8], strides = [1, 1]} : vector<8x32xbf16> to vector<8x8xbf16>
    %cst_31 = arith.constant dense<0.000000e+00> : vector<8x8xf32>
    %57 = tpu.matmul %54, %55, %cst_31 {dimension_numbers = #tpu.dot_dimension_numbers<[1], [1], [0], [0], [0, 0, 1, 0], [], []>} : vector<8x8xbf16>, vector<8x8xbf16>, vector<8x8xf32> -> vector<8x8xf32>
    %cst_32 = arith.constant 0.353553385 : f32
    %58 = vector.broadcast %cst_32 : f32 to vector<8x8xf32>
    %59 = arith.mulf %57, %58 : vector<8x8xf32>
    %cst_33 = arith.constant -1.000000e+09 : f32
    %60 = vector.broadcast %cst_33 : f32 to vector<8x8xf32>
    %61 = arith.select %14, %60, %59 : vector<8x8xi1>, vector<8x8xf32>
    %cst_34 = arith.constant dense<0xFF800000> : vector<8xf32>
    %62 = vector.multi_reduction <maximumf>, %61, %cst_34 [1] : vector<8x8xf32> to vector<8xf32>
    %63 = vector.shape_cast %62 : vector<8xf32> to vector<8x1xf32>
    %64 = vector.broadcast %63 : vector<8x1xf32> to vector<8x8xf32>
    %65 = arith.subf %61, %64 : vector<8x8xf32>
    %66 = math.exp %65 : vector<8x8xf32>
    %cst_35 = arith.constant dense<0.000000e+00> : vector<8xf32>
    %67 = vector.multi_reduction <add>, %66, %cst_35 [1] : vector<8x8xf32> to vector<8xf32>
    %68 = vector.shape_cast %67 : vector<8xf32> to vector<8x1xf32>
    %69 = vector.broadcast %68 : vector<8x1xf32> to vector<8x8xf32>
    %70 = arith.divf %66, %69 : vector<8x8xf32>
    %71 = arith.truncf %70 : vector<8x8xf32> to vector<8x8xbf16>
    %cst_36 = arith.constant dense<0.000000e+00> : vector<8x8xf32>
    %72 = tpu.matmul %71, %56, %cst_36 {dimension_numbers = #tpu.dot_dimension_numbers<[1], [0], [0], [1], [0, 0, 1, 1], [], []>} : vector<8x8xbf16>, vector<8x8xbf16>, vector<8x8xf32> -> vector<8x8xf32>
    %73 = vector.extract_strided_slice %28 {offsets = [0, 16], sizes = [8, 8], strides = [1, 1]} : vector<8x32xbf16> to vector<8x8xbf16>
    %74 = vector.extract_strided_slice %29 {offsets = [0, 16], sizes = [8, 8], strides = [1, 1]} : vector<8x32xbf16> to vector<8x8xbf16>
    %75 = vector.extract_strided_slice %30 {offsets = [0, 16], sizes = [8, 8], strides = [1, 1]} : vector<8x32xbf16> to vector<8x8xbf16>
    %cst_37 = arith.constant dense<0.000000e+00> : vector<8x8xf32>
    %76 = tpu.matmul %73, %74, %cst_37 {dimension_numbers = #tpu.dot_dimension_numbers<[1], [1], [0], [0], [0, 0, 1, 0], [], []>} : vector<8x8xbf16>, vector<8x8xbf16>, vector<8x8xf32> -> vector<8x8xf32>
    %cst_38 = arith.constant 0.353553385 : f32
    %77 = vector.broadcast %cst_38 : f32 to vector<8x8xf32>
    %78 = arith.mulf %76, %77 : vector<8x8xf32>
    %cst_39 = arith.constant -1.000000e+09 : f32
    %79 = vector.broadcast %cst_39 : f32 to vector<8x8xf32>
    %80 = arith.select %14, %79, %78 : vector<8x8xi1>, vector<8x8xf32>
    %cst_40 = arith.constant dense<0xFF800000> : vector<8xf32>
    %81 = vector.multi_reduction <maximumf>, %80, %cst_40 [1] : vector<8x8xf32> to vector<8xf32>
    %82 = vector.shape_cast %81 : vector<8xf32> to vector<8x1xf32>
    %83 = vector.broadcast %82 : vector<8x1xf32> to vector<8x8xf32>
    %84 = arith.subf %80, %83 : vector<8x8xf32>
    %85 = math.exp %84 : vector<8x8xf32>
    %cst_41 = arith.constant dense<0.000000e+00> : vector<8xf32>
    %86 = vector.multi_reduction <add>, %85, %cst_41 [1] : vector<8x8xf32> to vector<8xf32>
    %87 = vector.shape_cast %86 : vector<8xf32> to vector<8x1xf32>
    %88 = vector.broadcast %87 : vector<8x1xf32> to vector<8x8xf32>
    %89 = arith.divf %85, %88 : vector<8x8xf32>
    %90 = arith.truncf %89 : vector<8x8xf32> to vector<8x8xbf16>
    %cst_42 = arith.constant dense<0.000000e+00> : vector<8x8xf32>
    %91 = tpu.matmul %90, %75, %cst_42 {dimension_numbers = #tpu.dot_dimension_numbers<[1], [0], [0], [1], [0, 0, 1, 1], [], []>} : vector<8x8xbf16>, vector<8x8xbf16>, vector<8x8xf32> -> vector<8x8xf32>
    %92 = vector.extract_strided_slice %28 {offsets = [0, 24], sizes = [8, 8], strides = [1, 1]} : vector<8x32xbf16> to vector<8x8xbf16>
    %93 = vector.extract_strided_slice %29 {offsets = [0, 24], sizes = [8, 8], strides = [1, 1]} : vector<8x32xbf16> to vector<8x8xbf16>
    %94 = vector.extract_strided_slice %30 {offsets = [0, 24], sizes = [8, 8], strides = [1, 1]} : vector<8x32xbf16> to vector<8x8xbf16>
    %cst_43 = arith.constant dense<0.000000e+00> : vector<8x8xf32>
    %95 = tpu.matmul %92, %93, %cst_43 {dimension_numbers = #tpu.dot_dimension_numbers<[1], [1], [0], [0], [0, 0, 1, 0], [], []>} : vector<8x8xbf16>, vector<8x8xbf16>, vector<8x8xf32> -> vector<8x8xf32>
    %cst_44 = arith.constant 0.353553385 : f32
    %96 = vector.broadcast %cst_44 : f32 to vector<8x8xf32>
    %97 = arith.mulf %95, %96 : vector<8x8xf32>
    %cst_45 = arith.constant -1.000000e+09 : f32
    %98 = vector.broadcast %cst_45 : f32 to vector<8x8xf32>
    %99 = arith.select %14, %98, %97 : vector<8x8xi1>, vector<8x8xf32>
    %cst_46 = arith.constant dense<0xFF800000> : vector<8xf32>
    %100 = vector.multi_reduction <maximumf>, %99, %cst_46 [1] : vector<8x8xf32> to vector<8xf32>
    %101 = vector.shape_cast %100 : vector<8xf32> to vector<8x1xf32>
    %102 = vector.broadcast %101 : vector<8x1xf32> to vector<8x8xf32>
    %103 = arith.subf %99, %102 : vector<8x8xf32>
    %104 = math.exp %103 : vector<8x8xf32>
    %cst_47 = arith.constant dense<0.000000e+00> : vector<8xf32>
    %105 = vector.multi_reduction <add>, %104, %cst_47 [1] : vector<8x8xf32> to vector<8xf32>
    %106 = vector.shape_cast %105 : vector<8xf32> to vector<8x1xf32>
    %107 = vector.broadcast %106 : vector<8x1xf32> to vector<8x8xf32>
    %108 = arith.divf %104, %107 : vector<8x8xf32>
    %109 = arith.truncf %108 : vector<8x8xf32> to vector<8x8xbf16>
    %cst_48 = arith.constant dense<0.000000e+00> : vector<8x8xf32>
    %110 = tpu.matmul %109, %94, %cst_48 {dimension_numbers = #tpu.dot_dimension_numbers<[1], [0], [0], [1], [0, 0, 1, 1], [], []>} : vector<8x8xbf16>, vector<8x8xbf16>, vector<8x8xf32> -> vector<8x8xf32>
    %111 = tpu.concatenate %51, %70, %89, %108 in 1 : vector<8x8xf32>, vector<8x8xf32>, vector<8x8xf32>, vector<8x8xf32> -> vector<8x32xf32>
    %c0_49 = arith.constant 0 : index
    %c0_50 = arith.constant 0 : index
    %c0_51 = arith.constant 0 : index
    %c0_52 = arith.constant 0 : index
    %112 = vector.load %arg27[%c0_49, %c0_50, %c0_51, %c0_52] : memref<1x1x8x32xf32, #tpu.memory_space<vmem>>, vector<1x1x8x32xf32>
    %113 = vector.shape_cast %112 : vector<1x1x8x32xf32> to vector<8x32xf32>
    %114 = vector.shape_cast %111 : vector<8x32xf32> to vector<1x1x8x32xf32>
    tpu.vector_store %arg27[%c0_49, %c0_50, %c0_51, %c0_52], %114 {strides = array<i32>} : memref<1x1x8x32xf32, #tpu.memory_space<vmem>>, vector<1x1x8x32xf32>,
    %115 = tpu.concatenate %53, %72, %91, %110 in 1 : vector<8x8xf32>, vector<8x8xf32>, vector<8x8xf32>, vector<8x8xf32> -> vector<8x32xf32>
    %116 = arith.truncf %115 : vector<8x32xf32> to vector<8x32xbf16>
    %cst_53 = arith.constant dense<0.000000e+00> : vector<8x32xf32>
    %117 = tpu.matmul %116, %32, %cst_53 {dimension_numbers = #tpu.dot_dimension_numbers<[1], [0], [0], [1], [0, 0, 1, 1], [], []>} : vector<8x32xbf16>, vector<32x32xbf16>, vector<8x32xf32> -> vector<8x32xf32>
    %118 = vector.broadcast %34 : vector<1x32xf32> to vector<8x32xf32>
    %119 = arith.addf %117, %118 : vector<8x32xf32>
    %120 = arith.addf %3, %119 : vector<8x32xf32>
    %c0_54 = arith.constant 0 : index
    %c0_55 = arith.constant 0 : index
    %c0_56 = arith.constant 0 : index
    %121 = vector.load %arg10[%c0_54, %c0_55, %c0_56] : memref<1x1x32xf32, #tpu.memory_space<vmem>>, vector<1x1x32xf32>
    %122 = vector.shape_cast %121 : vector<1x1x32xf32> to vector<1x32xf32>
    %c0_57 = arith.constant 0 : index
    %c0_58 = arith.constant 0 : index
    %c0_59 = arith.constant 0 : index
    %123 = vector.load %arg11[%c0_57, %c0_58, %c0_59] : memref<1x1x32xf32, #tpu.memory_space<vmem>>, vector<1x1x32xf32>
    %124 = vector.shape_cast %123 : vector<1x1x32xf32> to vector<1x32xf32>
    %cst_60 = arith.constant dense<0.000000e+00> : vector<8xf32>
    %125 = vector.multi_reduction <add>, %120, %cst_60 [1] : vector<8x32xf32> to vector<8xf32>
    %126 = vector.shape_cast %125 : vector<8xf32> to vector<8x1xf32>
    %cst_61 = arith.constant 3.200000e+01 : f32
    %127 = vector.broadcast %cst_61 : f32 to vector<8x1xf32>
    %128 = arith.divf %126, %127 : vector<8x1xf32>
    %129 = vector.broadcast %128 : vector<8x1xf32> to vector<8x32xf32>
    %130 = arith.subf %120, %129 : vector<8x32xf32>
    %131 = arith.mulf %130, %130 : vector<8x32xf32>
    %cst_62 = arith.constant dense<0.000000e+00> : vector<8xf32>
    %132 = vector.multi_reduction <add>, %131, %cst_62 [1] : vector<8x32xf32> to vector<8xf32>
    %133 = vector.shape_cast %132 : vector<8xf32> to vector<8x1xf32>
    %cst_63 = arith.constant 3.200000e+01 : f32
    %134 = vector.broadcast %cst_63 : f32 to vector<8x1xf32>
    %135 = arith.divf %133, %134 : vector<8x1xf32>
    %136 = vector.broadcast %128 : vector<8x1xf32> to vector<8x32xf32>
    %137 = arith.subf %120, %136 : vector<8x32xf32>
    %cst_64 = arith.constant 9.99999974E-6 : f32
    %138 = vector.broadcast %cst_64 : f32 to vector<8x1xf32>
    %139 = arith.addf %135, %138 : vector<8x1xf32>
    %140 = math.rsqrt %139 : vector<8x1xf32>
    %141 = vector.broadcast %140 : vector<8x1xf32> to vector<8x32xf32>
    %142 = arith.mulf %137, %141 : vector<8x32xf32>
    %143 = vector.broadcast %122 : vector<1x32xf32> to vector<8x32xf32>
    %144 = arith.mulf %142, %143 : vector<8x32xf32>
    %145 = vector.broadcast %124 : vector<1x32xf32> to vector<8x32xf32>
    %146 = arith.addf %144, %145 : vector<8x32xf32>
    %147 = arith.truncf %146 : vector<8x32xf32> to vector<8x32xbf16>
    %c0_65 = arith.constant 0 : index
    %c0_66 = arith.constant 0 : index
    %c0_67 = arith.constant 0 : index
    %148 = vector.load %arg12[%c0_65, %c0_66, %c0_67] : memref<1x32x32xbf16, #tpu.memory_space<vmem>>, vector<1x32x32xbf16>
    %149 = vector.shape_cast %148 : vector<1x32x32xbf16> to vector<32x32xbf16>
    %cst_68 = arith.constant dense<0.000000e+00> : vector<8x32xf32>
    %150 = tpu.matmul %147, %149, %cst_68 {dimension_numbers = #tpu.dot_dimension_numbers<[1], [0], [0], [1], [0, 0, 1, 1], [], []>} : vector<8x32xbf16>, vector<32x32xbf16>, vector<8x32xf32> -> vector<8x32xf32>
    %c0_69 = arith.constant 0 : index
    %c0_70 = arith.constant 0 : index
    %c0_71 = arith.constant 0 : index
    %151 = vector.load %arg13[%c0_69, %c0_70, %c0_71] : memref<1x1x32xf32, #tpu.memory_space<vmem>>, vector<1x1x32xf32>
    %152 = vector.shape_cast %151 : vector<1x1x32xf32> to vector<1x32xf32>
    %153 = vector.broadcast %152 : vector<1x32xf32> to vector<8x32xf32>
    %154 = arith.addf %150, %153 : vector<8x32xf32>
    %155 = arith.truncf %154 : vector<8x32xf32> to vector<8x32xbf16>
    %156 = arith.truncf %5 : vector<8x32xf32> to vector<8x32xbf16>
    %c0_72 = arith.constant 0 : index
    %c0_73 = arith.constant 0 : index
    %c0_74 = arith.constant 0 : index
    %157 = vector.load %arg14[%c0_72, %c0_73, %c0_74] : memref<1x32x64xbf16, #tpu.memory_space<vmem>>, vector<1x32x64xbf16>
    %158 = vector.shape_cast %157 : vector<1x32x64xbf16> to vector<32x64xbf16>
    %cst_75 = arith.constant dense<0.000000e+00> : vector<8x64xf32>
    %159 = tpu.matmul %156, %158, %cst_75 {dimension_numbers = #tpu.dot_dimension_numbers<[1], [0], [0], [1], [0, 0, 1, 1], [], []>} : vector<8x32xbf16>, vector<32x64xbf16>, vector<8x64xf32> -> vector<8x64xf32>
    %c0_76 = arith.constant 0 : index
    %c0_77 = arith.constant 0 : index
    %c0_78 = arith.constant 0 : index
    %160 = vector.load %arg15[%c0_76, %c0_77, %c0_78] : memref<1x1x64xf32, #tpu.memory_space<vmem>>, vector<1x1x64xf32>
    %161 = vector.shape_cast %160 : vector<1x1x64xf32> to vector<1x64xf32>
    %162 = vector.broadcast %161 : vector<1x64xf32> to vector<8x64xf32>
    %163 = arith.addf %159, %162 : vector<8x64xf32>
    %164 = arith.truncf %163 : vector<8x64xf32> to vector<8x64xbf16>
    %165 = vector.extract_strided_slice %164 {offsets = [0, 0], sizes = [8, 32], strides = [1, 1]} : vector<8x64xbf16> to vector<8x32xbf16>
    %166 = vector.extract_strided_slice %164 {offsets = [0, 32], sizes = [8, 32], strides = [1, 1]} : vector<8x64xbf16> to vector<8x32xbf16>
    %c0_79 = arith.constant 0 : index
    %c0_80 = arith.constant 0 : index
    %c0_81 = arith.constant 0 : index
    %167 = vector.load %arg16[%c0_79, %c0_80, %c0_81] : memref<1x32x32xbf16, #tpu.memory_space<vmem>>, vector<1x32x32xbf16>
    %168 = vector.shape_cast %167 : vector<1x32x32xbf16> to vector<32x32xbf16>
    %c0_82 = arith.constant 0 : index
    %c0_83 = arith.constant 0 : index
    %c0_84 = arith.constant 0 : index
    %169 = vector.load %arg17[%c0_82, %c0_83, %c0_84] : memref<1x1x32xf32, #tpu.memory_space<vmem>>, vector<1x1x32xf32>
    %170 = vector.shape_cast %169 : vector<1x1x32xf32> to vector<1x32xf32>
    %171 = vector.extract_strided_slice %155 {offsets = [0, 0], sizes = [8, 8], strides = [1, 1]} : vector<8x32xbf16> to vector<8x8xbf16>
    %172 = vector.extract_strided_slice %165 {offsets = [0, 0], sizes = [8, 8], strides = [1, 1]} : vector<8x32xbf16> to vector<8x8xbf16>
    %173 = vector.extract_strided_slice %166 {offsets = [0, 0], sizes = [8, 8], strides = [1, 1]} : vector<8x32xbf16> to vector<8x8xbf16>
    %cst_85 = arith.constant dense<0.000000e+00> : vector<8x8xf32>
    %174 = tpu.matmul %171, %172, %cst_85 {dimension_numbers = #tpu.dot_dimension_numbers<[1], [1], [0], [0], [0, 0, 1, 0], [], []>} : vector<8x8xbf16>, vector<8x8xbf16>, vector<8x8xf32> -> vector<8x8xf32>
    %cst_86 = arith.constant 0.353553385 : f32
    %175 = vector.broadcast %cst_86 : f32 to vector<8x8xf32>
    %176 = arith.mulf %174, %175 : vector<8x8xf32>
    %cst_87 = arith.constant -1.000000e+09 : f32
    %177 = vector.shape_cast %18 : vector<1x8xi1> to vector<1x8xi1>
    %178 = vector.broadcast %177 : vector<1x8xi1> to vector<8x8xi1>
    %179 = vector.broadcast %cst_87 : f32 to vector<8x8xf32>
    %180 = arith.select %178, %179, %176 : vector<8x8xi1>, vector<8x8xf32>
    %cst_88 = arith.constant dense<0xFF800000> : vector<8xf32>
    %181 = vector.multi_reduction <maximumf>, %180, %cst_88 [1] : vector<8x8xf32> to vector<8xf32>
    %182 = vector.shape_cast %181 : vector<8xf32> to vector<8x1xf32>
    %183 = vector.broadcast %182 : vector<8x1xf32> to vector<8x8xf32>
    %184 = arith.subf %180, %183 : vector<8x8xf32>
    %185 = math.exp %184 : vector<8x8xf32>
    %cst_89 = arith.constant dense<0.000000e+00> : vector<8xf32>
    %186 = vector.multi_reduction <add>, %185, %cst_89 [1] : vector<8x8xf32> to vector<8xf32>
    %187 = vector.shape_cast %186 : vector<8xf32> to vector<8x1xf32>
    %188 = vector.broadcast %187 : vector<8x1xf32> to vector<8x8xf32>
    %189 = arith.divf %185, %188 : vector<8x8xf32>
    %190 = arith.truncf %189 : vector<8x8xf32> to vector<8x8xbf16>
    %cst_90 = arith.constant dense<0.000000e+00> : vector<8x8xf32>
    %191 = tpu.matmul %190, %173, %cst_90 {dimension_numbers = #tpu.dot_dimension_numbers<[1], [0], [0], [1], [0, 0, 1, 1], [], []>} : vector<8x8xbf16>, vector<8x8xbf16>, vector<8x8xf32> -> vector<8x8xf32>
    %192 = vector.extract_strided_slice %155 {offsets = [0, 8], sizes = [8, 8], strides = [1, 1]} : vector<8x32xbf16> to vector<8x8xbf16>
    %193 = vector.extract_strided_slice %165 {offsets = [0, 8], sizes = [8, 8], strides = [1, 1]} : vector<8x32xbf16> to vector<8x8xbf16>
    %194 = vector.extract_strided_slice %166 {offsets = [0, 8], sizes = [8, 8], strides = [1, 1]} : vector<8x32xbf16> to vector<8x8xbf16>
    %cst_91 = arith.constant dense<0.000000e+00> : vector<8x8xf32>
    %195 = tpu.matmul %192, %193, %cst_91 {dimension_numbers = #tpu.dot_dimension_numbers<[1], [1], [0], [0], [0, 0, 1, 0], [], []>} : vector<8x8xbf16>, vector<8x8xbf16>, vector<8x8xf32> -> vector<8x8xf32>
    %cst_92 = arith.constant 0.353553385 : f32
    %196 = vector.broadcast %cst_92 : f32 to vector<8x8xf32>
    %197 = arith.mulf %195, %196 : vector<8x8xf32>
    %cst_93 = arith.constant -1.000000e+09 : f32
    %198 = vector.shape_cast %18 : vector<1x8xi1> to vector<1x8xi1>
    %199 = vector.broadcast %198 : vector<1x8xi1> to vector<8x8xi1>
    %200 = vector.broadcast %cst_93 : f32 to vector<8x8xf32>
    %201 = arith.select %199, %200, %197 : vector<8x8xi1>, vector<8x8xf32>
    %cst_94 = arith.constant dense<0xFF800000> : vector<8xf32>
    %202 = vector.multi_reduction <maximumf>, %201, %cst_94 [1] : vector<8x8xf32> to vector<8xf32>
    %203 = vector.shape_cast %202 : vector<8xf32> to vector<8x1xf32>
    %204 = vector.broadcast %203 : vector<8x1xf32> to vector<8x8xf32>
    %205 = arith.subf %201, %204 : vector<8x8xf32>
    %206 = math.exp %205 : vector<8x8xf32>
    %cst_95 = arith.constant dense<0.000000e+00> : vector<8xf32>
    %207 = vector.multi_reduction <add>, %206, %cst_95 [1] : vector<8x8xf32> to vector<8xf32>
    %208 = vector.shape_cast %207 : vector<8xf32> to vector<8x1xf32>
    %209 = vector.broadcast %208 : vector<8x1xf32> to vector<8x8xf32>
    %210 = arith.divf %206, %209 : vector<8x8xf32>
    %211 = arith.truncf %210 : vector<8x8xf32> to vector<8x8xbf16>
    %cst_96 = arith.constant dense<0.000000e+00> : vector<8x8xf32>
    %212 = tpu.matmul %211, %194, %cst_96 {dimension_numbers = #tpu.dot_dimension_numbers<[1], [0], [0], [1], [0, 0, 1, 1], [], []>} : vector<8x8xbf16>, vector<8x8xbf16>, vector<8x8xf32> -> vector<8x8xf32>
    %213 = vector.extract_strided_slice %155 {offsets = [0, 16], sizes = [8, 8], strides = [1, 1]} : vector<8x32xbf16> to vector<8x8xbf16>
    %214 = vector.extract_strided_slice %165 {offsets = [0, 16], sizes = [8, 8], strides = [1, 1]} : vector<8x32xbf16> to vector<8x8xbf16>
    %215 = vector.extract_strided_slice %166 {offsets = [0, 16], sizes = [8, 8], strides = [1, 1]} : vector<8x32xbf16> to vector<8x8xbf16>
    %cst_97 = arith.constant dense<0.000000e+00> : vector<8x8xf32>
    %216 = tpu.matmul %213, %214, %cst_97 {dimension_numbers = #tpu.dot_dimension_numbers<[1], [1], [0], [0], [0, 0, 1, 0], [], []>} : vector<8x8xbf16>, vector<8x8xbf16>, vector<8x8xf32> -> vector<8x8xf32>
    %cst_98 = arith.constant 0.353553385 : f32
    %217 = vector.broadcast %cst_98 : f32 to vector<8x8xf32>
    %218 = arith.mulf %216, %217 : vector<8x8xf32>
    %cst_99 = arith.constant -1.000000e+09 : f32
    %219 = vector.shape_cast %18 : vector<1x8xi1> to vector<1x8xi1>
    %220 = vector.broadcast %219 : vector<1x8xi1> to vector<8x8xi1>
    %221 = vector.broadcast %cst_99 : f32 to vector<8x8xf32>
    %222 = arith.select %220, %221, %218 : vector<8x8xi1>, vector<8x8xf32>
    %cst_100 = arith.constant dense<0xFF800000> : vector<8xf32>
    %223 = vector.multi_reduction <maximumf>, %222, %cst_100 [1] : vector<8x8xf32> to vector<8xf32>
    %224 = vector.shape_cast %223 : vector<8xf32> to vector<8x1xf32>
    %225 = vector.broadcast %224 : vector<8x1xf32> to vector<8x8xf32>
    %226 = arith.subf %222, %225 : vector<8x8xf32>
    %227 = math.exp %226 : vector<8x8xf32>
    %cst_101 = arith.constant dense<0.000000e+00> : vector<8xf32>
    %228 = vector.multi_reduction <add>, %227, %cst_101 [1] : vector<8x8xf32> to vector<8xf32>
    %229 = vector.shape_cast %228 : vector<8xf32> to vector<8x1xf32>
    %230 = vector.broadcast %229 : vector<8x1xf32> to vector<8x8xf32>
    %231 = arith.divf %227, %230 : vector<8x8xf32>
    %232 = arith.truncf %231 : vector<8x8xf32> to vector<8x8xbf16>
    %cst_102 = arith.constant dense<0.000000e+00> : vector<8x8xf32>
    %233 = tpu.matmul %232, %215, %cst_102 {dimension_numbers = #tpu.dot_dimension_numbers<[1], [0], [0], [1], [0, 0, 1, 1], [], []>} : vector<8x8xbf16>, vector<8x8xbf16>, vector<8x8xf32> -> vector<8x8xf32>
    %234 = vector.extract_strided_slice %155 {offsets = [0, 24], sizes = [8, 8], strides = [1, 1]} : vector<8x32xbf16> to vector<8x8xbf16>
    %235 = vector.extract_strided_slice %165 {offsets = [0, 24], sizes = [8, 8], strides = [1, 1]} : vector<8x32xbf16> to vector<8x8xbf16>
    %236 = vector.extract_strided_slice %166 {offsets = [0, 24], sizes = [8, 8], strides = [1, 1]} : vector<8x32xbf16> to vector<8x8xbf16>
    %cst_103 = arith.constant dense<0.000000e+00> : vector<8x8xf32>
    %237 = tpu.matmul %234, %235, %cst_103 {dimension_numbers = #tpu.dot_dimension_numbers<[1], [1], [0], [0], [0, 0, 1, 0], [], []>} : vector<8x8xbf16>, vector<8x8xbf16>, vector<8x8xf32> -> vector<8x8xf32>
    %cst_104 = arith.constant 0.353553385 : f32
    %238 = vector.broadcast %cst_104 : f32 to vector<8x8xf32>
    %239 = arith.mulf %237, %238 : vector<8x8xf32>
    %cst_105 = arith.constant -1.000000e+09 : f32
    %240 = vector.shape_cast %18 : vector<1x8xi1> to vector<1x8xi1>
    %241 = vector.broadcast %240 : vector<1x8xi1> to vector<8x8xi1>
    %242 = vector.broadcast %cst_105 : f32 to vector<8x8xf32>
    %243 = arith.select %241, %242, %239 : vector<8x8xi1>, vector<8x8xf32>
    %cst_106 = arith.constant dense<0xFF800000> : vector<8xf32>
    %244 = vector.multi_reduction <maximumf>, %243, %cst_106 [1] : vector<8x8xf32> to vector<8xf32>
    %245 = vector.shape_cast %244 : vector<8xf32> to vector<8x1xf32>
    %246 = vector.broadcast %245 : vector<8x1xf32> to vector<8x8xf32>
    %247 = arith.subf %243, %246 : vector<8x8xf32>
    %248 = math.exp %247 : vector<8x8xf32>
    %cst_107 = arith.constant dense<0.000000e+00> : vector<8xf32>
    %249 = vector.multi_reduction <add>, %248, %cst_107 [1] : vector<8x8xf32> to vector<8xf32>
    %250 = vector.shape_cast %249 : vector<8xf32> to vector<8x1xf32>
    %251 = vector.broadcast %250 : vector<8x1xf32> to vector<8x8xf32>
    %252 = arith.divf %248, %251 : vector<8x8xf32>
    %253 = arith.truncf %252 : vector<8x8xf32> to vector<8x8xbf16>
    %cst_108 = arith.constant dense<0.000000e+00> : vector<8x8xf32>
    %254 = tpu.matmul %253, %236, %cst_108 {dimension_numbers = #tpu.dot_dimension_numbers<[1], [0], [0], [1], [0, 0, 1, 1], [], []>} : vector<8x8xbf16>, vector<8x8xbf16>, vector<8x8xf32> -> vector<8x8xf32>
    %255 = tpu.concatenate %189, %210, %231, %252 in 1 : vector<8x8xf32>, vector<8x8xf32>, vector<8x8xf32>, vector<8x8xf32> -> vector<8x32xf32>
    %c0_109 = arith.constant 0 : index
    %c0_110 = arith.constant 0 : index
    %c0_111 = arith.constant 0 : index
    %c0_112 = arith.constant 0 : index
    %256 = vector.load %arg28[%c0_109, %c0_110, %c0_111, %c0_112] : memref<1x1x8x32xf32, #tpu.memory_space<vmem>>, vector<1x1x8x32xf32>
    %257 = vector.shape_cast %256 : vector<1x1x8x32xf32> to vector<8x32xf32>
    %258 = vector.shape_cast %255 : vector<8x32xf32> to vector<1x1x8x32xf32>
    tpu.vector_store %arg28[%c0_109, %c0_110, %c0_111, %c0_112], %258 {strides = array<i32>} : memref<1x1x8x32xf32, #tpu.memory_space<vmem>>, vector<1x1x8x32xf32>,
    %259 = tpu.concatenate %191, %212, %233, %254 in 1 : vector<8x8xf32>, vector<8x8xf32>, vector<8x8xf32>, vector<8x8xf32> -> vector<8x32xf32>
    %260 = arith.truncf %259 : vector<8x32xf32> to vector<8x32xbf16>
    %cst_113 = arith.constant dense<0.000000e+00> : vector<8x32xf32>
    %261 = tpu.matmul %260, %168, %cst_113 {dimension_numbers = #tpu.dot_dimension_numbers<[1], [0], [0], [1], [0, 0, 1, 1], [], []>} : vector<8x32xbf16>, vector<32x32xbf16>, vector<8x32xf32> -> vector<8x32xf32>
    %262 = vector.broadcast %170 : vector<1x32xf32> to vector<8x32xf32>
    %263 = arith.addf %261, %262 : vector<8x32xf32>
    %264 = arith.addf %146, %263 : vector<8x32xf32>
    %c0_114 = arith.constant 0 : index
    %c0_115 = arith.constant 0 : index
    %c0_116 = arith.constant 0 : index
    %265 = vector.load %arg18[%c0_114, %c0_115, %c0_116] : memref<1x1x32xf32, #tpu.memory_space<vmem>>, vector<1x1x32xf32>
    %266 = vector.shape_cast %265 : vector<1x1x32xf32> to vector<1x32xf32>
    %c0_117 = arith.constant 0 : index
    %c0_118 = arith.constant 0 : index
    %c0_119 = arith.constant 0 : index
    %267 = vector.load %arg19[%c0_117, %c0_118, %c0_119] : memref<1x1x32xf32, #tpu.memory_space<vmem>>, vector<1x1x32xf32>
    %268 = vector.shape_cast %267 : vector<1x1x32xf32> to vector<1x32xf32>
    %cst_120 = arith.constant dense<0.000000e+00> : vector<8xf32>
    %269 = vector.multi_reduction <add>, %264, %cst_120 [1] : vector<8x32xf32> to vector<8xf32>
    %270 = vector.shape_cast %269 : vector<8xf32> to vector<8x1xf32>
    %cst_121 = arith.constant 3.200000e+01 : f32
    %271 = vector.broadcast %cst_121 : f32 to vector<8x1xf32>
    %272 = arith.divf %270, %271 : vector<8x1xf32>
    %273 = vector.broadcast %272 : vector<8x1xf32> to vector<8x32xf32>
    %274 = arith.subf %264, %273 : vector<8x32xf32>
    %275 = arith.mulf %274, %274 : vector<8x32xf32>
    %cst_122 = arith.constant dense<0.000000e+00> : vector<8xf32>
    %276 = vector.multi_reduction <add>, %275, %cst_122 [1] : vector<8x32xf32> to vector<8xf32>
    %277 = vector.shape_cast %276 : vector<8xf32> to vector<8x1xf32>
    %cst_123 = arith.constant 3.200000e+01 : f32
    %278 = vector.broadcast %cst_123 : f32 to vector<8x1xf32>
    %279 = arith.divf %277, %278 : vector<8x1xf32>
    %280 = vector.broadcast %272 : vector<8x1xf32> to vector<8x32xf32>
    %281 = arith.subf %264, %280 : vector<8x32xf32>
    %cst_124 = arith.constant 9.99999974E-6 : f32
    %282 = vector.broadcast %cst_124 : f32 to vector<8x1xf32>
    %283 = arith.addf %279, %282 : vector<8x1xf32>
    %284 = math.rsqrt %283 : vector<8x1xf32>
    %285 = vector.broadcast %284 : vector<8x1xf32> to vector<8x32xf32>
    %286 = arith.mulf %281, %285 : vector<8x32xf32>
    %287 = vector.broadcast %266 : vector<1x32xf32> to vector<8x32xf32>
    %288 = arith.mulf %286, %287 : vector<8x32xf32>
    %289 = vector.broadcast %268 : vector<1x32xf32> to vector<8x32xf32>
    %290 = arith.addf %288, %289 : vector<8x32xf32>
    %291 = arith.truncf %290 : vector<8x32xf32> to vector<8x32xbf16>
    %c0_125 = arith.constant 0 : index
    %c0_126 = arith.constant 0 : index
    %c0_127 = arith.constant 0 : index
    %292 = vector.load %arg20[%c0_125, %c0_126, %c0_127] : memref<1x32x64xbf16, #tpu.memory_space<vmem>>, vector<1x32x64xbf16>
    %293 = vector.shape_cast %292 : vector<1x32x64xbf16> to vector<32x64xbf16>
    %cst_128 = arith.constant dense<0.000000e+00> : vector<8x64xf32>
    %294 = tpu.matmul %291, %293, %cst_128 {dimension_numbers = #tpu.dot_dimension_numbers<[1], [0], [0], [1], [0, 0, 1, 1], [], []>} : vector<8x32xbf16>, vector<32x64xbf16>, vector<8x64xf32> -> vector<8x64xf32>
    %c0_129 = arith.constant 0 : index
    %c0_130 = arith.constant 0 : index
    %c0_131 = arith.constant 0 : index
    %295 = vector.load %arg21[%c0_129, %c0_130, %c0_131] : memref<1x1x64xf32, #tpu.memory_space<vmem>>, vector<1x1x64xf32>
    %296 = vector.shape_cast %295 : vector<1x1x64xf32> to vector<1x64xf32>
    %297 = vector.broadcast %296 : vector<1x64xf32> to vector<8x64xf32>
    %298 = arith.addf %294, %297 : vector<8x64xf32>
    %cst_132 = arith.constant 0.000000e+00 : f32
    %299 = vector.broadcast %cst_132 : f32 to vector<8x64xf32>
    %300 = arith.maximumf %298, %299 : vector<8x64xf32>
    %301 = arith.truncf %300 : vector<8x64xf32> to vector<8x64xbf16>
    %c0_133 = arith.constant 0 : index
    %c0_134 = arith.constant 0 : index
    %c0_135 = arith.constant 0 : index
    %302 = vector.load %arg22[%c0_133, %c0_134, %c0_135] : memref<1x64x32xbf16, #tpu.memory_space<vmem>>, vector<1x64x32xbf16>
    %303 = vector.shape_cast %302 : vector<1x64x32xbf16> to vector<64x32xbf16>
    %cst_136 = arith.constant dense<0.000000e+00> : vector<8x32xf32>
    %304 = tpu.matmul %301, %303, %cst_136 {dimension_numbers = #tpu.dot_dimension_numbers<[1], [0], [0], [1], [0, 0, 1, 1], [], []>} : vector<8x64xbf16>, vector<64x32xbf16>, vector<8x32xf32> -> vector<8x32xf32>
    %c0_137 = arith.constant 0 : index
    %c0_138 = arith.constant 0 : index
    %c0_139 = arith.constant 0 : index
    %305 = vector.load %arg23[%c0_137, %c0_138, %c0_139] : memref<1x1x32xf32, #tpu.memory_space<vmem>>, vector<1x1x32xf32>
    %306 = vector.shape_cast %305 : vector<1x1x32xf32> to vector<1x32xf32>
    %307 = vector.broadcast %306 : vector<1x32xf32> to vector<8x32xf32>
    %308 = arith.addf %304, %307 : vector<8x32xf32>
    %309 = arith.addf %290, %308 : vector<8x32xf32>
    %c0_140 = arith.constant 0 : index
    %c0_141 = arith.constant 0 : index
    %c0_142 = arith.constant 0 : index
    %310 = vector.load %arg24[%c0_140, %c0_141, %c0_142] : memref<1x1x32xf32, #tpu.memory_space<vmem>>, vector<1x1x32xf32>
    %311 = vector.shape_cast %310 : vector<1x1x32xf32> to vector<1x32xf32>
    %c0_143 = arith.constant 0 : index
    %c0_144 = arith.constant 0 : index
    %c0_145 = arith.constant 0 : index
    %312 = vector.load %arg25[%c0_143, %c0_144, %c0_145] : memref<1x1x32xf32, #tpu.memory_space<vmem>>, vector<1x1x32xf32>
    %313 = vector.shape_cast %312 : vector<1x1x32xf32> to vector<1x32xf32>
    %cst_146 = arith.constant dense<0.000000e+00> : vector<8xf32>
    %314 = vector.multi_reduction <add>, %309, %cst_146 [1] : vector<8x32xf32> to vector<8xf32>
    %315 = vector.shape_cast %314 : vector<8xf32> to vector<8x1xf32>
    %cst_147 = arith.constant 3.200000e+01 : f32
    %316 = vector.broadcast %cst_147 : f32 to vector<8x1xf32>
    %317 = arith.divf %315, %316 : vector<8x1xf32>
    %318 = vector.broadcast %317 : vector<8x1xf32> to vector<8x32xf32>
    %319 = arith.subf %309, %318 : vector<8x32xf32>
    %320 = arith.mulf %319, %319 : vector<8x32xf32>
    %cst_148 = arith.constant dense<0.000000e+00> : vector<8xf32>
    %321 = vector.multi_reduction <add>, %320, %cst_148 [1] : vector<8x32xf32> to vector<8xf32>
    %322 = vector.shape_cast %321 : vector<8xf32> to vector<8x1xf32>
    %cst_149 = arith.constant 3.200000e+01 : f32
    %323 = vector.broadcast %cst_149 : f32 to vector<8x1xf32>
    %324 = arith.divf %322, %323 : vector<8x1xf32>
    %325 = vector.broadcast %317 : vector<8x1xf32> to vector<8x32xf32>
    %326 = arith.subf %309, %325 : vector<8x32xf32>
    %cst_150 = arith.constant 9.99999974E-6 : f32
    %327 = vector.broadcast %cst_150 : f32 to vector<8x1xf32>
    %328 = arith.addf %324, %327 : vector<8x1xf32>
    %329 = math.rsqrt %328 : vector<8x1xf32>
    %330 = vector.broadcast %329 : vector<8x1xf32> to vector<8x32xf32>
    %331 = arith.mulf %326, %330 : vector<8x32xf32>
    %332 = vector.broadcast %311 : vector<1x32xf32> to vector<8x32xf32>
    %333 = arith.mulf %331, %332 : vector<8x32xf32>
    %334 = vector.broadcast %313 : vector<1x32xf32> to vector<8x32xf32>
    %335 = arith.addf %333, %334 : vector<8x32xf32>
    %c0_151 = arith.constant 0 : index
    %c0_152 = arith.constant 0 : index
    %336 = vector.load %arg29[%c0_151, %c0_152] : memref<8x32xf32, #tpu.memory_space<vmem>>, vector<8x32xf32>
    tpu.vector_store %arg29[%c0_151, %c0_152], %335 {strides = array<i32>} : memref<8x32xf32, #tpu.memory_space<vmem>>, vector<8x32xf32>,
    %c1_i32 = arith.constant 1 : i32
    %337 = arith.cmpi eq, %arg1, %c1_i32 : i32
    %338 = arith.extui %337 : i1 to i32
    %c0_i32_153 = arith.constant 0 : i32
    %339 = arith.cmpi ne, %338, %c0_i32_153 : i32
    scf.if %339 {
      %c0_154 = arith.constant 0 : index
      %c0_155 = arith.constant 0 : index
      %c0_156 = arith.constant 0 : index
      %340 = vector.load %arg26[%c0_154, %c0_155, %c0_156] : memref<1x8x32xf32, #tpu.memory_space<vmem>>, vector<1x8x32xf32>
      %341 = vector.shape_cast %340 : vector<1x8x32xf32> to vector<8x32xf32>
      %342 = vector.shape_cast %335 : vector<8x32xf32> to vector<1x8x32xf32>
      tpu.vector_store %arg26[%c0_154, %c0_155, %c0_156], %342 {strides = array<i32>} : memref<1x8x32xf32, #tpu.memory_space<vmem>>, vector<1x8x32xf32>,
    } else {
    }
    return
  }
  func.func @transform_0(%arg0: i32, %arg1: i32) -> (i32, i32, i32) {
    %c0_i32 = arith.constant 0 : i32
    %c0_i32_0 = arith.constant 0 : i32
    %c0_i32_1 = arith.constant 0 : i32
    return %arg0, %c0_i32, %c0_i32_0 : i32, i32, i32
  }
  func.func @transform_1(%arg0: i32, %arg1: i32) -> (i32, i32, i32) {
    %c0_i32 = arith.constant 0 : i32
    %c0_i32_0 = arith.constant 0 : i32
    %c0_i32_1 = arith.constant 0 : i32
    return %arg0, %c0_i32, %c0_i32_0 : i32, i32, i32
  }
  func.func @transform_2(%arg0: i32, %arg1: i32) -> (i32, i32, i32) {
    %c0_i32 = arith.constant 0 : i32
    %c0_i32_0 = arith.constant 0 : i32
    %c0_i32_1 = arith.constant 0 : i32
    return %arg0, %c0_i32, %c0_i32_0 : i32, i32, i32
  }
  func.func @transform_3(%arg0: i32, %arg1: i32) -> (i32, i32, i32) {
    %c0_i32 = arith.constant 0 : i32
    %c0_i32_0 = arith.constant 0 : i32
    %c0_i32_1 = arith.constant 0 : i32
    return %arg0, %c0_i32, %c0_i32_0 : i32, i32, i32
  }
  func.func @transform_4(%arg0: i32, %arg1: i32) -> (i32, i32, i32) {
    %c0_i32 = arith.constant 0 : i32
    %c0_i32_0 = arith.constant 0 : i32
    %c0_i32_1 = arith.constant 0 : i32
    return %arg1, %c0_i32, %c0_i32_0 : i32, i32, i32
  }
  func.func @transform_5(%arg0: i32, %arg1: i32) -> (i32, i32, i32) {
    %c0_i32 = arith.constant 0 : i32
    %c0_i32_0 = arith.constant 0 : i32
    %c0_i32_1 = arith.constant 0 : i32
    return %arg1, %c0_i32, %c0_i32_0 : i32, i32, i32
  }
  func.func @transform_6(%arg0: i32, %arg1: i32) -> (i32, i32, i32) {
    %c0_i32 = arith.constant 0 : i32
    %c0_i32_0 = arith.constant 0 : i32
    %c0_i32_1 = arith.constant 0 : i32
    return %arg1, %c0_i32, %c0_i32_0 : i32, i32, i32
  }
  func.func @transform_7(%arg0: i32, %arg1: i32) -> (i32, i32, i32) {
    %c0_i32 = arith.constant 0 : i32
    %c0_i32_0 = arith.constant 0 : i32
    %c0_i32_1 = arith.constant 0 : i32
    return %arg1, %c0_i32, %c0_i32_0 : i32, i32, i32
  }
  func.func @transform_8(%arg0: i32, %arg1: i32) -> (i32, i32, i32) {
    %c0_i32 = arith.constant 0 : i32
    %c0_i32_0 = arith.constant 0 : i32
    %c0_i32_1 = arith.constant 0 : i32
    return %arg1, %c0_i32, %c0_i32_0 : i32, i32, i32
  }
  func.func @transform_9(%arg0: i32, %arg1: i32) -> (i32, i32, i32) {
    %c0_i32 = arith.constant 0 : i32
    %c0_i32_0 = arith.constant 0 : i32
    %c0_i32_1 = arith.constant 0 : i32
    return %arg1, %c0_i32, %c0_i32_0 : i32, i32, i32
  }
  func.func @transform_10(%arg0: i32, %arg1: i32) -> (i32, i32, i32) {
    %c0_i32 = arith.constant 0 : i32
    %c0_i32_0 = arith.constant 0 : i32
    %c0_i32_1 = arith.constant 0 : i32
    return %arg1, %c0_i32, %c0_i32_0 : i32, i32, i32
  }
  func.func @transform_11(%arg0: i32, %arg1: i32) -> (i32, i32, i32) {
    %c0_i32 = arith.constant 0 : i32
    %c0_i32_0 = arith.constant 0 : i32
    %c0_i32_1 = arith.constant 0 : i32
    return %arg1, %c0_i32, %c0_i32_0 : i32, i32, i32
  }
  func.func @transform_12(%arg0: i32, %arg1: i32) -> (i32, i32, i32) {
    %c0_i32 = arith.constant 0 : i32
    %c0_i32_0 = arith.constant 0 : i32
    %c0_i32_1 = arith.constant 0 : i32
    return %arg1, %c0_i32, %c0_i32_0 : i32, i32, i32
  }
  func.func @transform_13(%arg0: i32, %arg1: i32) -> (i32, i32, i32) {
    %c0_i32 = arith.constant 0 : i32
    %c0_i32_0 = arith.constant 0 : i32
    %c0_i32_1 = arith.constant 0 : i32
    return %arg1, %c0_i32, %c0_i32_0 : i32, i32, i32
  }
  func.func @transform_14(%arg0: i32, %arg1: i32) -> (i32, i32, i32) {
    %c0_i32 = arith.constant 0 : i32
    %c0_i32_0 = arith.constant 0 : i32
    %c0_i32_1 = arith.constant 0 : i32
    return %arg1, %c0_i32, %c0_i32_0 : i32, i32, i32
  }
  func.func @transform_15(%arg0: i32, %arg1: i32) -> (i32, i32, i32) {
    %c0_i32 = arith.constant 0 : i32
    %c0_i32_0 = arith.constant 0 : i32
    %c0_i32_1 = arith.constant 0 : i32
    return %arg1, %c0_i32, %c0_i32_0 : i32, i32, i32
  }
  func.func @transform_16(%arg0: i32, %arg1: i32) -> (i32, i32, i32) {
    %c0_i32 = arith.constant 0 : i32
    %c0_i32_0 = arith.constant 0 : i32
    %c0_i32_1 = arith.constant 0 : i32
    return %arg1, %c0_i32, %c0_i32_0 : i32, i32, i32
  }
  func.func @transform_17(%arg0: i32, %arg1: i32) -> (i32, i32, i32) {
    %c0_i32 = arith.constant 0 : i32
    %c0_i32_0 = arith.constant 0 : i32
    %c0_i32_1 = arith.constant 0 : i32
    return %arg1, %c0_i32, %c0_i32_0 : i32, i32, i32
  }
  func.func @transform_18(%arg0: i32, %arg1: i32) -> (i32, i32, i32) {
    %c0_i32 = arith.constant 0 : i32
    %c0_i32_0 = arith.constant 0 : i32
    %c0_i32_1 = arith.constant 0 : i32
    return %arg1, %c0_i32, %c0_i32_0 : i32, i32, i32
  }
  func.func @transform_19(%arg0: i32, %arg1: i32) -> (i32, i32, i32) {
    %c0_i32 = arith.constant 0 : i32
    %c0_i32_0 = arith.constant 0 : i32
    %c0_i32_1 = arith.constant 0 : i32
    return %arg1, %c0_i32, %c0_i32_0 : i32, i32, i32
  }
  func.func @transform_20(%arg0: i32, %arg1: i32) -> (i32, i32, i32) {
    %c0_i32 = arith.constant 0 : i32
    %c0_i32_0 = arith.constant 0 : i32
    %c0_i32_1 = arith.constant 0 : i32
    return %arg1, %c0_i32, %c0_i32_0 : i32, i32, i32
  }
  func.func @transform_21(%arg0: i32, %arg1: i32) -> (i32, i32, i32) {
    %c0_i32 = arith.constant 0 : i32
    %c0_i32_0 = arith.constant 0 : i32
    %c0_i32_1 = arith.constant 0 : i32
    return %arg1, %c0_i32, %c0_i32_0 : i32, i32, i32
  }
  func.func @transform_22(%arg0: i32, %arg1: i32) -> (i32, i32, i32) {
    %c0_i32 = arith.constant 0 : i32
    %c0_i32_0 = arith.constant 0 : i32
    %c0_i32_1 = arith.constant 0 : i32
    return %arg1, %c0_i32, %c0_i32_0 : i32, i32, i32
  }
  func.func @transform_23(%arg0: i32, %arg1: i32) -> (i32, i32, i32) {
    %c0_i32 = arith.constant 0 : i32
    %c0_i32_0 = arith.constant 0 : i32
    %c0_i32_1 = arith.constant 0 : i32
    return %arg1, %c0_i32, %c0_i32_0 : i32, i32, i32
  }
  func.func @transform_24(%arg0: i32, %arg1: i32) -> (i32, i32, i32) {
    %c0_i32 = arith.constant 0 : i32
    %c0_i32_0 = arith.constant 0 : i32
    %c0_i32_1 = arith.constant 0 : i32
    return %arg0, %c0_i32, %c0_i32_0 : i32, i32, i32
  }
  func.func @transform_25(%arg0: i32, %arg1: i32) -> (i32, i32, i32, i32) {
    %c0_i32 = arith.constant 0 : i32
    %c0_i32_0 = arith.constant 0 : i32
    %c0_i32_1 = arith.constant 0 : i32
    return %arg1, %arg0, %c0_i32, %c0_i32_0 : i32, i32, i32, i32
  }
  func.func @transform_26(%arg0: i32, %arg1: i32) -> (i32, i32, i32, i32) {
    %c0_i32 = arith.constant 0 : i32
    %c0_i32_0 = arith.constant 0 : i32
    %c0_i32_1 = arith.constant 0 : i32
    return %arg1, %arg0, %c0_i32, %c0_i32_0 : i32, i32, i32, i32
  }
}

</mosaic_0001>

<llo_original>
// kernel: decoder_forward.1
$region0: #{decoder_forward.1}
  #allocation0 [shape = 'u32[]', space=smem, size = 0x4, offset = 0x4, fixed_abs, tag = 'smem constant byte address 0x4 - core index']
  #allocation1 [shape = 'u32[144,128]{1,0:T(1,128)}', space=vmem, size = 0x12000, scoped, tag = 'internal scratch']
  #allocation2 [shape = 'f32[8,32]{1,0:T(8,128)}', space=vmem, size = 0x1000, scoped, tag = 'scratch operand']
  %s0 = inlined_call_operand.vmem [shape: f32[2,8,32], index: 0, kind: input, shape index: {}]
  %s1 = inlined_call_operand.vmem [shape: f32[2,8,32], index: 1, kind: input, shape index: {}]
  %s2 = inlined_call_operand.vmem [shape: f32[2,1,8], index: 2, kind: input, shape index: {}]
  %s3 = inlined_call_operand.vmem [shape: f32[2,1,8], index: 3, kind: input, shape index: {}]
  %s4 = inlined_call_operand.vmem [shape: bf16[2,32,96], index: 4, kind: input, shape index: {}]
  %s5 = inlined_call_operand.vmem [shape: f32[2,1,96], index: 5, kind: input, shape index: {}]
  %s6 = inlined_call_operand.vmem [shape: bf16[2,32,32], index: 6, kind: input, shape index: {}]
  %s7 = inlined_call_operand.vmem [shape: f32[2,1,32], index: 7, kind: input, shape index: {}]
  %s8 = inlined_call_operand.vmem [shape: f32[2,1,32], index: 8, kind: input, shape index: {}]
  %s9 = inlined_call_operand.vmem [shape: f32[2,1,32], index: 9, kind: input, shape index: {}]
  %s10 = inlined_call_operand.vmem [shape: bf16[2,32,32], index: 10, kind: input, shape index: {}]
  %s11 = inlined_call_operand.vmem [shape: f32[2,1,32], index: 11, kind: input, shape index: {}]
  %s12 = inlined_call_operand.vmem [shape: bf16[2,32,64], index: 12, kind: input, shape index: {}]
  %s13 = inlined_call_operand.vmem [shape: f32[2,1,64], index: 13, kind: input, shape index: {}]
  %s14 = inlined_call_operand.vmem [shape: bf16[2,32,32], index: 14, kind: input, shape index: {}]
  %s15 = inlined_call_operand.vmem [shape: f32[2,1,32], index: 15, kind: input, shape index: {}]
  %s16 = inlined_call_operand.vmem [shape: f32[2,1,32], index: 16, kind: input, shape index: {}]
  %s17 = inlined_call_operand.vmem [shape: f32[2,1,32], index: 17, kind: input, shape index: {}]
  %s18 = inlined_call_operand.vmem [shape: bf16[2,32,64], index: 18, kind: input, shape index: {}]
  %s19 = inlined_call_operand.vmem [shape: f32[2,1,64], index: 19, kind: input, shape index: {}]
  %s20 = inlined_call_operand.vmem [shape: bf16[2,64,32], index: 20, kind: input, shape index: {}]
  %s21 = inlined_call_operand.vmem [shape: f32[2,1,32], index: 21, kind: input, shape index: {}]
  %s22 = inlined_call_operand.vmem [shape: f32[2,1,32], index: 22, kind: input, shape index: {}]
  %s23 = inlined_call_operand.vmem [shape: f32[2,1,32], index: 23, kind: input, shape index: {}]
  %s24 = inlined_call_operand.hbm [shape: f32[2,8,32], index: 24, kind: output, shape index: {0}]
  %s25 = inlined_call_operand.vmem [shape: f32[2,2,8,32], index: 25, kind: output, shape index: {1}]
  %s26 = inlined_call_operand.vmem [shape: f32[2,2,8,32], index: 26, kind: output, shape index: {2}]
  %27 = xla_tuple %s24, %s25, %s26
  %s28 = sld [smem:[#allocation0]]
  $region153: #{decoder_forward.1} parent=0
    _
  %s30 = ssub.s32 1, %s28
  %s31 = scalar_select 0, %s30, %s28
  $region1: #{decoder_forward.1} parent=0
    #allocation3 [shape = 'u8[8192]{0}', space=vmem, size = 0x2000, scoped, tag = 'output window, operand 0']
    #allocation4 [shape = 's32[2]{0}', space=sflag, size = 0x8, scoped, tag = 'scoped memory for decoder_forward.1']
    %32 = vsyncpa [#allocation4], 0
    %s33 = scalar_lea.sflag [#allocation4], 1
    %34 = vsyncpa %s33, 0
    loop: start=0, step=1, limit=6
    $region2: #{decoder_forward.1} parent=1 // loop_pre_header
      _
    $region3: #{decoder_forward.1} parent=1 // loop_header
      %s36 = sphi 0, %s40
      %p37 = scmp.ge.s32.totalorder %s36, 6
      %s43 = sphi 0, %s55
      %s44 = sphi 0, %s51
      %s45 = sphi 0, %s43
      %s46 = sphi 0, %s44
      %s47 = sphi 0, %s45
      %s48 = sphi 0, %s46
      %s58 = sphi 0, %s60
      %s61 = sphi 0, %s58
      %s62 = sphi 0, %s61
      %s78 = sphi 0, %s62
      %s84 = sphi 0, %s86
      %s87 = sphi 0, %s84
      %s88 = sphi 0, %s87
      %s104 = sphi 0, %s88
      %s110 = sphi 0, %s112
      %s113 = sphi 0, %s110
      %s114 = sphi 0, %s113
      %s130 = sphi 0, %s114
      %s136 = sphi 0, %s138
      %s139 = sphi 0, %s136
      %s140 = sphi 0, %s139
      %s156 = sphi 0, %s140
      %s162 = sphi 0, %s164
      %s165 = sphi 0, %s162
      %s166 = sphi 0, %s165
      %s182 = sphi 0, %s166
      %s188 = sphi 0, %s190
      %s191 = sphi 0, %s188
      %s192 = sphi 0, %s191
      %s208 = sphi 0, %s192
      %s214 = sphi 0, %s216
      %s217 = sphi 0, %s214
      %s218 = sphi 0, %s217
      %s234 = sphi 0, %s218
      %s240 = sphi 0, %s242
      %s243 = sphi 0, %s240
      %s244 = sphi 0, %s243
      %s260 = sphi 0, %s244
      %s266 = sphi 0, %s268
      %s269 = sphi 0, %s266
      %s270 = sphi 0, %s269
      %s286 = sphi 0, %s270
      %s292 = sphi 0, %s294
      %s295 = sphi 0, %s292
      %s296 = sphi 0, %s295
      %s312 = sphi 0, %s296
      %s318 = sphi 0, %s320
      %s321 = sphi 0, %s318
      %s322 = sphi 0, %s321
      %s338 = sphi 0, %s322
      %s344 = sphi 0, %s346
      %s347 = sphi 0, %s344
      %s348 = sphi 0, %s347
      %s364 = sphi 0, %s348
      %s370 = sphi 0, %s372
      %s373 = sphi 0, %s370
      %s374 = sphi 0, %s373
      %s390 = sphi 0, %s374
      %s396 = sphi 0, %s398
      %s399 = sphi 0, %s396
      %s400 = sphi 0, %s399
      %s416 = sphi 0, %s400
      %s422 = sphi 0, %s424
      %s425 = sphi 0, %s422
      %s426 = sphi 0, %s425
      %s442 = sphi 0, %s426
      %s448 = sphi 0, %s450
      %s451 = sphi 0, %s448
      %s452 = sphi 0, %s451
      %s468 = sphi 0, %s452
      %s474 = sphi 0, %s476
      %s477 = sphi 0, %s474
      %s478 = sphi 0, %s477
      %s494 = sphi 0, %s478
      %s500 = sphi 0, %s502
      %s503 = sphi 0, %s500
      %s504 = sphi 0, %s503
      %s520 = sphi 0, %s504
      %s526 = sphi 0, %s528
      %s529 = sphi 0, %s526
      %s530 = sphi 0, %s529
      %s546 = sphi 0, %s530
      %s552 = sphi 0, %s554
      %s555 = sphi 0, %s552
      %s556 = sphi 0, %s555
      %s572 = sphi 0, %s556
      %s578 = sphi 0, %s580
      %s581 = sphi 0, %s578
      %s582 = sphi 0, %s581
      %s598 = sphi 0, %s582
      %s604 = sphi 0, %s606
      %s607 = sphi 0, %s604
      %s608 = sphi 0, %s607
      %s624 = sphi 0, %s608
      %s630 = sphi 0, %s632
      %s633 = sphi 0, %s630
      %s634 = sphi 0, %s633
      %s650 = sphi 0, %s634
      %s656 = sphi 0, %s658
      %s659 = sphi 0, %s656
      %s660 = sphi 0, %s659
      %s676 = sphi 0, %s660
      %s682 = sphi 0, %s684
      %s685 = sphi 0, %s682
      %s686 = sphi 0, %s685
      %s702 = sphi 0, %s686
      %s710 = sphi 0, %s712
      %s713 = sphi 0, %s710
      %s714 = sphi 0, %s713
      %s730 = sphi 0, %s714
      %s738 = sphi 0, %s740
      %s741 = sphi 0, %s738
      %s742 = sphi 0, %s741
      %s758 = sphi 0, %s742
    $region4: #{decoder_forward.1} parent=1 // loop_header_branch
      %39 = sbr.rel (%p37) target = $region8
    $region5: #{decoder_forward.1} parent=1 // loop_body
      %s41 = ssub.s32 %s36, 1
      %s42 = ssub.s32 %s36, 2
      %s49 = sadd.s32 1, %s44
      %p50 = scmp.ge.s32.totalorder %s49, 2
      %s51 = scalar_select %p50, 0, %s49
      %s52 = sadd.s32 1, %s43
      %s53 = scalar_select %p50, %s52, %s43
      %p54 = scmp.ge.s32.totalorder %s53, 2
      %s55 = scalar_select %p54, 0, %s53
      %s56 = ssub.s32 %s43, %s55
      %p57 = scmp.eq.s32.totalorder %s56, 0
      %s59 = sadd.s32 %s58, 1
      %s60 = scalar_select %p57, %s58, %s59
      %p63 = pneg %p57
      %p64 = scmp.eq.s32.totalorder %s36, 3
      %p65 = por %p63, %p64
      %p66 = scmp.ne.s32.totalorder %s58, %s61
      %p67 = scmp.eq.s32.totalorder %s36, 0
      %p68 = por %p66, %p67
      %p69 = scmp.ne.s32.totalorder %s58, %s61
      %p70 = scmp.eq.s32.totalorder %s41, 3
      %p71 = por %p69, %p70
      %p72 = scmp.ne.s32.totalorder %s61, %s62
      %p73 = scmp.eq.s32.totalorder %s41, 0
      %p74 = por %p72, %p73
      %p75 = scmp.ne.s32.totalorder %s61, %s62
      %p76 = scmp.eq.s32.totalorder %s42, 3
      %p77 = por %p75, %p76
      %p79 = scmp.ne.s32.totalorder %s62, %s78
      %p80 = scmp.eq.s32.totalorder %s42, 0
      %p81 = por %p79, %p80
      %s82 = ssub.s32 %s43, %s55
      %p83 = scmp.eq.s32.totalorder %s82, 0
      %s85 = sadd.s32 %s84, 1
      %s86 = scalar_select %p83, %s84, %s85
      %p89 = pneg %p83
      %p90 = scmp.eq.s32.totalorder %s36, 3
      %p91 = por %p89, %p90
      %p92 = scmp.ne.s32.totalorder %s84, %s87
      %p93 = scmp.eq.s32.totalorder %s36, 0
      %p94 = por %p92, %p93
      %p95 = scmp.ne.s32.totalorder %s84, %s87
      %p96 = scmp.eq.s32.totalorder %s41, 3
      %p97 = por %p95, %p96
      %p98 = scmp.ne.s32.totalorder %s87, %s88
      %p99 = scmp.eq.s32.totalorder %s41, 0
      %p100 = por %p98, %p99
      %p101 = scmp.ne.s32.totalorder %s87, %s88
      %p102 = scmp.eq.s32.totalorder %s42, 3
      %p103 = por %p101, %p102
      %p105 = scmp.ne.s32.totalorder %s88, %s104
      %p106 = scmp.eq.s32.totalorder %s42, 0
      %p107 = por %p105, %p106
      %s108 = ssub.s32 %s43, %s55
      %p109 = scmp.eq.s32.totalorder %s108, 0
      %s111 = sadd.s32 %s110, 1
      %s112 = scalar_select %p109, %s110, %s111
      %p115 = pneg %p109
      %p116 = scmp.eq.s32.totalorder %s36, 3
      %p117 = por %p115, %p116
      %p118 = scmp.ne.s32.totalorder %s110, %s113
      %p119 = scmp.eq.s32.totalorder %s36, 0
      %p120 = por %p118, %p119
      %p121 = scmp.ne.s32.totalorder %s110, %s113
      %p122 = scmp.eq.s32.totalorder %s41, 3
      %p123 = por %p121, %p122
      %p124 = scmp.ne.s32.totalorder %s113, %s114
      %p125 = scmp.eq.s32.totalorder %s41, 0
      %p126 = por %p124, %p125
      %p127 = scmp.ne.s32.totalorder %s113, %s114
      %p128 = scmp.eq.s32.totalorder %s42, 3
      %p129 = por %p127, %p128
      %p131 = scmp.ne.s32.totalorder %s114, %s130
      %p132 = scmp.eq.s32.totalorder %s42, 0
      %p133 = por %p131, %p132
      %s134 = ssub.s32 %s43, %s55
      %p135 = scmp.eq.s32.totalorder %s134, 0
      %s137 = sadd.s32 %s136, 1
      %s138 = scalar_select %p135, %s136, %s137
      %p141 = pneg %p135
      %p142 = scmp.eq.s32.totalorder %s36, 3
      %p143 = por %p141, %p142
      %p144 = scmp.ne.s32.totalorder %s136, %s139
      %p145 = scmp.eq.s32.totalorder %s36, 0
      %p146 = por %p144, %p145
      %p147 = scmp.ne.s32.totalorder %s136, %s139
      %p148 = scmp.eq.s32.totalorder %s41, 3
      %p149 = por %p147, %p148
      %p150 = scmp.ne.s32.totalorder %s139, %s140
      %p151 = scmp.eq.s32.totalorder %s41, 0
      %p152 = por %p150, %p151
      %p153 = scmp.ne.s32.totalorder %s139, %s140
      %p154 = scmp.eq.s32.totalorder %s42, 3
      %p155 = por %p153, %p154
      %p157 = scmp.ne.s32.totalorder %s140, %s156
      %p158 = scmp.eq.s32.totalorder %s42, 0
      %p159 = por %p157, %p158
      %s160 = ssub.s32 %s44, %s51
      %p161 = scmp.eq.s32.totalorder %s160, 0
      %s163 = sadd.s32 %s162, 1
      %s164 = scalar_select %p161, %s162, %s163
      %p167 = pneg %p161
      %p168 = scmp.eq.s32.totalorder %s36, 3
      %p169 = por %p167, %p168
      %p170 = scmp.ne.s32.totalorder %s162, %s165
      %p171 = scmp.eq.s32.totalorder %s36, 0
      %p172 = por %p170, %p171
      %p173 = scmp.ne.s32.totalorder %s162, %s165
      %p174 = scmp.eq.s32.totalorder %s41, 3
      %p175 = por %p173, %p174
      %p176 = scmp.ne.s32.totalorder %s165, %s166
      %p177 = scmp.eq.s32.totalorder %s41, 0
      %p178 = por %p176, %p177
      %p179 = scmp.ne.s32.totalorder %s165, %s166
      %p180 = scmp.eq.s32.totalorder %s42, 3
      %p181 = por %p179, %p180
      %p183 = scmp.ne.s32.totalorder %s166, %s182
      %p184 = scmp.eq.s32.totalorder %s42, 0
      %p185 = por %p183, %p184
      %s186 = ssub.s32 %s44, %s51
      %p187 = scmp.eq.s32.totalorder %s186, 0
      %s189 = sadd.s32 %s188, 1
      %s190 = scalar_select %p187, %s188, %s189
      %p193 = pneg %p187
      %p194 = scmp.eq.s32.totalorder %s36, 3
      %p195 = por %p193, %p194
      %p196 = scmp.ne.s32.totalorder %s188, %s191
      %p197 = scmp.eq.s32.totalorder %s36, 0
      %p198 = por %p196, %p197
      %p199 = scmp.ne.s32.totalorder %s188, %s191
      %p200 = scmp.eq.s32.totalorder %s41, 3
      %p201 = por %p199, %p200
      %p202 = scmp.ne.s32.totalorder %s191, %s192
      %p203 = scmp.eq.s32.totalorder %s41, 0
      %p204 = por %p202, %p203
      %p205 = scmp.ne.s32.totalorder %s191, %s192
      %p206 = scmp.eq.s32.totalorder %s42, 3
      %p207 = por %p205, %p206
      %p209 = scmp.ne.s32.totalorder %s192, %s208
      %p210 = scmp.eq.s32.totalorder %s42, 0
      %p211 = por %p209, %p210
      %s212 = ssub.s32 %s44, %s51
      %p213 = scmp.eq.s32.totalorder %s212, 0
      %s215 = sadd.s32 %s214, 1
      %s216 = scalar_select %p213, %s214, %s215
      %p219 = pneg %p213
      %p220 = scmp.eq.s32.totalorder %s36, 3
      %p221 = por %p219, %p220
      %p222 = scmp.ne.s32.totalorder %s214, %s217
      %p223 = scmp.eq.s32.totalorder %s36, 0
      %p224 = por %p222, %p223
      %p225 = scmp.ne.s32.totalorder %s214, %s217
      %p226 = scmp.eq.s32.totalorder %s41, 3
      %p227 = por %p225, %p226
      %p228 = scmp.ne.s32.totalorder %s217, %s218
      %p229 = scmp.eq.s32.totalorder %s41, 0
      %p230 = por %p228, %p229
      %p231 = scmp.ne.s32.totalorder %s217, %s218
      %p232 = scmp.eq.s32.totalorder %s42, 3
      %p233 = por %p231, %p232
      %p235 = scmp.ne.s32.totalorder %s218, %s234
      %p236 = scmp.eq.s32.totalorder %s42, 0
      %p237 = por %p235, %p236
      %s238 = ssub.s32 %s44, %s51
      %p239 = scmp.eq.s32.totalorder %s238, 0
      %s241 = sadd.s32 %s240, 1
      %s242 = scalar_select %p239, %s240, %s241
      %p245 = pneg %p239
      %p246 = scmp.eq.s32.totalorder %s36, 3
      %p247 = por %p245, %p246
      %p248 = scmp.ne.s32.totalorder %s240, %s243
      %p249 = scmp.eq.s32.totalorder %s36, 0
      %p250 = por %p248, %p249
      %p251 = scmp.ne.s32.totalorder %s240, %s243
      %p252 = scmp.eq.s32.totalorder %s41, 3
      %p253 = por %p251, %p252
      %p254 = scmp.ne.s32.totalorder %s243, %s244
      %p255 = scmp.eq.s32.totalorder %s41, 0
      %p256 = por %p254, %p255
      %p257 = scmp.ne.s32.totalorder %s243, %s244
      %p258 = scmp.eq.s32.totalorder %s42, 3
      %p259 = por %p257, %p258
      %p261 = scmp.ne.s32.totalorder %s244, %s260
      %p262 = scmp.eq.s32.totalorder %s42, 0
      %p263 = por %p261, %p262
      %s264 = ssub.s32 %s44, %s51
      %p265 = scmp.eq.s32.totalorder %s264, 0
      %s267 = sadd.s32 %s266, 1
      %s268 = scalar_select %p265, %s266, %s267
      %p271 = pneg %p265
      %p272 = scmp.eq.s32.totalorder %s36, 3
      %p273 = por %p271, %p272
      %p274 = scmp.ne.s32.totalorder %s266, %s269
      %p275 = scmp.eq.s32.totalorder %s36, 0
      %p276 = por %p274, %p275
      %p277 = scmp.ne.s32.totalorder %s266, %s269
      %p278 = scmp.eq.s32.totalorder %s41, 3
      %p279 = por %p277, %p278
      %p280 = scmp.ne.s32.totalorder %s269, %s270
      %p281 = scmp.eq.s32.totalorder %s41, 0
      %p282 = por %p280, %p281
      %p283 = scmp.ne.s32.totalorder %s269, %s270
      %p284 = scmp.eq.s32.totalorder %s42, 3
      %p285 = por %p283, %p284
      %p287 = scmp.ne.s32.totalorder %s270, %s286
      %p288 = scmp.eq.s32.totalorder %s42, 0
      %p289 = por %p287, %p288
      %s290 = ssub.s32 %s44, %s51
      %p291 = scmp.eq.s32.totalorder %s290, 0
      %s293 = sadd.s32 %s292, 1
      %s294 = scalar_select %p291, %s292, %s293
      %p297 = pneg %p291
      %p298 = scmp.eq.s32.totalorder %s36, 3
      %p299 = por %p297, %p298
      %p300 = scmp.ne.s32.totalorder %s292, %s295
      %p301 = scmp.eq.s32.totalorder %s36, 0
      %p302 = por %p300, %p301
      %p303 = scmp.ne.s32.totalorder %s292, %s295
      %p304 = scmp.eq.s32.totalorder %s41, 3
      %p305 = por %p303, %p304
      %p306 = scmp.ne.s32.totalorder %s295, %s296
      %p307 = scmp.eq.s32.totalorder %s41, 0
      %p308 = por %p306, %p307
      %p309 = scmp.ne.s32.totalorder %s295, %s296
      %p310 = scmp.eq.s32.totalorder %s42, 3
      %p311 = por %p309, %p310
      %p313 = scmp.ne.s32.totalorder %s296, %s312
      %p314 = scmp.eq.s32.totalorder %s42, 0
      %p315 = por %p313, %p314
      %s316 = ssub.s32 %s44, %s51
      %p317 = scmp.eq.s32.totalorder %s316, 0
      %s319 = sadd.s32 %s318, 1
      %s320 = scalar_select %p317, %s318, %s319
      %p323 = pneg %p317
      %p324 = scmp.eq.s32.totalorder %s36, 3
      %p325 = por %p323, %p324
      %p326 = scmp.ne.s32.totalorder %s318, %s321
      %p327 = scmp.eq.s32.totalorder %s36, 0
      %p328 = por %p326, %p327
      %p329 = scmp.ne.s32.totalorder %s318, %s321
      %p330 = scmp.eq.s32.totalorder %s41, 3
      %p331 = por %p329, %p330
      %p332 = scmp.ne.s32.totalorder %s321, %s322
      %p333 = scmp.eq.s32.totalorder %s41, 0
      %p334 = por %p332, %p333
      %p335 = scmp.ne.s32.totalorder %s321, %s322
      %p336 = scmp.eq.s32.totalorder %s42, 3
      %p337 = por %p335, %p336
      %p339 = scmp.ne.s32.totalorder %s322, %s338
      %p340 = scmp.eq.s32.totalorder %s42, 0
      %p341 = por %p339, %p340
      %s342 = ssub.s32 %s44, %s51
      %p343 = scmp.eq.s32.totalorder %s342, 0
      %s345 = sadd.s32 %s344, 1
      %s346 = scalar_select %p343, %s344, %s345
      %p349 = pneg %p343
      %p350 = scmp.eq.s32.totalorder %s36, 3
      %p351 = por %p349, %p350
      %p352 = scmp.ne.s32.totalorder %s344, %s347
      %p353 = scmp.eq.s32.totalorder %s36, 0
      %p354 = por %p352, %p353
      %p355 = scmp.ne.s32.totalorder %s344, %s347
      %p356 = scmp.eq.s32.totalorder %s41, 3
      %p357 = por %p355, %p356
      %p358 = scmp.ne.s32.totalorder %s347, %s348
      %p359 = scmp.eq.s32.totalorder %s41, 0
      %p360 = por %p358, %p359
      %p361 = scmp.ne.s32.totalorder %s347, %s348
      %p362 = scmp.eq.s32.totalorder %s42, 3
      %p363 = por %p361, %p362
      %p365 = scmp.ne.s32.totalorder %s348, %s364
      %p366 = scmp.eq.s32.totalorder %s42, 0
      %p367 = por %p365, %p366
      %s368 = ssub.s32 %s44, %s51
      %p369 = scmp.eq.s32.totalorder %s368, 0
      %s371 = sadd.s32 %s370, 1
      %s372 = scalar_select %p369, %s370, %s371
      %p375 = pneg %p369
      %p376 = scmp.eq.s32.totalorder %s36, 3
      %p377 = por %p375, %p376
      %p378 = scmp.ne.s32.totalorder %s370, %s373
      %p379 = scmp.eq.s32.totalorder %s36, 0
      %p380 = por %p378, %p379
      %p381 = scmp.ne.s32.totalorder %s370, %s373
      %p382 = scmp.eq.s32.totalorder %s41, 3
      %p383 = por %p381, %p382
      %p384 = scmp.ne.s32.totalorder %s373, %s374
      %p385 = scmp.eq.s32.totalorder %s41, 0
      %p386 = por %p384, %p385
      %p387 = scmp.ne.s32.totalorder %s373, %s374
      %p388 = scmp.eq.s32.totalorder %s42, 3
      %p389 = por %p387, %p388
      %p391 = scmp.ne.s32.totalorder %s374, %s390
      %p392 = scmp.eq.s32.totalorder %s42, 0
      %p393 = por %p391, %p392
      %s394 = ssub.s32 %s44, %s51
      %p395 = scmp.eq.s32.totalorder %s394, 0
      %s397 = sadd.s32 %s396, 1
      %s398 = scalar_select %p395, %s396, %s397
      %p401 = pneg %p395
      %p402 = scmp.eq.s32.totalorder %s36, 3
      %p403 = por %p401, %p402
      %p404 = scmp.ne.s32.totalorder %s396, %s399
      %p405 = scmp.eq.s32.totalorder %s36, 0
      %p406 = por %p404, %p405
      %p407 = scmp.ne.s32.totalorder %s396, %s399
      %p408 = scmp.eq.s32.totalorder %s41, 3
      %p409 = por %p407, %p408
      %p410 = scmp.ne.s32.totalorder %s399, %s400
      %p411 = scmp.eq.s32.totalorder %s41, 0
      %p412 = por %p410, %p411
      %p413 = scmp.ne.s32.totalorder %s399, %s400
      %p414 = scmp.eq.s32.totalorder %s42, 3
      %p415 = por %p413, %p414
      %p417 = scmp.ne.s32.totalorder %s400, %s416
      %p418 = scmp.eq.s32.totalorder %s42, 0
      %p419 = por %p417, %p418
      %s420 = ssub.s32 %s44, %s51
      %p421 = scmp.eq.s32.totalorder %s420, 0
      %s423 = sadd.s32 %s422, 1
      %s424 = scalar_select %p421, %s422, %s423
      %p427 = pneg %p421
      %p428 = scmp.eq.s32.totalorder %s36, 3
      %p429 = por %p427, %p428
      %p430 = scmp.ne.s32.totalorder %s422, %s425
      %p431 = scmp.eq.s32.totalorder %s36, 0
      %p432 = por %p430, %p431
      %p433 = scmp.ne.s32.totalorder %s422, %s425
      %p434 = scmp.eq.s32.totalorder %s41, 3
      %p435 = por %p433, %p434
      %p436 = scmp.ne.s32.totalorder %s425, %s426
      %p437 = scmp.eq.s32.totalorder %s41, 0
      %p438 = por %p436, %p437
      %p439 = scmp.ne.s32.totalorder %s425, %s426
      %p440 = scmp.eq.s32.totalorder %s42, 3
      %p441 = por %p439, %p440
      %p443 = scmp.ne.s32.totalorder %s426, %s442
      %p444 = scmp.eq.s32.totalorder %s42, 0
      %p445 = por %p443, %p444
      %s446 = ssub.s32 %s44, %s51
      %p447 = scmp.eq.s32.totalorder %s446, 0
      %s449 = sadd.s32 %s448, 1
      %s450 = scalar_select %p447, %s448, %s449
      %p453 = pneg %p447
      %p454 = scmp.eq.s32.totalorder %s36, 3
      %p455 = por %p453, %p454
      %p456 = scmp.ne.s32.totalorder %s448, %s451
      %p457 = scmp.eq.s32.totalorder %s36, 0
      %p458 = por %p456, %p457
      %p459 = scmp.ne.s32.totalorder %s448, %s451
      %p460 = scmp.eq.s32.totalorder %s41, 3
      %p461 = por %p459, %p460
      %p462 = scmp.ne.s32.totalorder %s451, %s452
      %p463 = scmp.eq.s32.totalorder %s41, 0
      %p464 = por %p462, %p463
      %p465 = scmp.ne.s32.totalorder %s451, %s452
      %p466 = scmp.eq.s32.totalorder %s42, 3
      %p467 = por %p465, %p466
      %p469 = scmp.ne.s32.totalorder %s452, %s468
      %p470 = scmp.eq.s32.totalorder %s42, 0
      %p471 = por %p469, %p470
      %s472 = ssub.s32 %s44, %s51
      %p473 = scmp.eq.s32.totalorder %s472, 0
      %s475 = sadd.s32 %s474, 1
      %s476 = scalar_select %p473, %s474, %s475
      %p479 = pneg %p473
      %p480 = scmp.eq.s32.totalorder %s36, 3
      %p481 = por %p479, %p480
      %p482 = scmp.ne.s32.totalorder %s474, %s477
      %p483 = scmp.eq.s32.totalorder %s36, 0
      %p484 = por %p482, %p483
      %p485 = scmp.ne.s32.totalorder %s474, %s477
      %p486 = scmp.eq.s32.totalorder %s41, 3
      %p487 = por %p485, %p486
      %p488 = scmp.ne.s32.totalorder %s477, %s478
      %p489 = scmp.eq.s32.totalorder %s41, 0
      %p490 = por %p488, %p489
      %p491 = scmp.ne.s32.totalorder %s477, %s478
      %p492 = scmp.eq.s32.totalorder %s42, 3
      %p493 = por %p491, %p492
      %p495 = scmp.ne.s32.totalorder %s478, %s494
      %p496 = scmp.eq.s32.totalorder %s42, 0
      %p497 = por %p495, %p496
      %s498 = ssub.s32 %s44, %s51
      %p499 = scmp.eq.s32.totalorder %s498, 0
      %s501 = sadd.s32 %s500, 1
      %s502 = scalar_select %p499, %s500, %s501
      %p505 = pneg %p499
      %p506 = scmp.eq.s32.totalorder %s36, 3
      %p507 = por %p505, %p506
      %p508 = scmp.ne.s32.totalorder %s500, %s503
      %p509 = scmp.eq.s32.totalorder %s36, 0
      %p510 = por %p508, %p509
      %p511 = scmp.ne.s32.totalorder %s500, %s503
      %p512 = scmp.eq.s32.totalorder %s41, 3
      %p513 = por %p511, %p512
      %p514 = scmp.ne.s32.totalorder %s503, %s504
      %p515 = scmp.eq.s32.totalorder %s41, 0
      %p516 = por %p514, %p515
      %p517 = scmp.ne.s32.totalorder %s503, %s504
      %p518 = scmp.eq.s32.totalorder %s42, 3
      %p519 = por %p517, %p518
      %p521 = scmp.ne.s32.totalorder %s504, %s520
      %p522 = scmp.eq.s32.totalorder %s42, 0
      %p523 = por %p521, %p522
      %s524 = ssub.s32 %s44, %s51
      %p525 = scmp.eq.s32.totalorder %s524, 0
      %s527 = sadd.s32 %s526, 1
      %s528 = scalar_select %p525, %s526, %s527
      %p531 = pneg %p525
      %p532 = scmp.eq.s32.totalorder %s36, 3
      %p533 = por %p531, %p532
      %p534 = scmp.ne.s32.totalorder %s526, %s529
      %p535 = scmp.eq.s32.totalorder %s36, 0
      %p536 = por %p534, %p535
      %p537 = scmp.ne.s32.totalorder %s526, %s529
      %p538 = scmp.eq.s32.totalorder %s41, 3
      %p539 = por %p537, %p538
      %p540 = scmp.ne.s32.totalorder %s529, %s530
      %p541 = scmp.eq.s32.totalorder %s41, 0
      %p542 = por %p540, %p541
      %p543 = scmp.ne.s32.totalorder %s529, %s530
      %p544 = scmp.eq.s32.totalorder %s42, 3
      %p545 = por %p543, %p544
      %p547 = scmp.ne.s32.totalorder %s530, %s546
      %p548 = scmp.eq.s32.totalorder %s42, 0
      %p549 = por %p547, %p548
      %s550 = ssub.s32 %s44, %s51
      %p551 = scmp.eq.s32.totalorder %s550, 0
      %s553 = sadd.s32 %s552, 1
      %s554 = scalar_select %p551, %s552, %s553
      %p557 = pneg %p551
      %p558 = scmp.eq.s32.totalorder %s36, 3
      %p559 = por %p557, %p558
      %p560 = scmp.ne.s32.totalorder %s552, %s555
      %p561 = scmp.eq.s32.totalorder %s36, 0
      %p562 = por %p560, %p561
      %p563 = scmp.ne.s32.totalorder %s552, %s555
      %p564 = scmp.eq.s32.totalorder %s41, 3
      %p565 = por %p563, %p564
      %p566 = scmp.ne.s32.totalorder %s555, %s556
      %p567 = scmp.eq.s32.totalorder %s41, 0
      %p568 = por %p566, %p567
      %p569 = scmp.ne.s32.totalorder %s555, %s556
      %p570 = scmp.eq.s32.totalorder %s42, 3
      %p571 = por %p569, %p570
      %p573 = scmp.ne.s32.totalorder %s556, %s572
      %p574 = scmp.eq.s32.totalorder %s42, 0
      %p575 = por %p573, %p574
      %s576 = ssub.s32 %s44, %s51
      %p577 = scmp.eq.s32.totalorder %s576, 0
      %s579 = sadd.s32 %s578, 1
      %s580 = scalar_select %p577, %s578, %s579
      %p583 = pneg %p577
      %p584 = scmp.eq.s32.totalorder %s36, 3
      %p585 = por %p583, %p584
      %p586 = scmp.ne.s32.totalorder %s578, %s581
      %p587 = scmp.eq.s32.totalorder %s36, 0
      %p588 = por %p586, %p587
      %p589 = scmp.ne.s32.totalorder %s578, %s581
      %p590 = scmp.eq.s32.totalorder %s41, 3
      %p591 = por %p589, %p590
      %p592 = scmp.ne.s32.totalorder %s581, %s582
      %p593 = scmp.eq.s32.totalorder %s41, 0
      %p594 = por %p592, %p593
      %p595 = scmp.ne.s32.totalorder %s581, %s582
      %p596 = scmp.eq.s32.totalorder %s42, 3
      %p597 = por %p595, %p596
      %p599 = scmp.ne.s32.totalorder %s582, %s598
      %p600 = scmp.eq.s32.totalorder %s42, 0
      %p601 = por %p599, %p600
      %s602 = ssub.s32 %s44, %s51
      %p603 = scmp.eq.s32.totalorder %s602, 0
      %s605 = sadd.s32 %s604, 1
      %s606 = scalar_select %p603, %s604, %s605
      %p609 = pneg %p603
      %p610 = scmp.eq.s32.totalorder %s36, 3
      %p611 = por %p609, %p610
      %p612 = scmp.ne.s32.totalorder %s604, %s607
      %p613 = scmp.eq.s32.totalorder %s36, 0
      %p614 = por %p612, %p613
      %p615 = scmp.ne.s32.totalorder %s604, %s607
      %p616 = scmp.eq.s32.totalorder %s41, 3
      %p617 = por %p615, %p616
      %p618 = scmp.ne.s32.totalorder %s607, %s608
      %p619 = scmp.eq.s32.totalorder %s41, 0
      %p620 = por %p618, %p619
      %p621 = scmp.ne.s32.totalorder %s607, %s608
      %p622 = scmp.eq.s32.totalorder %s42, 3
      %p623 = por %p621, %p622
      %p625 = scmp.ne.s32.totalorder %s608, %s624
      %p626 = scmp.eq.s32.totalorder %s42, 0
      %p627 = por %p625, %p626
      %s628 = ssub.s32 %s44, %s51
      %p629 = scmp.eq.s32.totalorder %s628, 0
      %s631 = sadd.s32 %s630, 1
      %s632 = scalar_select %p629, %s630, %s631
      %p635 = pneg %p629
      %p636 = scmp.eq.s32.totalorder %s36, 3
      %p637 = por %p635, %p636
      %p638 = scmp.ne.s32.totalorder %s630, %s633
      %p639 = scmp.eq.s32.totalorder %s36, 0
      %p640 = por %p638, %p639
      %p641 = scmp.ne.s32.totalorder %s630, %s633
      %p642 = scmp.eq.s32.totalorder %s41, 3
      %p643 = por %p641, %p642
      %p644 = scmp.ne.s32.totalorder %s633, %s634
      %p645 = scmp.eq.s32.totalorder %s41, 0
      %p646 = por %p644, %p645
      %p647 = scmp.ne.s32.totalorder %s633, %s634
      %p648 = scmp.eq.s32.totalorder %s42, 3
      %p649 = por %p647, %p648
      %p651 = scmp.ne.s32.totalorder %s634, %s650
      %p652 = scmp.eq.s32.totalorder %s42, 0
      %p653 = por %p651, %p652
      %s654 = ssub.s32 %s44, %s51
      %p655 = scmp.eq.s32.totalorder %s654, 0
      %s657 = sadd.s32 %s656, 1
      %s658 = scalar_select %p655, %s656, %s657
      %p661 = pneg %p655
      %p662 = scmp.eq.s32.totalorder %s36, 3
      %p663 = por %p661, %p662
      %p664 = scmp.ne.s32.totalorder %s656, %s659
      %p665 = scmp.eq.s32.totalorder %s36, 0
      %p666 = por %p664, %p665
      %p667 = scmp.ne.s32.totalorder %s656, %s659
      %p668 = scmp.eq.s32.totalorder %s41, 3
      %p669 = por %p667, %p668
      %p670 = scmp.ne.s32.totalorder %s659, %s660
      %p671 = scmp.eq.s32.totalorder %s41, 0
      %p672 = por %p670, %p671
      %p673 = scmp.ne.s32.totalorder %s659, %s660
      %p674 = scmp.eq.s32.totalorder %s42, 3
      %p675 = por %p673, %p674
      %p677 = scmp.ne.s32.totalorder %s660, %s676
      %p678 = scmp.eq.s32.totalorder %s42, 0
      %p679 = por %p677, %p678
      %s680 = ssub.s32 %s43, %s55
      %p681 = scmp.eq.s32.totalorder %s680, 0
      %s683 = sadd.s32 %s682, 1
      %s684 = scalar_select %p681, %s682, %s683
      %p687 = pneg %p681
      %p688 = scmp.eq.s32.totalorder %s36, 3
      %p689 = por %p687, %p688
      %p690 = scmp.ne.s32.totalorder %s682, %s685
      %p691 = scmp.eq.s32.totalorder %s36, 0
      %p692 = por %p690, %p691
      %p693 = scmp.ne.s32.totalorder %s682, %s685
      %p694 = scmp.eq.s32.totalorder %s41, 3
      %p695 = por %p693, %p694
      %p696 = scmp.ne.s32.totalorder %s685, %s686
      %p697 = scmp.eq.s32.totalorder %s41, 0
      %p698 = por %p696, %p697
      %p699 = scmp.ne.s32.totalorder %s685, %s686
      %p700 = scmp.eq.s32.totalorder %s42, 3
      %p701 = por %p699, %p700
      %p703 = scmp.ne.s32.totalorder %s686, %s702
      %p704 = scmp.eq.s32.totalorder %s42, 0
      %p705 = por %p703, %p704
      %s706 = ssub.s32 %s44, %s51
      %s707 = ssub.s32 %s43, %s55
      %s708 = sor.u32 %s706, %s707
      %p709 = scmp.eq.s32.totalorder %s708, 0
      %s711 = sadd.s32 %s710, 1
      %s712 = scalar_select %p709, %s710, %s711
      %p715 = pneg %p709
      %p716 = scmp.eq.s32.totalorder %s36, 3
      %p717 = por %p715, %p716
      %p718 = scmp.ne.s32.totalorder %s710, %s713
      %p719 = scmp.eq.s32.totalorder %s36, 0
      %p720 = por %p718, %p719
      %p721 = scmp.ne.s32.totalorder %s710, %s713
      %p722 = scmp.eq.s32.totalorder %s41, 3
      %p723 = por %p721, %p722
      %p724 = scmp.ne.s32.totalorder %s713, %s714
      %p725 = scmp.eq.s32.totalorder %s41, 0
      %p726 = por %p724, %p725
      %p727 = scmp.ne.s32.totalorder %s713, %s714
      %p728 = scmp.eq.s32.totalorder %s42, 3
      %p729 = por %p727, %p728
      %p731 = scmp.ne.s32.totalorder %s714, %s730
      %p732 = scmp.eq.s32.totalorder %s42, 0
      %p733 = por %p731, %p732
      %s734 = ssub.s32 %s44, %s51
      %s735 = ssub.s32 %s43, %s55
      %s736 = sor.u32 %s734, %s735
      %p737 = scmp.eq.s32.totalorder %s736, 0
      %s739 = sadd.s32 %s738, 1
      %s740 = scalar_select %p737, %s738, %s739
      %p743 = pneg %p737
      %p744 = scmp.eq.s32.totalorder %s36, 3
      %p745 = por %p743, %p744
      %p746 = scmp.ne.s32.totalorder %s738, %s741
      %p747 = scmp.eq.s32.totalorder %s36, 0
      %p748 = por %p746, %p747
      %p749 = scmp.ne.s32.totalorder %s738, %s741
      %p750 = scmp.eq.s32.totalorder %s41, 3
      %p751 = por %p749, %p750
      %p752 = scmp.ne.s32.totalorder %s741, %s742
      %p753 = scmp.eq.s32.totalorder %s41, 0
      %p754 = por %p752, %p753
      %p755 = scmp.ne.s32.totalorder %s741, %s742
      %p756 = scmp.eq.s32.totalorder %s42, 3
      %p757 = por %p755, %p756
      %p759 = scmp.ne.s32.totalorder %s742, %s758
      %p760 = scmp.eq.s32.totalorder %s42, 0
      %p761 = por %p759, %p760
      %p762 = scmp.le.s32.totalorder 1, %s36
      %p763 = scmp.lt.s32.totalorder %s36, 5
      %p764 = pnand %p762, %p763
      %p765 = pneg %p764
      // Predicated region
      $region9: #{decoder_forward.1} parent=5 // pred_check
        _
      $region10: #{decoder_forward.1} parent=5 // pred_check_branch
        %767 = sbr.rel (%p764) target = $region12
      $region11: #{decoder_forward.1} parent=5 // pred_region
        %s768 = ssub.s32 %s36, 1
      $region12: #{decoder_forward.1} parent=5 // pred_fallthru
        _
      %p769 = scmp.lt.s32.totalorder %s36, 4
      // Predicated region
      $region13: #{decoder_forward.1} parent=5 // pred_check
        %p770 = pneg %p769
      $region14: #{decoder_forward.1} parent=5 // pred_check_branch
        %772 = sbr.rel (%p770) target = $region16
      $region15: #{decoder_forward.1} parent=5 // pred_region
        // Predicated region
        $region17: #{decoder_forward.1} parent=15 // pred_check
          %p773 = pneg %p68
        $region18: #{decoder_forward.1} parent=15 // pred_check_branch
          %775 = sbr.rel (%p773) target = $region20
        $region19: #{decoder_forward.1} parent=15 // pred_region
          %p776 = scmp.lt.s32.totalorder %s43, 1
          %s777 = scalar_select %p776, %s43, 1
          %s778 = smul.addr %s777, 8
          %s779 = scalar_lea.vmem %s0, %s778
        $region20: #{decoder_forward.1} parent=15 // pred_fallthru
          _
        // Predicated region
        $region21: #{decoder_forward.1} parent=15 // pred_check
          %p780 = pneg %p94
        $region22: #{decoder_forward.1} parent=15 // pred_check_branch
          %782 = sbr.rel (%p780) target = $region24
        $region23: #{decoder_forward.1} parent=15 // pred_region
          %p783 = scmp.lt.s32.totalorder %s43, 1
          %s784 = scalar_select %p783, %s43, 1
          %s785 = smul.addr %s784, 8
          %s786 = scalar_lea.vmem %s1, %s785
        $region24: #{decoder_forward.1} parent=15 // pred_fallthru
          _
        // Predicated region
        $region25: #{decoder_forward.1} parent=15 // pred_check
          %p787 = pneg %p120
        $region26: #{decoder_forward.1} parent=15 // pred_check_branch
          %789 = sbr.rel (%p787) target = $region28
        $region27: #{decoder_forward.1} parent=15 // pred_region
          %p790 = scmp.lt.s32.totalorder %s43, 1
          %s791 = scalar_select %p790, %s43, 1
          %s792 = scalar_lea.vmem %s2, %s791
        $region28: #{decoder_forward.1} parent=15 // pred_fallthru
          _
        // Predicated region
        $region29: #{decoder_forward.1} parent=15 // pred_check
          %p793 = pneg %p146
        $region30: #{decoder_forward.1} parent=15 // pred_check_branch
          %795 = sbr.rel (%p793) target = $region32
        $region31: #{decoder_forward.1} parent=15 // pred_region
          %p796 = scmp.lt.s32.totalorder %s43, 1
          %s797 = scalar_select %p796, %s43, 1
          %s798 = scalar_lea.vmem %s3, %s797
        $region32: #{decoder_forward.1} parent=15 // pred_fallthru
          _
        // Predicated region
        $region33: #{decoder_forward.1} parent=15 // pred_check
          %p799 = pneg %p172
        $region34: #{decoder_forward.1} parent=15 // pred_check_branch
          %801 = sbr.rel (%p799) target = $region36
        $region35: #{decoder_forward.1} parent=15 // pred_region
          %p802 = scmp.lt.s32.totalorder %s44, 1
          %s803 = scalar_select %p802, %s44, 1
          %s804 = smul.addr %s803, 4
          %s805 = smul.addr %s804, 4
          %s806 = scalar_lea.vmem %s4, %s805
        $region36: #{decoder_forward.1} parent=15 // pred_fallthru
          _
        // Predicated region
        $region37: #{decoder_forward.1} parent=15 // pred_check
          %p807 = pneg %p198
        $region38: #{decoder_forward.1} parent=15 // pred_check_branch
          %809 = sbr.rel (%p807) target = $region40
        $region39: #{decoder_forward.1} parent=15 // pred_region
          %p810 = scmp.lt.s32.totalorder %s44, 1
          %s811 = scalar_select %p810, %s44, 1
          %s812 = scalar_lea.vmem %s5, %s811
        $region40: #{decoder_forward.1} parent=15 // pred_fallthru
          _
        // Predicated region
        $region41: #{decoder_forward.1} parent=15 // pred_check
          %p813 = pneg %p224
        $region42: #{decoder_forward.1} parent=15 // pred_check_branch
          %815 = sbr.rel (%p813) target = $region44
        $region43: #{decoder_forward.1} parent=15 // pred_region
          %p816 = scmp.lt.s32.totalorder %s44, 1
          %s817 = scalar_select %p816, %s44, 1
          %s818 = smul.addr %s817, 4
          %s819 = smul.addr %s818, 4
          %s820 = scalar_lea.vmem %s6, %s819
        $region44: #{decoder_forward.1} parent=15 // pred_fallthru
          _
        // Predicated region
        $region45: #{decoder_forward.1} parent=15 // pred_check
          %p821 = pneg %p250
        $region46: #{decoder_forward.1} parent=15 // pred_check_branch
          %823 = sbr.rel (%p821) target = $region48
        $region47: #{decoder_forward.1} parent=15 // pred_region
          %p824 = scmp.lt.s32.totalorder %s44, 1
          %s825 = scalar_select %p824, %s44, 1
          %s826 = scalar_lea.vmem %s7, %s825
        $region48: #{decoder_forward.1} parent=15 // pred_fallthru
          _
        // Predicated region
        $region49: #{decoder_forward.1} parent=15 // pred_check
          %p827 = pneg %p276
        $region50: #{decoder_forward.1} parent=15 // pred_check_branch
          %829 = sbr.rel (%p827) target = $region52
        $region51: #{decoder_forward.1} parent=15 // pred_region
          %p830 = scmp.lt.s32.totalorder %s44, 1
          %s831 = scalar_select %p830, %s44, 1
          %s832 = scalar_lea.vmem %s8, %s831
        $region52: #{decoder_forward.1} parent=15 // pred_fallthru
          _
        // Predicated region
        $region53: #{decoder_forward.1} parent=15 // pred_check
          %p833 = pneg %p302
        $region54: #{decoder_forward.1} parent=15 // pred_check_branch
          %835 = sbr.rel (%p833) target = $region56
        $region55: #{decoder_forward.1} parent=15 // pred_region
          %p836 = scmp.lt.s32.totalorder %s44, 1
          %s837 = scalar_select %p836, %s44, 1
          %s838 = scalar_lea.vmem %s9, %s837
        $region56: #{decoder_forward.1} parent=15 // pred_fallthru
          _
        // Predicated region
        $region57: #{decoder_forward.1} parent=15 // pred_check
          %p839 = pneg %p328
        $region58: #{decoder_forward.1} parent=15 // pred_check_branch
          %841 = sbr.rel (%p839) target = $region60
        $region59: #{decoder_forward.1} parent=15 // pred_region
          %p842 = scmp.lt.s32.totalorder %s44, 1
          %s843 = scalar_select %p842, %s44, 1
          %s844 = smul.addr %s843, 4
          %s845 = smul.addr %s844, 4
          %s846 = scalar_lea.vmem %s10, %s845
        $region60: #{decoder_forward.1} parent=15 // pred_fallthru
          _
        // Predicated region
        $region61: #{decoder_forward.1} parent=15 // pred_check
          %p847 = pneg %p354
        $region62: #{decoder_forward.1} parent=15 // pred_check_branch
          %849 = sbr.rel (%p847) target = $region64
        $region63: #{decoder_forward.1} parent=15 // pred_region
          %p850 = scmp.lt.s32.totalorder %s44, 1
          %s851 = scalar_select %p850, %s44, 1
          %s852 = scalar_lea.vmem %s11, %s851
        $region64: #{decoder_forward.1} parent=15 // pred_fallthru
          _
        // Predicated region
        $region65: #{decoder_forward.1} parent=15 // pred_check
          %p853 = pneg %p380
        $region66: #{decoder_forward.1} parent=15 // pred_check_branch
          %855 = sbr.rel (%p853) target = $region68
        $region67: #{decoder_forward.1} parent=15 // pred_region
          %p856 = scmp.lt.s32.totalorder %s44, 1
          %s857 = scalar_select %p856, %s44, 1
          %s858 = smul.addr %s857, 4
          %s859 = smul.addr %s858, 4
          %s860 = scalar_lea.vmem %s12, %s859
        $region68: #{decoder_forward.1} parent=15 // pred_fallthru
          _
        // Predicated region
        $region69: #{decoder_forward.1} parent=15 // pred_check
          %p861 = pneg %p406
        $region70: #{decoder_forward.1} parent=15 // pred_check_branch
          %863 = sbr.rel (%p861) target = $region72
        $region71: #{decoder_forward.1} parent=15 // pred_region
          %p864 = scmp.lt.s32.totalorder %s44, 1
          %s865 = scalar_select %p864, %s44, 1
          %s866 = scalar_lea.vmem %s13, %s865
        $region72: #{decoder_forward.1} parent=15 // pred_fallthru
          _
        // Predicated region
        $region73: #{decoder_forward.1} parent=15 // pred_check
          %p867 = pneg %p432
        $region74: #{decoder_forward.1} parent=15 // pred_check_branch
          %869 = sbr.rel (%p867) target = $region76
        $region75: #{decoder_forward.1} parent=15 // pred_region
          %p870 = scmp.lt.s32.totalorder %s44, 1
          %s871 = scalar_select %p870, %s44, 1
          %s872 = smul.addr %s871, 4
          %s873 = smul.addr %s872, 4
          %s874 = scalar_lea.vmem %s14, %s873
        $region76: #{decoder_forward.1} parent=15 // pred_fallthru
          _
        // Predicated region
        $region77: #{decoder_forward.1} parent=15 // pred_check
          %p875 = pneg %p458
        $region78: #{decoder_forward.1} parent=15 // pred_check_branch
          %877 = sbr.rel (%p875) target = $region80
        $region79: #{decoder_forward.1} parent=15 // pred_region
          %p878 = scmp.lt.s32.totalorder %s44, 1
          %s879 = scalar_select %p878, %s44, 1
          %s880 = scalar_lea.vmem %s15, %s879
        $region80: #{decoder_forward.1} parent=15 // pred_fallthru
          _
        // Predicated region
        $region81: #{decoder_forward.1} parent=15 // pred_check
          %p881 = pneg %p484
        $region82: #{decoder_forward.1} parent=15 // pred_check_branch
          %883 = sbr.rel (%p881) target = $region84
        $region83: #{decoder_forward.1} parent=15 // pred_region
          %p884 = scmp.lt.s32.totalorder %s44, 1
          %s885 = scalar_select %p884, %s44, 1
          %s886 = scalar_lea.vmem %s16, %s885
        $region84: #{decoder_forward.1} parent=15 // pred_fallthru
          _
        // Predicated region
        $region85: #{decoder_forward.1} parent=15 // pred_check
          %p887 = pneg %p510
        $region86: #{decoder_forward.1} parent=15 // pred_check_branch
          %889 = sbr.rel (%p887) target = $region88
        $region87: #{decoder_forward.1} parent=15 // pred_region
          %p890 = scmp.lt.s32.totalorder %s44, 1
          %s891 = scalar_select %p890, %s44, 1
          %s892 = scalar_lea.vmem %s17, %s891
        $region88: #{decoder_forward.1} parent=15 // pred_fallthru
          _
        // Predicated region
        $region89: #{decoder_forward.1} parent=15 // pred_check
          %p893 = pneg %p536
        $region90: #{decoder_forward.1} parent=15 // pred_check_branch
          %895 = sbr.rel (%p893) target = $region92
        $region91: #{decoder_forward.1} parent=15 // pred_region
          %p896 = scmp.lt.s32.totalorder %s44, 1
          %s897 = scalar_select %p896, %s44, 1
          %s898 = smul.addr %s897, 4
          %s899 = smul.addr %s898, 4
          %s900 = scalar_lea.vmem %s18, %s899
        $region92: #{decoder_forward.1} parent=15 // pred_fallthru
          _
        // Predicated region
        $region93: #{decoder_forward.1} parent=15 // pred_check
          %p901 = pneg %p562
        $region94: #{decoder_forward.1} parent=15 // pred_check_branch
          %903 = sbr.rel (%p901) target = $region96
        $region95: #{decoder_forward.1} parent=15 // pred_region
          %p904 = scmp.lt.s32.totalorder %s44, 1
          %s905 = scalar_select %p904, %s44, 1
          %s906 = scalar_lea.vmem %s19, %s905
        $region96: #{decoder_forward.1} parent=15 // pred_fallthru
          _
        // Predicated region
        $region97: #{decoder_forward.1} parent=15 // pred_check
          %p907 = pneg %p588
        $region98: #{decoder_forward.1} parent=15 // pred_check_branch
          %909 = sbr.rel (%p907) target = $region100
        $region99: #{decoder_forward.1} parent=15 // pred_region
          %p910 = scmp.lt.s32.totalorder %s44, 1
          %s911 = scalar_select %p910, %s44, 1
          %s912 = smul.addr %s911, 8
          %s913 = smul.addr %s912, 4
          %s914 = scalar_lea.vmem %s20, %s913
        $region100: #{decoder_forward.1} parent=15 // pred_fallthru
          _
        // Predicated region
        $region101: #{decoder_forward.1} parent=15 // pred_check
          %p915 = pneg %p614
        $region102: #{decoder_forward.1} parent=15 // pred_check_branch
          %917 = sbr.rel (%p915) target = $region104
        $region103: #{decoder_forward.1} parent=15 // pred_region
          %p918 = scmp.lt.s32.totalorder %s44, 1
          %s919 = scalar_select %p918, %s44, 1
          %s920 = scalar_lea.vmem %s21, %s919
        $region104: #{decoder_forward.1} parent=15 // pred_fallthru
          _
        // Predicated region
        $region105: #{decoder_forward.1} parent=15 // pred_check
          %p921 = pneg %p640
        $region106: #{decoder_forward.1} parent=15 // pred_check_branch
          %923 = sbr.rel (%p921) target = $region108
        $region107: #{decoder_forward.1} parent=15 // pred_region
          %p924 = scmp.lt.s32.totalorder %s44, 1
          %s925 = scalar_select %p924, %s44, 1
          %s926 = scalar_lea.vmem %s22, %s925
        $region108: #{decoder_forward.1} parent=15 // pred_fallthru
          _
        // Predicated region
        $region109: #{decoder_forward.1} parent=15 // pred_check
          %p927 = pneg %p666
        $region110: #{decoder_forward.1} parent=15 // pred_check_branch
          %929 = sbr.rel (%p927) target = $region112
        $region111: #{decoder_forward.1} parent=15 // pred_region
          %p930 = scmp.lt.s32.totalorder %s44, 1
          %s931 = scalar_select %p930, %s44, 1
          %s932 = scalar_lea.vmem %s23, %s931
        $region112: #{decoder_forward.1} parent=15 // pred_fallthru
          _
      $region16: #{decoder_forward.1} parent=5 // pred_fallthru
        _
      %p933 = scmp.le.s32.totalorder 1, %s36
      %p934 = scmp.lt.s32.totalorder %s36, 5
      %p935 = pnand %p933, %p934
      %p936 = pneg %p935
      // Predicated region
      $region113: #{decoder_forward.1} parent=5 // pred_check
        _
      $region114: #{decoder_forward.1} parent=5 // pred_check_branch
        %938 = sbr.rel (%p935) target = $region116
      $region115: #{decoder_forward.1} parent=5 // pred_region
        %s939 = ssub.s32 %s36, 1
        %p940 = scmp.lt.s32.totalorder %s45, 1
        %s941 = scalar_select %p940, %s45, 1
        %s942 = smul.addr %s941, 8
        %s943 = scalar_lea.vmem %s0, %s942
        %p944 = pneg %p74
        %p945 = pneg %p71
        %p946 = scmp.lt.s32.totalorder %s45, 1
        %s947 = scalar_select %p946, %s45, 1
        %s948 = smul.addr %s947, 8
        %s949 = scalar_lea.vmem %s1, %s948
        %p950 = pneg %p100
        %p951 = pneg %p97
        %p952 = scmp.lt.s32.totalorder %s45, 1
        %s953 = scalar_select %p952, %s45, 1
        %s954 = scalar_lea.vmem %s2, %s953
        %p955 = pneg %p126
        %p956 = pneg %p123
        %p957 = scmp.lt.s32.totalorder %s45, 1
        %s958 = scalar_select %p957, %s45, 1
        %s959 = scalar_lea.vmem %s3, %s958
        %p960 = pneg %p152
        %p961 = pneg %p149
        %p962 = scmp.lt.s32.totalorder %s46, 1
        %s963 = scalar_select %p962, %s46, 1
        %s964 = smul.addr %s963, 4
        %s965 = smul.addr %s964, 4
        %s966 = scalar_lea.vmem %s4, %s965
        %p967 = pneg %p178
        %p968 = pneg %p175
        %p969 = scmp.lt.s32.totalorder %s46, 1
        %s970 = scalar_select %p969, %s46, 1
        %s971 = scalar_lea.vmem %s5, %s970
        %p972 = pneg %p204
        %p973 = pneg %p201
        %p974 = scmp.lt.s32.totalorder %s46, 1
        %s975 = scalar_select %p974, %s46, 1
        %s976 = smul.addr %s975, 4
        %s977 = smul.addr %s976, 4
        %s978 = scalar_lea.vmem %s6, %s977
        %p979 = pneg %p230
        %p980 = pneg %p227
        %p981 = scmp.lt.s32.totalorder %s46, 1
        %s982 = scalar_select %p981, %s46, 1
        %s983 = scalar_lea.vmem %s7, %s982
        %p984 = pneg %p256
        %p985 = pneg %p253
        %p986 = scmp.lt.s32.totalorder %s46, 1
        %s987 = scalar_select %p986, %s46, 1
        %s988 = scalar_lea.vmem %s8, %s987
        %p989 = pneg %p282
        %p990 = pneg %p279
        %p991 = scmp.lt.s32.totalorder %s46, 1
        %s992 = scalar_select %p991, %s46, 1
        %s993 = scalar_lea.vmem %s9, %s992
        %p994 = pneg %p308
        %p995 = pneg %p305
        %p996 = scmp.lt.s32.totalorder %s46, 1
        %s997 = scalar_select %p996, %s46, 1
        %s998 = smul.addr %s997, 4
        %s999 = smul.addr %s998, 4
        %s1000 = scalar_lea.vmem %s10, %s999
        %p1001 = pneg %p334
        %p1002 = pneg %p331
        %p1003 = scmp.lt.s32.totalorder %s46, 1
        %s1004 = scalar_select %p1003, %s46, 1
        %s1005 = scalar_lea.vmem %s11, %s1004
        %p1006 = pneg %p360
        %p1007 = pneg %p357
        %p1008 = scmp.lt.s32.totalorder %s46, 1
        %s1009 = scalar_select %p1008, %s46, 1
        %s1010 = smul.addr %s1009, 4
        %s1011 = smul.addr %s1010, 4
        %s1012 = scalar_lea.vmem %s12, %s1011
        %p1013 = pneg %p386
        %p1014 = pneg %p383
        %p1015 = scmp.lt.s32.totalorder %s46, 1
        %s1016 = scalar_select %p1015, %s46, 1
        %s1017 = scalar_lea.vmem %s13, %s1016
        %p1018 = pneg %p412
        %p1019 = pneg %p409
        %p1020 = scmp.lt.s32.totalorder %s46, 1
        %s1021 = scalar_select %p1020, %s46, 1
        %s1022 = smul.addr %s1021, 4
        %s1023 = smul.addr %s1022, 4
        %s1024 = scalar_lea.vmem %s14, %s1023
        %p1025 = pneg %p438
        %p1026 = pneg %p435
        %p1027 = scmp.lt.s32.totalorder %s46, 1
        %s1028 = scalar_select %p1027, %s46, 1
        %s1029 = scalar_lea.vmem %s15, %s1028
        %p1030 = pneg %p464
        %p1031 = pneg %p461
        %p1032 = scmp.lt.s32.totalorder %s46, 1
        %s1033 = scalar_select %p1032, %s46, 1
        %s1034 = scalar_lea.vmem %s16, %s1033
        %p1035 = pneg %p490
        %p1036 = pneg %p487
        %p1037 = scmp.lt.s32.totalorder %s46, 1
        %s1038 = scalar_select %p1037, %s46, 1
        %s1039 = scalar_lea.vmem %s17, %s1038
        %p1040 = pneg %p516
        %p1041 = pneg %p513
        %p1042 = scmp.lt.s32.totalorder %s46, 1
        %s1043 = scalar_select %p1042, %s46, 1
        %s1044 = smul.addr %s1043, 4
        %s1045 = smul.addr %s1044, 4
        %s1046 = scalar_lea.vmem %s18, %s1045
        %p1047 = pneg %p542
        %p1048 = pneg %p539
        %p1049 = scmp.lt.s32.totalorder %s46, 1
        %s1050 = scalar_select %p1049, %s46, 1
        %s1051 = scalar_lea.vmem %s19, %s1050
        %p1052 = pneg %p568
        %p1053 = pneg %p565
        %p1054 = scmp.lt.s32.totalorder %s46, 1
        %s1055 = scalar_select %p1054, %s46, 1
        %s1056 = smul.addr %s1055, 8
        %s1057 = smul.addr %s1056, 4
        %s1058 = scalar_lea.vmem %s20, %s1057
        %p1059 = pneg %p594
        %p1060 = pneg %p591
        %p1061 = scmp.lt.s32.totalorder %s46, 1
        %s1062 = scalar_select %p1061, %s46, 1
        %s1063 = scalar_lea.vmem %s21, %s1062
        %p1064 = pneg %p620
        %p1065 = pneg %p617
        %p1066 = scmp.lt.s32.totalorder %s46, 1
        %s1067 = scalar_select %p1066, %s46, 1
        %s1068 = scalar_lea.vmem %s22, %s1067
        %p1069 = pneg %p646
        %p1070 = pneg %p643
        %p1071 = scmp.lt.s32.totalorder %s46, 1
        %s1072 = scalar_select %p1071, %s46, 1
        %s1073 = scalar_lea.vmem %s23, %s1072
        %p1074 = pneg %p672
        %p1075 = pneg %p669
        %p1076 = pneg %p698
        %p1077 = pneg %p695
        %s1078 = sand.u32 %s685, 1
        %s1079 = scalar_lea.sflag [#allocation4], %s1078
        %s1080 = sand.u32 %s685, 1
        %s1081 = smul.addr %s1080, 8
        %s1082 = scalar_lea.vmem [#allocation3], %s1081
        %p1083 = pneg %p726
        %p1084 = pneg %p723
        %p1085 = scmp.lt.s32.totalorder %s46, 1
        %s1086 = scalar_select %p1085, %s46, 1
        %p1087 = scmp.lt.s32.totalorder %s45, 1
        %s1088 = scalar_select %p1087, %s45, 1
        %s1089 = smul.addr %s1086, 2
        %s1090 = sadd.s32 %s1088, %s1089
        %s1091 = smul.addr %s1090, 8
        %s1092 = scalar_lea.vmem %s25, %s1091
        %p1093 = pneg %p754
        %p1094 = pneg %p751
        %p1095 = scmp.lt.s32.totalorder %s46, 1
        %s1096 = scalar_select %p1095, %s46, 1
        %p1097 = scmp.lt.s32.totalorder %s45, 1
        %s1098 = scalar_select %p1097, %s45, 1
        %s1099 = smul.addr %s1096, 2
        %s1100 = sadd.s32 %s1098, %s1099
        %s1101 = smul.addr %s1100, 8
        %s1102 = scalar_lea.vmem %s26, %s1101
        %p1103 = scmp.lt.s32.totalorder %s45, 1
        %s1104 = scalar_select %p1103, %s45, 1
        %s1105 = smul.addr %s1104, 8
        %s1106 = scalar_lea.vmem %s0, %s1105
        %p1107 = scmp.lt.s32.totalorder %s45, 1
        %s1108 = scalar_select %p1107, %s45, 1
        %s1109 = smul.addr %s1108, 8
        %s1110 = scalar_lea.vmem %s1, %s1109
        %p1111 = scmp.lt.s32.totalorder %s45, 1
        %s1112 = scalar_select %p1111, %s45, 1
        %s1113 = scalar_lea.vmem %s2, %s1112
        %p1114 = scmp.lt.s32.totalorder %s45, 1
        %s1115 = scalar_select %p1114, %s45, 1
        %s1116 = scalar_lea.vmem %s3, %s1115
        %p1117 = scmp.lt.s32.totalorder %s46, 1
        %s1118 = scalar_select %p1117, %s46, 1
        %s1119 = smul.addr %s1118, 4
        %s1120 = smul.addr %s1119, 4
        %s1121 = scalar_lea.vmem %s4, %s1120
        %p1122 = scmp.lt.s32.totalorder %s46, 1
        %s1123 = scalar_select %p1122, %s46, 1
        %s1124 = scalar_lea.vmem %s5, %s1123
        %p1125 = scmp.lt.s32.totalorder %s46, 1
        %s1126 = scalar_select %p1125, %s46, 1
        %s1127 = smul.addr %s1126, 4
        %s1128 = smul.addr %s1127, 4
        %s1129 = scalar_lea.vmem %s6, %s1128
        %p1130 = scmp.lt.s32.totalorder %s46, 1
        %s1131 = scalar_select %p1130, %s46, 1
        %s1132 = scalar_lea.vmem %s7, %s1131
        %p1133 = scmp.lt.s32.totalorder %s46, 1
        %s1134 = scalar_select %p1133, %s46, 1
        %s1135 = scalar_lea.vmem %s8, %s1134
        %p1136 = scmp.lt.s32.totalorder %s46, 1
        %s1137 = scalar_select %p1136, %s46, 1
        %s1138 = scalar_lea.vmem %s9, %s1137
        %p1139 = scmp.lt.s32.totalorder %s46, 1
        %s1140 = scalar_select %p1139, %s46, 1
        %s1141 = smul.addr %s1140, 4
        %s1142 = smul.addr %s1141, 4
        %s1143 = scalar_lea.vmem %s10, %s1142
        %p1144 = scmp.lt.s32.totalorder %s46, 1
        %s1145 = scalar_select %p1144, %s46, 1
        %s1146 = scalar_lea.vmem %s11, %s1145
        %p1147 = scmp.lt.s32.totalorder %s46, 1
        %s1148 = scalar_select %p1147, %s46, 1
        %s1149 = smul.addr %s1148, 4
        %s1150 = smul.addr %s1149, 4
        %s1151 = scalar_lea.vmem %s12, %s1150
        %p1152 = scmp.lt.s32.totalorder %s46, 1
        %s1153 = scalar_select %p1152, %s46, 1
        %s1154 = scalar_lea.vmem %s13, %s1153
        %p1155 = scmp.lt.s32.totalorder %s46, 1
        %s1156 = scalar_select %p1155, %s46, 1
        %s1157 = smul.addr %s1156, 4
        %s1158 = smul.addr %s1157, 4
        %s1159 = scalar_lea.vmem %s14, %s1158
        %p1160 = scmp.lt.s32.totalorder %s46, 1
        %s1161 = scalar_select %p1160, %s46, 1
        %s1162 = scalar_lea.vmem %s15, %s1161
        %p1163 = scmp.lt.s32.totalorder %s46, 1
        %s1164 = scalar_select %p1163, %s46, 1
        %s1165 = scalar_lea.vmem %s16, %s1164
        %p1166 = scmp.lt.s32.totalorder %s46, 1
        %s1167 = scalar_select %p1166, %s46, 1
        %s1168 = scalar_lea.vmem %s17, %s1167
        %p1169 = scmp.lt.s32.totalorder %s46, 1
        %s1170 = scalar_select %p1169, %s46, 1
        %s1171 = smul.addr %s1170, 4
        %s1172 = smul.addr %s1171, 4
        %s1173 = scalar_lea.vmem %s18, %s1172
        %p1174 = scmp.lt.s32.totalorder %s46, 1
        %s1175 = scalar_select %p1174, %s46, 1
        %s1176 = scalar_lea.vmem %s19, %s1175
        %p1177 = scmp.lt.s32.totalorder %s46, 1
        %s1178 = scalar_select %p1177, %s46, 1
        %s1179 = smul.addr %s1178, 8
        %s1180 = smul.addr %s1179, 4
        %s1181 = scalar_lea.vmem %s20, %s1180
        %p1182 = scmp.lt.s32.totalorder %s46, 1
        %s1183 = scalar_select %p1182, %s46, 1
        %s1184 = scalar_lea.vmem %s21, %s1183
        %p1185 = scmp.lt.s32.totalorder %s46, 1
        %s1186 = scalar_select %p1185, %s46, 1
        %s1187 = scalar_lea.vmem %s22, %s1186
        %p1188 = scmp.lt.s32.totalorder %s46, 1
        %s1189 = scalar_select %p1188, %s46, 1
        %s1190 = scalar_lea.vmem %s23, %s1189
        %p1191 = scmp.lt.s32.totalorder %s46, 1
        %s1192 = scalar_select %p1191, %s46, 1
        %p1193 = scmp.lt.s32.totalorder %s45, 1
        %s1194 = scalar_select %p1193, %s45, 1
        %s1195 = smul.addr %s1192, 2
        %s1196 = sadd.s32 %s1194, %s1195
        %s1197 = smul.addr %s1196, 8
        %s1198 = scalar_lea.vmem %s25, %s1197
        %p1199 = scmp.lt.s32.totalorder %s46, 1
        %s1200 = scalar_select %p1199, %s46, 1
        %p1201 = scmp.lt.s32.totalorder %s45, 1
        %s1202 = scalar_select %p1201, %s45, 1
        %s1203 = smul.addr %s1200, 2
        %s1204 = sadd.s32 %s1202, %s1203
        %s1205 = smul.addr %s1204, 8
        %s1206 = scalar_lea.vmem %s26, %s1205
        %p1208 = scmp.eq.s32.totalorder %s46, 0
        // Predicated region
        $region117: #{decoder_forward.1} parent=115 // pred_check
          %p1209 = pneg %p1208
        $region118: #{decoder_forward.1} parent=115 // pred_check_branch
          %1211 = sbr.rel (%p1209) target = $region120
        $region119: #{decoder_forward.1} parent=115 // pred_region
          %v1212 = vld [vmem:[%s1106] sm:$0xff]
          %vm1213 = vcmask 261120
          %1214 = vst.msk [vmem:[#allocation2] sm:$0xff] %vm1213, %v1212
        $region120: #{decoder_forward.1} parent=115 // pred_fallthru
          _
        %v1215 = vld [vmem:[#allocation2] sm:$0xff]
        %v1216 = vld [vmem:[%s1110] sm:$0xff]
        %v1217 = vlaneseq
        %v1218 = vshrl.u32 %v1217, 7
        %v1219 = vlaneseq
        %v1220 = vand.u32 %v1219, 127
        %vm1221 = vcmp.gt.s32.totalorder %v1220, %v1218
        %v1222 = vld [vmem:[%s1113] sm:$0x1]
        %vm1223 = vcmp.gt.f32.partialorder %v1222, 0.0
        %v1224 = vsel %vm1223, 1, 0
        %v1225 = vlaneseq
        %v1226 = vshrl.u32 %v1225, 7
        %v1227 = vsub.s32 0, %v1226
        %v1228 = vrot.slane %v1224, %v1227
        %vm1229 = vcmp.eq.s32.totalorder %v1228, 1
        %vm1230 = vmor %vm1221, %vm1229
        %v1231 = vld [vmem:[%s1116] sm:$0x1]
        %vm1232 = vcmp.gt.f32.partialorder %v1231, 0.0
        %v1233 = vpack.c.bf16 %v1215, %v1215
        %v1234 = vld [vmem:[%s1121] sm:$0xf]
        %v1235 = vld [vmem:[%s1121 + $0x4] sm:$0xf]
        %v1236 = vld [vmem:[%s1121 + $0x8] sm:$0xf]
        %v1237 = vld [vmem:[%s1121 + $0xc] sm:$0xf]
        %v1238 = vld [vmem:[%s1124] sm:$0x1]
        %v1240 = vlaneseq
        %v1241 = vshrl.u32 %v1240, 7
        %v1242 = vsub.s32 0, %v1241
        %v1243 = vrot.slane %v1238, %v1242
        %v1249 = vunpack.c.l.b16 %v1234
        %v1250 = vunpack.c.l.b16 %v1235
        %v1251 = vunpack.c.l.b16 %v1236
        %v1252 = vunpack.c.l.b16 %v1237
        %v1253 = vpack.c.b16 %v1250, %v1249
        %v1254 = vpack.c.b16 %v1252, %v1251
        %vm1257 = vcmask 261120
        %v1259 = vsel %vm1257, %v1233, 0
        %1261 = vmatprep.subr.bf16.mxu0 0
        %1262 = vmatpush1.bf16.msra.mxu0 %v1253
        %1263 = vmatprep.subr.bf16.mxu0 0
        %1264 = vmatpush1.bf16.msra.mxu0 %v1254
        %1265 = vmatprep.subr.bf16.mxu0 0
        %1266 = vmatpush1.bf16.msra.mxu0 0
        %1267 = vmatprep.subr.bf16.mxu0 0
        %1268 = vmatpush1.bf16.msra.mxu0 0
        %1269 = vmatprep.subr.bf16.mxu0 0
        %1270 = vmatpush1.bf16.msra.mxu0 0
        %1271 = vmatprep.subr.bf16.mxu0 0
        %1272 = vmatpush1.bf16.msra.mxu0 0
        %1273 = vmatprep.subr.bf16.mxu0 0
        %1274 = vmatpush1.bf16.msra.mxu0 0
        %1275 = vmatprep.subr.bf16.mxu0 0
        %1276 = vmatpush1.bf16.msra.mxu0 0
        %1277 = vmatprep.subr.bf16.mxu0 0
        %1278 = vmatpush1.bf16.msra.mxu0 0
        %1279 = vmatprep.subr.bf16.mxu0 0
        %1280 = vmatpush1.bf16.msra.mxu0 0
        %1281 = vmatprep.subr.bf16.mxu0 0
        %1282 = vmatpush1.bf16.msra.mxu0 0
        %1283 = vmatprep.subr.bf16.mxu0 0
        %1284 = vmatpush1.bf16.msra.mxu0 0
        %1285 = vmatprep.subr.bf16.mxu0 0
        %1286 = vmatpush1.bf16.msra.mxu0 0
        %1287 = vmatprep.subr.bf16.mxu0 0
        %1288 = vmatpush1.bf16.msra.mxu0 0
        %1289 = vmatprep.subr.bf16.mxu0 0
        %1290 = vmatpush1.bf16.msra.mxu0 0
        %1291 = vmatprep.subr.bf16.mxu0 0
        %1292 = vmatpush1.bf16.msra.mxu0 0
        %1293 = vmatprep.mubr.bf16.mxu0 0
        %1294 = vmatmul.mubr.bf16.gmra.mrb[0].mxu0 %v1259
        %v1295 = vpop.f32.mrb[0].mxu0
        %v1296 = vadd.f32 %v1243, %v1295
        %v1297 = vpop.f32.mrb[0].mxu0
        %v1298 = vpop.f32.mrb[0].mxu0
        %v1299 = vpop.f32.mrb[0].mxu0
        %1300 = vdwg.mxu0
        %v1301 = vpack.c.bf16 %v1296, %v1296
        %v1302 = vld [vmem:[%s1129] sm:$0xf]
        %v1303 = vld [vmem:[%s1129 + $0x4] sm:$0xf]
        %v1304 = vld [vmem:[%s1129 + $0x8] sm:$0xf]
        %v1305 = vld [vmem:[%s1129 + $0xc] sm:$0xf]
        %v1306 = vld [vmem:[%s1132] sm:$0x1]
        %1308 = vrot.lane.b32.xlu0 %v1301, 96
        %v1309 = vpop.permute.xlu0 %1308
        %vm1310 = vcmask 64512
        %v1312 = vsel %vm1310, %v1301, 0
        %v1315 = vsel %vm1310, %v1309, 0
        %1317 = vmatprep.subr.bf16.mxu0 0
        %1318 = vmatpush1.bf16.xpose.msra.mxu0 %v1315
        %1319 = vmatprep.subr.bf16.mxu0 0
        %1320 = vmatpush1.bf16.xpose.msra.mxu0 0
        %1321 = vmatprep.subr.bf16.mxu0 0
        %1322 = vmatpush1.bf16.xpose.msra.mxu0 0
        %1323 = vmatprep.subr.bf16.mxu0 0
        %1324 = vmatpush1.bf16.xpose.msra.mxu0 0
        %1325 = vmatprep.subr.bf16.mxu0 0
        %1326 = vmatpush1.bf16.xpose.msra.mxu0 0
        %1327 = vmatprep.subr.bf16.mxu0 0
        %1328 = vmatpush1.bf16.xpose.msra.mxu0 0
        %1329 = vmatprep.subr.bf16.mxu0 0
        %1330 = vmatpush1.bf16.xpose.msra.mxu0 0
        %1331 = vmatprep.subr.bf16.mxu0 0
        %1332 = vmatpush1.bf16.xpose.msra.mxu0 0
        %1333 = vmatprep.subr.bf16.mxu0 0
        %1334 = vmatpush1.bf16.xpose.msra.mxu0 0
        %1335 = vmatprep.subr.bf16.mxu0 0
        %1336 = vmatpush1.bf16.xpose.msra.mxu0 0
        %1337 = vmatprep.subr.bf16.mxu0 0
        %1338 = vmatpush1.bf16.xpose.msra.mxu0 0
        %1339 = vmatprep.subr.bf16.mxu0 0
        %1340 = vmatpush1.bf16.xpose.msra.mxu0 0
        %1341 = vmatprep.subr.bf16.mxu0 0
        %1342 = vmatpush1.bf16.xpose.msra.mxu0 0
        %1343 = vmatprep.subr.bf16.mxu0 0
        %1344 = vmatpush1.bf16.xpose.msra.mxu0 0
        %1345 = vmatprep.subr.bf16.mxu0 0
        %1346 = vmatpush1.bf16.xpose.msra.mxu0 0
        %1347 = vmatprep.subr.bf16.mxu0 0
        %1348 = vmatpush1.bf16.xpose.msra.mxu0 0
        %1349 = vmatprep.mubr.bf16.mxu0 0
        %1350 = vmatmul.mubr.bf16.gmra.mrb[0].mxu0 %v1312
        %v1351 = vpop.f32.mrb[0].mxu0
        %v1352 = vadd.f32 0.0, %v1351
        %v1353 = vpop.f32.mrb[0].mxu0
        %v1354 = vpop.f32.mrb[0].mxu0
        %v1355 = vpop.f32.mrb[0].mxu0
        %1356 = vdwg.mxu0
        %v1357 = vmul.f32 %v1352, 0.35355338
        %v1358 = vsel %vm1230, -1e+09, %v1357
        %v1359 = vsel %vm1310, %v1358, -inf
        %1360 = vmax.xlane.f32.xlu0 %v1359
        %v1361 = vpop.xlane.xlu0 %1360
        %v1362 = vsub.f32 %v1358, %v1361
        %v1363 = vmul.f32 %v1362, 1.442695
        %v1364 = vpow.pop %v1363
        %v1365 = vsel %vm1310, %v1364, 0.0
        %1366 = vadd.xlane.f32.xlu0 %v1365
        %v1367 = vpop.xlane.xlu0 %1366
        %v1368 = vrcp.pop %v1367
        %v1369 = vmul.f32 %v1364, %v1368
        %v1370 = vpack.c.bf16 %v1369, %v1369
        %1371 = vrot.lane.b32.xlu0 %v1301, 64
        %v1372 = vpop.permute.xlu0 %1371
        %v1374 = vsel %vm1310, %v1370, 0
        %vm1376 = vcmask 1043456
        %v1378 = vsel %vm1376, %v1372, 0
        %1380 = vmatprep.subr.bf16.mxu0 0
        %1381 = vmatpush1.bf16.msra.mxu0 %v1378
        %1382 = vmatprep.subr.bf16.mxu0 0
        %1383 = vmatpush1.bf16.msra.mxu0 0
        %1384 = vmatprep.subr.bf16.mxu0 0
        %1385 = vmatpush1.bf16.msra.mxu0 0
        %1386 = vmatprep.subr.bf16.mxu0 0
        %1387 = vmatpush1.bf16.msra.mxu0 0
        %1388 = vmatprep.subr.bf16.mxu0 0
        %1389 = vmatpush1.bf16.msra.mxu0 0
        %1390 = vmatprep.subr.bf16.mxu0 0
        %1391 = vmatpush1.bf16.msra.mxu0 0
        %1392 = vmatprep.subr.bf16.mxu0 0
        %1393 = vmatpush1.bf16.msra.mxu0 0
        %1394 = vmatprep.subr.bf16.mxu0 0
        %1395 = vmatpush1.bf16.msra.mxu0 0
        %1396 = vmatprep.subr.bf16.mxu0 0
        %1397 = vmatpush1.bf16.msra.mxu0 0
        %1398 = vmatprep.subr.bf16.mxu0 0
        %1399 = vmatpush1.bf16.msra.mxu0 0
        %1400 = vmatprep.subr.bf16.mxu0 0
        %1401 = vmatpush1.bf16.msra.mxu0 0
        %1402 = vmatprep.subr.bf16.mxu0 0
        %1403 = vmatpush1.bf16.msra.mxu0 0
        %1404 = vmatprep.subr.bf16.mxu0 0
        %1405 = vmatpush1.bf16.msra.mxu0 0
        %1406 = vmatprep.subr.bf16.mxu0 0
        %1407 = vmatpush1.bf16.msra.mxu0 0
        %1408 = vmatprep.subr.bf16.mxu0 0
        %1409 = vmatpush1.bf16.msra.mxu0 0
        %1410 = vmatprep.subr.bf16.mxu0 0
        %1411 = vmatpush1.bf16.msra.mxu0 0
        %1412 = vmatprep.mubr.bf16.mxu0 0
        %1413 = vmatmul.mubr.bf16.gmra.mrb[0].mxu0 %v1374
        %v1414 = vpop.f32.mrb[0].mxu0
        %v1415 = vadd.f32 0.0, %v1414
        %v1416 = vpop.f32.mrb[0].mxu0
        %v1417 = vpop.f32.mrb[0].mxu0
        %v1418 = vpop.f32.mrb[0].mxu0
        %1419 = vdwg.mxu0
        %1420 = vrot.lane.b32.xlu0 %v1301, 120
        %v1421 = vpop.permute.xlu0 %1420
        %1422 = vrot.lane.b32.xlu0 %v1301, 88
        %v1423 = vpop.permute.xlu0 %1422
        %v1425 = vsel %vm1310, %v1421, 0
        %v1428 = vsel %vm1310, %v1423, 0
        %1430 = vmatprep.subr.bf16.mxu0 0
        %1431 = vmatpush1.bf16.xpose.msra.mxu0 %v1428
        %1432 = vmatprep.subr.bf16.mxu0 0
        %1433 = vmatpush1.bf16.xpose.msra.mxu0 0
        %1434 = vmatprep.subr.bf16.mxu0 0
        %1435 = vmatpush1.bf16.xpose.msra.mxu0 0
        %1436 = vmatprep.subr.bf16.mxu0 0
        %1437 = vmatpush1.bf16.xpose.msra.mxu0 0
        %1438 = vmatprep.subr.bf16.mxu0 0
        %1439 = vmatpush1.bf16.xpose.msra.mxu0 0
        %1440 = vmatprep.subr.bf16.mxu0 0
        %1441 = vmatpush1.bf16.xpose.msra.mxu0 0
        %1442 = vmatprep.subr.bf16.mxu0 0
        %1443 = vmatpush1.bf16.xpose.msra.mxu0 0
        %1444 = vmatprep.subr.bf16.mxu0 0
        %1445 = vmatpush1.bf16.xpose.msra.mxu0 0
        %1446 = vmatprep.subr.bf16.mxu0 0
        %1447 = vmatpush1.bf16.xpose.msra.mxu0 0
        %1448 = vmatprep.subr.bf16.mxu0 0
        %1449 = vmatpush1.bf16.xpose.msra.mxu0 0
        %1450 = vmatprep.subr.bf16.mxu0 0
        %1451 = vmatpush1.bf16.xpose.msra.mxu0 0
        %1452 = vmatprep.subr.bf16.mxu0 0
        %1453 = vmatpush1.bf16.xpose.msra.mxu0 0
        %1454 = vmatprep.subr.bf16.mxu0 0
        %1455 = vmatpush1.bf16.xpose.msra.mxu0 0
        %1456 = vmatprep.subr.bf16.mxu0 0
        %1457 = vmatpush1.bf16.xpose.msra.mxu0 0
        %1458 = vmatprep.subr.bf16.mxu0 0
        %1459 = vmatpush1.bf16.xpose.msra.mxu0 0
        %1460 = vmatprep.subr.bf16.mxu0 0
        %1461 = vmatpush1.bf16.xpose.msra.mxu0 0
        %1462 = vmatprep.mubr.bf16.mxu0 0
        %1463 = vmatmul.mubr.bf16.gmra.mrb[0].mxu0 %v1425
        %v1464 = vpop.f32.mrb[0].mxu0
        %v1465 = vadd.f32 0.0, %v1464
        %v1466 = vpop.f32.mrb[0].mxu0
        %v1467 = vpop.f32.mrb[0].mxu0
        %v1468 = vpop.f32.mrb[0].mxu0
        %1469 = vdwg.mxu0
        %v1470 = vmul.f32 %v1465, 0.35355338
        %v1471 = vsel %vm1230, -1e+09, %v1470
        %v1472 = vsel %vm1310, %v1471, -inf
        %1473 = vmax.xlane.f32.xlu0 %v1472
        %v1474 = vpop.xlane.xlu0 %1473
        %v1475 = vsub.f32 %v1471, %v1474
        %v1476 = vmul.f32 %v1475, 1.442695
        %v1477 = vpow.pop %v1476
        %v1478 = vsel %vm1310, %v1477, 0.0
        %1479 = vadd.xlane.f32.xlu0 %v1478
        %v1480 = vpop.xlane.xlu0 %1479
        %v1481 = vrcp.pop %v1480
        %v1482 = vmul.f32 %v1477, %v1481
        %v1483 = vpack.c.bf16 %v1482, %v1482
        %1484 = vrot.lane.b32.xlu0 %v1301, 56
        %v1485 = vpop.permute.xlu0 %1484
        %v1487 = vsel %vm1310, %v1483, 0
        %v1490 = vsel %vm1376, %v1485, 0
        %1492 = vmatprep.subr.bf16.mxu0 0
        %1493 = vmatpush1.bf16.msra.mxu0 %v1490
        %1494 = vmatprep.subr.bf16.mxu0 0
        %1495 = vmatpush1.bf16.msra.mxu0 0
        %1496 = vmatprep.subr.bf16.mxu0 0
        %1497 = vmatpush1.bf16.msra.mxu0 0
        %1498 = vmatprep.subr.bf16.mxu0 0
        %1499 = vmatpush1.bf16.msra.mxu0 0
        %1500 = vmatprep.subr.bf16.mxu0 0
        %1501 = vmatpush1.bf16.msra.mxu0 0
        %1502 = vmatprep.subr.bf16.mxu0 0
        %1503 = vmatpush1.bf16.msra.mxu0 0
        %1504 = vmatprep.subr.bf16.mxu0 0
        %1505 = vmatpush1.bf16.msra.mxu0 0
        %1506 = vmatprep.subr.bf16.mxu0 0
        %1507 = vmatpush1.bf16.msra.mxu0 0
        %1508 = vmatprep.subr.bf16.mxu0 0
        %1509 = vmatpush1.bf16.msra.mxu0 0
        %1510 = vmatprep.subr.bf16.mxu0 0
        %1511 = vmatpush1.bf16.msra.mxu0 0
        %1512 = vmatprep.subr.bf16.mxu0 0
        %1513 = vmatpush1.bf16.msra.mxu0 0
        %1514 = vmatprep.subr.bf16.mxu0 0
        %1515 = vmatpush1.bf16.msra.mxu0 0
        %1516 = vmatprep.subr.bf16.mxu0 0
        %1517 = vmatpush1.bf16.msra.mxu0 0
        %1518 = vmatprep.subr.bf16.mxu0 0
        %1519 = vmatpush1.bf16.msra.mxu0 0
        %1520 = vmatprep.subr.bf16.mxu0 0
        %1521 = vmatpush1.bf16.msra.mxu0 0
        %1522 = vmatprep.subr.bf16.mxu0 0
        %1523 = vmatpush1.bf16.msra.mxu0 0
        %1524 = vmatprep.mubr.bf16.mxu0 0
        %1525 = vmatmul.mubr.bf16.gmra.mrb[0].mxu0 %v1487
        %v1526 = vpop.f32.mrb[0].mxu0
        %v1527 = vadd.f32 0.0, %v1526
        %v1528 = vpop.f32.mrb[0].mxu0
        %v1529 = vpop.f32.mrb[0].mxu0
        %v1530 = vpop.f32.mrb[0].mxu0
        %1531 = vdwg.mxu0
        %1532 = vrot.lane.b32.xlu0 %v1301, 112
        %v1533 = vpop.permute.xlu0 %1532
        %1534 = vrot.lane.b32.xlu0 %v1301, 80
        %v1535 = vpop.permute.xlu0 %1534
        %v1537 = vsel %vm1310, %v1533, 0
        %v1540 = vsel %vm1310, %v1535, 0
        %1542 = vmatprep.subr.bf16.mxu0 0
        %1543 = vmatpush1.bf16.xpose.msra.mxu0 %v1540
        %1544 = vmatprep.subr.bf16.mxu0 0
        %1545 = vmatpush1.bf16.xpose.msra.mxu0 0
        %1546 = vmatprep.subr.bf16.mxu0 0
        %1547 = vmatpush1.bf16.xpose.msra.mxu0 0
        %1548 = vmatprep.subr.bf16.mxu0 0
        %1549 = vmatpush1.bf16.xpose.msra.mxu0 0
        %1550 = vmatprep.subr.bf16.mxu0 0
        %1551 = vmatpush1.bf16.xpose.msra.mxu0 0
        %1552 = vmatprep.subr.bf16.mxu0 0
        %1553 = vmatpush1.bf16.xpose.msra.mxu0 0
        %1554 = vmatprep.subr.bf16.mxu0 0
        %1555 = vmatpush1.bf16.xpose.msra.mxu0 0
        %1556 = vmatprep.subr.bf16.mxu0 0
        %1557 = vmatpush1.bf16.xpose.msra.mxu0 0
        %1558 = vmatprep.subr.bf16.mxu0 0
        %1559 = vmatpush1.bf16.xpose.msra.mxu0 0
        %1560 = vmatprep.subr.bf16.mxu0 0
        %1561 = vmatpush1.bf16.xpose.msra.mxu0 0
        %1562 = vmatprep.subr.bf16.mxu0 0
        %1563 = vmatpush1.bf16.xpose.msra.mxu0 0
        %1564 = vmatprep.subr.bf16.mxu0 0
        %1565 = vmatpush1.bf16.xpose.msra.mxu0 0
        %1566 = vmatprep.subr.bf16.mxu0 0
        %1567 = vmatpush1.bf16.xpose.msra.mxu0 0
        %1568 = vmatprep.subr.bf16.mxu0 0
        %1569 = vmatpush1.bf16.xpose.msra.mxu0 0
        %1570 = vmatprep.subr.bf16.mxu0 0
        %1571 = vmatpush1.bf16.xpose.msra.mxu0 0
        %1572 = vmatprep.subr.bf16.mxu0 0
        %1573 = vmatpush1.bf16.xpose.msra.mxu0 0
        %1574 = vmatprep.mubr.bf16.mxu0 0
        %1575 = vmatmul.mubr.bf16.gmra.mrb[0].mxu0 %v1537
        %v1576 = vpop.f32.mrb[0].mxu0
        %v1577 = vadd.f32 0.0, %v1576
        %v1578 = vpop.f32.mrb[0].mxu0
        %v1579 = vpop.f32.mrb[0].mxu0
        %v1580 = vpop.f32.mrb[0].mxu0
        %1581 = vdwg.mxu0
        %v1582 = vmul.f32 %v1577, 0.35355338
        %v1583 = vsel %vm1230, -1e+09, %v1582
        %v1584 = vsel %vm1310, %v1583, -inf
        %1585 = vmax.xlane.f32.xlu0 %v1584
        %v1586 = vpop.xlane.xlu0 %1585
        %v1587 = vsub.f32 %v1583, %v1586
        %v1588 = vmul.f32 %v1587, 1.442695
        %v1589 = vpow.pop %v1588
        %v1590 = vsel %vm1310, %v1589, 0.0
        %1591 = vadd.xlane.f32.xlu0 %v1590
        %v1592 = vpop.xlane.xlu0 %1591
        %v1593 = vrcp.pop %v1592
        %v1594 = vmul.f32 %v1589, %v1593
        %v1595 = vpack.c.bf16 %v1594, %v1594
        %1596 = vrot.lane.b32.xlu0 %v1301, 48
        %v1597 = vpop.permute.xlu0 %1596
        %v1599 = vsel %vm1310, %v1595, 0
        %v1602 = vsel %vm1376, %v1597, 0
        %1604 = vmatprep.subr.bf16.mxu0 0
        %1605 = vmatpush1.bf16.msra.mxu0 %v1602
        %1606 = vmatprep.subr.bf16.mxu0 0
        %1607 = vmatpush1.bf16.msra.mxu0 0
        %1608 = vmatprep.subr.bf16.mxu0 0
        %1609 = vmatpush1.bf16.msra.mxu0 0
        %1610 = vmatprep.subr.bf16.mxu0 0
        %1611 = vmatpush1.bf16.msra.mxu0 0
        %1612 = vmatprep.subr.bf16.mxu0 0
        %1613 = vmatpush1.bf16.msra.mxu0 0
        %1614 = vmatprep.subr.bf16.mxu0 0
        %1615 = vmatpush1.bf16.msra.mxu0 0
        %1616 = vmatprep.subr.bf16.mxu0 0
        %1617 = vmatpush1.bf16.msra.mxu0 0
        %1618 = vmatprep.subr.bf16.mxu0 0
        %1619 = vmatpush1.bf16.msra.mxu0 0
        %1620 = vmatprep.subr.bf16.mxu0 0
        %1621 = vmatpush1.bf16.msra.mxu0 0
        %1622 = vmatprep.subr.bf16.mxu0 0
        %1623 = vmatpush1.bf16.msra.mxu0 0
        %1624 = vmatprep.subr.bf16.mxu0 0
        %1625 = vmatpush1.bf16.msra.mxu0 0
        %1626 = vmatprep.subr.bf16.mxu0 0
        %1627 = vmatpush1.bf16.msra.mxu0 0
        %1628 = vmatprep.subr.bf16.mxu0 0
        %1629 = vmatpush1.bf16.msra.mxu0 0
        %1630 = vmatprep.subr.bf16.mxu0 0
        %1631 = vmatpush1.bf16.msra.mxu0 0
        %1632 = vmatprep.subr.bf16.mxu0 0
        %1633 = vmatpush1.bf16.msra.mxu0 0
        %1634 = vmatprep.subr.bf16.mxu0 0
        %1635 = vmatpush1.bf16.msra.mxu0 0
        %1636 = vmatprep.mubr.bf16.mxu0 0
        %1637 = vmatmul.mubr.bf16.gmra.mrb[0].mxu0 %v1599
        %v1638 = vpop.f32.mrb[0].mxu0
        %v1639 = vadd.f32 0.0, %v1638
        %v1640 = vpop.f32.mrb[0].mxu0
        %v1641 = vpop.f32.mrb[0].mxu0
        %v1642 = vpop.f32.mrb[0].mxu0
        %1643 = vdwg.mxu0
        %1644 = vrot.lane.b32.xlu0 %v1301, 104
        %v1645 = vpop.permute.xlu0 %1644
        %1646 = vrot.lane.b32.xlu0 %v1301, 72
        %v1647 = vpop.permute.xlu0 %1646
        %v1649 = vsel %vm1310, %v1645, 0
        %v1652 = vsel %vm1310, %v1647, 0
        %1654 = vmatprep.subr.bf16.mxu0 0
        %1655 = vmatpush1.bf16.xpose.msra.mxu0 %v1652
        %1656 = vmatprep.subr.bf16.mxu0 0
        %1657 = vmatpush1.bf16.xpose.msra.mxu0 0
        %1658 = vmatprep.subr.bf16.mxu0 0
        %1659 = vmatpush1.bf16.xpose.msra.mxu0 0
        %1660 = vmatprep.subr.bf16.mxu0 0
        %1661 = vmatpush1.bf16.xpose.msra.mxu0 0
        %1662 = vmatprep.subr.bf16.mxu0 0
        %1663 = vmatpush1.bf16.xpose.msra.mxu0 0
        %1664 = vmatprep.subr.bf16.mxu0 0
        %1665 = vmatpush1.bf16.xpose.msra.mxu0 0
        %1666 = vmatprep.subr.bf16.mxu0 0
        %1667 = vmatpush1.bf16.xpose.msra.mxu0 0
        %1668 = vmatprep.subr.bf16.mxu0 0
        %1669 = vmatpush1.bf16.xpose.msra.mxu0 0
        %1670 = vmatprep.subr.bf16.mxu0 0
        %1671 = vmatpush1.bf16.xpose.msra.mxu0 0
        %1672 = vmatprep.subr.bf16.mxu0 0
        %1673 = vmatpush1.bf16.xpose.msra.mxu0 0
        %1674 = vmatprep.subr.bf16.mxu0 0
        %1675 = vmatpush1.bf16.xpose.msra.mxu0 0
        %1676 = vmatprep.subr.bf16.mxu0 0
        %1677 = vmatpush1.bf16.xpose.msra.mxu0 0
        %1678 = vmatprep.subr.bf16.mxu0 0
        %1679 = vmatpush1.bf16.xpose.msra.mxu0 0
        %1680 = vmatprep.subr.bf16.mxu0 0
        %1681 = vmatpush1.bf16.xpose.msra.mxu0 0
        %1682 = vmatprep.subr.bf16.mxu0 0
        %1683 = vmatpush1.bf16.xpose.msra.mxu0 0
        %1684 = vmatprep.subr.bf16.mxu0 0
        %1685 = vmatpush1.bf16.xpose.msra.mxu0 0
        %1686 = vmatprep.mubr.bf16.mxu0 0
        %1687 = vmatmul.mubr.bf16.gmra.mrb[0].mxu0 %v1649
        %v1688 = vpop.f32.mrb[0].mxu0
        %v1689 = vadd.f32 0.0, %v1688
        %v1690 = vpop.f32.mrb[0].mxu0
        %v1691 = vpop.f32.mrb[0].mxu0
        %v1692 = vpop.f32.mrb[0].mxu0
        %1693 = vdwg.mxu0
        %v1694 = vmul.f32 %v1689, 0.35355338
        %v1695 = vsel %vm1230, -1e+09, %v1694
        %v1696 = vsel %vm1310, %v1695, -inf
        %1697 = vmax.xlane.f32.xlu0 %v1696
        %v1698 = vpop.xlane.xlu0 %1697
        %v1699 = vsub.f32 %v1695, %v1698
        %v1700 = vmul.f32 %v1699, 1.442695
        %v1701 = vpow.pop %v1700
        %v1702 = vsel %vm1310, %v1701, 0.0
        %1703 = vadd.xlane.f32.xlu0 %v1702
        %v1704 = vpop.xlane.xlu0 %1703
        %v1705 = vrcp.pop %v1704
        %v1706 = vmul.f32 %v1701, %v1705
        %v1707 = vpack.c.bf16 %v1706, %v1706
        %1708 = vrot.lane.b32.xlu0 %v1301, 40
        %v1709 = vpop.permute.xlu0 %1708
        %v1711 = vsel %vm1310, %v1707, 0
        %v1714 = vsel %vm1376, %v1709, 0
        %1716 = vmatprep.subr.bf16.mxu0 0
        %1717 = vmatpush1.bf16.msra.mxu0 %v1714
        %1718 = vmatprep.subr.bf16.mxu0 0
        %1719 = vmatpush1.bf16.msra.mxu0 0
        %1720 = vmatprep.subr.bf16.mxu0 0
        %1721 = vmatpush1.bf16.msra.mxu0 0
        %1722 = vmatprep.subr.bf16.mxu0 0
        %1723 = vmatpush1.bf16.msra.mxu0 0
        %1724 = vmatprep.subr.bf16.mxu0 0
        %1725 = vmatpush1.bf16.msra.mxu0 0
        %1726 = vmatprep.subr.bf16.mxu0 0
        %1727 = vmatpush1.bf16.msra.mxu0 0
        %1728 = vmatprep.subr.bf16.mxu0 0
        %1729 = vmatpush1.bf16.msra.mxu0 0
        %1730 = vmatprep.subr.bf16.mxu0 0
        %1731 = vmatpush1.bf16.msra.mxu0 0
        %1732 = vmatprep.subr.bf16.mxu0 0
        %1733 = vmatpush1.bf16.msra.mxu0 0
        %1734 = vmatprep.subr.bf16.mxu0 0
        %1735 = vmatpush1.bf16.msra.mxu0 0
        %1736 = vmatprep.subr.bf16.mxu0 0
        %1737 = vmatpush1.bf16.msra.mxu0 0
        %1738 = vmatprep.subr.bf16.mxu0 0
        %1739 = vmatpush1.bf16.msra.mxu0 0
        %1740 = vmatprep.subr.bf16.mxu0 0
        %1741 = vmatpush1.bf16.msra.mxu0 0
        %1742 = vmatprep.subr.bf16.mxu0 0
        %1743 = vmatpush1.bf16.msra.mxu0 0
        %1744 = vmatprep.subr.bf16.mxu0 0
        %1745 = vmatpush1.bf16.msra.mxu0 0
        %1746 = vmatprep.subr.bf16.mxu0 0
        %1747 = vmatpush1.bf16.msra.mxu0 0
        %1748 = vmatprep.mubr.bf16.mxu0 0
        %1749 = vmatmul.mubr.bf16.gmra.mrb[0].mxu0 %v1711
        %v1750 = vpop.f32.mrb[0].mxu0
        %v1751 = vadd.f32 0.0, %v1750
        %v1752 = vpop.f32.mrb[0].mxu0
        %v1753 = vpop.f32.mrb[0].mxu0
        %v1754 = vpop.f32.mrb[0].mxu0
        %1755 = vdwg.mxu0
        %1757 = vrot.lane.b32.xlu0 %v1482, 8
        %v1758 = vpop.permute.xlu0 %1757
        %1761 = vrot.lane.b32.xlu0 %v1594, 16
        %v1762 = vpop.permute.xlu0 %1761
        %1765 = vrot.lane.b32.xlu0 %v1706, 24
        %v1766 = vpop.permute.xlu0 %1765
        %v1768 = vsel %vm1310, %v1369, %v1758
        %vm1769 = vcmask 130048
        %v1770 = vsel %vm1769, %v1768, %v1762
        %vm1771 = vcmask 195584
        %v1772 = vsel %vm1771, %v1770, %v1766
        %1773 = vst.msk [vmem:[%s1198] sm:$0xff] %vm1257, %v1772
        %1775 = vrot.lane.b32.xlu0 %v1527, 8
        %v1776 = vpop.permute.xlu0 %1775
        %1779 = vrot.lane.b32.xlu0 %v1639, 16
        %v1780 = vpop.permute.xlu0 %1779
        %1783 = vrot.lane.b32.xlu0 %v1751, 24
        %v1784 = vpop.permute.xlu0 %1783
        %v1786 = vsel %vm1310, %v1415, %v1776
        %v1787 = vsel %vm1769, %v1786, %v1780
        %v1788 = vsel %vm1771, %v1787, %v1784
        %v1789 = vpack.c.bf16 %v1788, %v1788
        %v1791 = vlaneseq
        %v1792 = vshrl.u32 %v1791, 7
        %v1793 = vsub.s32 0, %v1792
        %v1794 = vrot.slane %v1306, %v1793
        %v1800 = vunpack.c.l.b16 %v1302
        %v1801 = vunpack.c.l.b16 %v1303
        %v1802 = vunpack.c.l.b16 %v1304
        %v1803 = vunpack.c.l.b16 %v1305
        %v1804 = vpack.c.b16 %v1801, %v1800
        %v1805 = vpack.c.b16 %v1803, %v1802
        %v1809 = vsel %vm1257, %v1789, 0
        %1811 = vmatprep.subr.bf16.mxu0 0
        %1812 = vmatpush1.bf16.msra.mxu0 %v1804
        %1813 = vmatprep.subr.bf16.mxu0 0
        %1814 = vmatpush1.bf16.msra.mxu0 %v1805
        %1815 = vmatprep.subr.bf16.mxu0 0
        %1816 = vmatpush1.bf16.msra.mxu0 0
        %1817 = vmatprep.subr.bf16.mxu0 0
        %1818 = vmatpush1.bf16.msra.mxu0 0
        %1819 = vmatprep.subr.bf16.mxu0 0
        %1820 = vmatpush1.bf16.msra.mxu0 0
        %1821 = vmatprep.subr.bf16.mxu0 0
        %1822 = vmatpush1.bf16.msra.mxu0 0
        %1823 = vmatprep.subr.bf16.mxu0 0
        %1824 = vmatpush1.bf16.msra.mxu0 0
        %1825 = vmatprep.subr.bf16.mxu0 0
        %1826 = vmatpush1.bf16.msra.mxu0 0
        %1827 = vmatprep.subr.bf16.mxu0 0
        %1828 = vmatpush1.bf16.msra.mxu0 0
        %1829 = vmatprep.subr.bf16.mxu0 0
        %1830 = vmatpush1.bf16.msra.mxu0 0
        %1831 = vmatprep.subr.bf16.mxu0 0
        %1832 = vmatpush1.bf16.msra.mxu0 0
        %1833 = vmatprep.subr.bf16.mxu0 0
        %1834 = vmatpush1.bf16.msra.mxu0 0
        %1835 = vmatprep.subr.bf16.mxu0 0
        %1836 = vmatpush1.bf16.msra.mxu0 0
        %1837 = vmatprep.subr.bf16.mxu0 0
        %1838 = vmatpush1.bf16.msra.mxu0 0
        %1839 = vmatprep.subr.bf16.mxu0 0
        %1840 = vmatpush1.bf16.msra.mxu0 0
        %1841 = vmatprep.subr.bf16.mxu0 0
        %1842 = vmatpush1.bf16.msra.mxu0 0
        %1843 = vmatprep.mubr.bf16.mxu0 0
        %1844 = vmatmul.mubr.bf16.gmra.mrb[0].mxu0 %v1809
        %v1845 = vpop.f32.mrb[0].mxu0
        %v1846 = vadd.f32 %v1794, %v1845
        %v1847 = vpop.f32.mrb[0].mxu0
        %v1848 = vpop.f32.mrb[0].mxu0
        %v1849 = vpop.f32.mrb[0].mxu0
        %1850 = vdwg.mxu0
        %v1851 = vadd.f32 %v1215, %v1846
        %v1852 = vld [vmem:[%s1135] sm:$0x1]
        %v1853 = vld [vmem:[%s1138] sm:$0x1]
        %v1854 = vsel %vm1257, %v1851, 0.0
        %1855 = vadd.xlane.f32.xlu0 %v1854
        %v1856 = vpop.xlane.xlu0 %1855
        %v1857 = vrcp.pop 32.0
        %v1858 = vmul.f32 %v1856, %v1857
        %v1859 = vsub.f32 %v1851, %v1858
        %v1860 = vmul.f32 %v1859, %v1859
        %v1861 = vsel %vm1257, %v1860, 0.0
        %1862 = vadd.xlane.f32.xlu0 %v1861
        %v1863 = vpop.xlane.xlu0 %1862
        %v1864 = vmul.f32 %v1863, %v1857
        %v1865 = vadd.f32 %v1864, 1e-05
        %v1866 = vrsqrt.pop %v1865
        %v1867 = vmul.f32 %v1859, %v1866
        %v1869 = vlaneseq
        %v1870 = vshrl.u32 %v1869, 7
        %v1871 = vsub.s32 0, %v1870
        %v1872 = vrot.slane %v1852, %v1871
        %v1874 = vmul.f32 %v1867, %v1872
        %v1876 = vlaneseq
        %v1877 = vshrl.u32 %v1876, 7
        %v1878 = vsub.s32 0, %v1877
        %v1879 = vrot.slane %v1853, %v1878
        %v1881 = vadd.f32 %v1874, %v1879
        %v1882 = vpack.c.bf16 %v1881, %v1881
        %v1883 = vld [vmem:[%s1143] sm:$0xf]
        %v1884 = vld [vmem:[%s1143 + $0x4] sm:$0xf]
        %v1885 = vld [vmem:[%s1143 + $0x8] sm:$0xf]
        %v1886 = vld [vmem:[%s1143 + $0xc] sm:$0xf]
        %v1887 = vld [vmem:[%s1146] sm:$0x1]
        %v1889 = vlaneseq
        %v1890 = vshrl.u32 %v1889, 7
        %v1891 = vsub.s32 0, %v1890
        %v1892 = vrot.slane %v1887, %v1891
        %v1898 = vunpack.c.l.b16 %v1883
        %v1899 = vunpack.c.l.b16 %v1884
        %v1900 = vunpack.c.l.b16 %v1885
        %v1901 = vunpack.c.l.b16 %v1886
        %v1902 = vpack.c.b16 %v1899, %v1898
        %v1903 = vpack.c.b16 %v1901, %v1900
        %v1907 = vsel %vm1257, %v1882, 0
        %1909 = vmatprep.subr.bf16.mxu0 0
        %1910 = vmatpush1.bf16.msra.mxu0 %v1902
        %1911 = vmatprep.subr.bf16.mxu0 0
        %1912 = vmatpush1.bf16.msra.mxu0 %v1903
        %1913 = vmatprep.subr.bf16.mxu0 0
        %1914 = vmatpush1.bf16.msra.mxu0 0
        %1915 = vmatprep.subr.bf16.mxu0 0
        %1916 = vmatpush1.bf16.msra.mxu0 0
        %1917 = vmatprep.subr.bf16.mxu0 0
        %1918 = vmatpush1.bf16.msra.mxu0 0
        %1919 = vmatprep.subr.bf16.mxu0 0
        %1920 = vmatpush1.bf16.msra.mxu0 0
        %1921 = vmatprep.subr.bf16.mxu0 0
        %1922 = vmatpush1.bf16.msra.mxu0 0
        %1923 = vmatprep.subr.bf16.mxu0 0
        %1924 = vmatpush1.bf16.msra.mxu0 0
        %1925 = vmatprep.subr.bf16.mxu0 0
        %1926 = vmatpush1.bf16.msra.mxu0 0
        %1927 = vmatprep.subr.bf16.mxu0 0
        %1928 = vmatpush1.bf16.msra.mxu0 0
        %1929 = vmatprep.subr.bf16.mxu0 0
        %1930 = vmatpush1.bf16.msra.mxu0 0
        %1931 = vmatprep.subr.bf16.mxu0 0
        %1932 = vmatpush1.bf16.msra.mxu0 0
        %1933 = vmatprep.subr.bf16.mxu0 0
        %1934 = vmatpush1.bf16.msra.mxu0 0
        %1935 = vmatprep.subr.bf16.mxu0 0
        %1936 = vmatpush1.bf16.msra.mxu0 0
        %1937 = vmatprep.subr.bf16.mxu0 0
        %1938 = vmatpush1.bf16.msra.mxu0 0
        %1939 = vmatprep.subr.bf16.mxu0 0
        %1940 = vmatpush1.bf16.msra.mxu0 0
        %1941 = vmatprep.mubr.bf16.mxu0 0
        %1942 = vmatmul.mubr.bf16.gmra.mrb[0].mxu0 %v1907
        %v1943 = vpop.f32.mrb[0].mxu0
        %v1944 = vadd.f32 %v1892, %v1943
        %v1945 = vpop.f32.mrb[0].mxu0
        %v1946 = vpop.f32.mrb[0].mxu0
        %v1947 = vpop.f32.mrb[0].mxu0
        %1948 = vdwg.mxu0
        %v1949 = vpack.c.bf16 %v1944, %v1944
        %v1950 = vpack.c.bf16 %v1216, %v1216
        %v1951 = vld [vmem:[%s1151] sm:$0xf]
        %v1952 = vld [vmem:[%s1151 + $0x4] sm:$0xf]
        %v1953 = vld [vmem:[%s1151 + $0x8] sm:$0xf]
        %v1954 = vld [vmem:[%s1151 + $0xc] sm:$0xf]
        %v1955 = vld [vmem:[%s1154] sm:$0x1]
        %v1957 = vlaneseq
        %v1958 = vshrl.u32 %v1957, 7
        %v1959 = vsub.s32 0, %v1958
        %v1960 = vrot.slane %v1955, %v1959
        %v1966 = vunpack.c.l.b16 %v1951
        %v1967 = vunpack.c.l.b16 %v1952
        %v1968 = vunpack.c.l.b16 %v1953
        %v1969 = vunpack.c.l.b16 %v1954
        %v1970 = vpack.c.b16 %v1967, %v1966
        %v1971 = vpack.c.b16 %v1969, %v1968
        %v1975 = vsel %vm1257, %v1950, 0
        %1977 = vmatprep.subr.bf16.mxu0 0
        %1978 = vmatpush1.bf16.msra.mxu0 %v1970
        %1979 = vmatprep.subr.bf16.mxu0 0
        %1980 = vmatpush1.bf16.msra.mxu0 %v1971
        %1981 = vmatprep.subr.bf16.mxu0 0
        %1982 = vmatpush1.bf16.msra.mxu0 0
        %1983 = vmatprep.subr.bf16.mxu0 0
        %1984 = vmatpush1.bf16.msra.mxu0 0
        %1985 = vmatprep.subr.bf16.mxu0 0
        %1986 = vmatpush1.bf16.msra.mxu0 0
        %1987 = vmatprep.subr.bf16.mxu0 0
        %1988 = vmatpush1.bf16.msra.mxu0 0
        %1989 = vmatprep.subr.bf16.mxu0 0
        %1990 = vmatpush1.bf16.msra.mxu0 0
        %1991 = vmatprep.subr.bf16.mxu0 0
        %1992 = vmatpush1.bf16.msra.mxu0 0
        %1993 = vmatprep.subr.bf16.mxu0 0
        %1994 = vmatpush1.bf16.msra.mxu0 0
        %1995 = vmatprep.subr.bf16.mxu0 0
        %1996 = vmatpush1.bf16.msra.mxu0 0
        %1997 = vmatprep.subr.bf16.mxu0 0
        %1998 = vmatpush1.bf16.msra.mxu0 0
        %1999 = vmatprep.subr.bf16.mxu0 0
        %2000 = vmatpush1.bf16.msra.mxu0 0
        %2001 = vmatprep.subr.bf16.mxu0 0
        %2002 = vmatpush1.bf16.msra.mxu0 0
        %2003 = vmatprep.subr.bf16.mxu0 0
        %2004 = vmatpush1.bf16.msra.mxu0 0
        %2005 = vmatprep.subr.bf16.mxu0 0
        %2006 = vmatpush1.bf16.msra.mxu0 0
        %2007 = vmatprep.subr.bf16.mxu0 0
        %2008 = vmatpush1.bf16.msra.mxu0 0
        %2009 = vmatprep.mubr.bf16.mxu0 0
        %2010 = vmatmul.mubr.bf16.gmra.mrb[0].mxu0 %v1975
        %v2011 = vpop.f32.mrb[0].mxu0
        %v2012 = vadd.f32 %v1960, %v2011
        %v2013 = vpop.f32.mrb[0].mxu0
        %v2014 = vpop.f32.mrb[0].mxu0
        %v2015 = vpop.f32.mrb[0].mxu0
        %2016 = vdwg.mxu0
        %v2017 = vpack.c.bf16 %v2012, %v2012
        %v2018 = vld [vmem:[%s1159] sm:$0xf]
        %v2019 = vld [vmem:[%s1159 + $0x4] sm:$0xf]
        %v2020 = vld [vmem:[%s1159 + $0x8] sm:$0xf]
        %v2021 = vld [vmem:[%s1159 + $0xc] sm:$0xf]
        %v2022 = vld [vmem:[%s1162] sm:$0x1]
        %v2024 = vsel %vm1310, %v1949, 0
        %v2027 = vsel %vm1310, %v2017, 0
        %2029 = vmatprep.subr.bf16.mxu0 0
        %2030 = vmatpush1.bf16.xpose.msra.mxu0 %v2027
        %2031 = vmatprep.subr.bf16.mxu0 0
        %2032 = vmatpush1.bf16.xpose.msra.mxu0 0
        %2033 = vmatprep.subr.bf16.mxu0 0
        %2034 = vmatpush1.bf16.xpose.msra.mxu0 0
        %2035 = vmatprep.subr.bf16.mxu0 0
        %2036 = vmatpush1.bf16.xpose.msra.mxu0 0
        %2037 = vmatprep.subr.bf16.mxu0 0
        %2038 = vmatpush1.bf16.xpose.msra.mxu0 0
        %2039 = vmatprep.subr.bf16.mxu0 0
        %2040 = vmatpush1.bf16.xpose.msra.mxu0 0
        %2041 = vmatprep.subr.bf16.mxu0 0
        %2042 = vmatpush1.bf16.xpose.msra.mxu0 0
        %2043 = vmatprep.subr.bf16.mxu0 0
        %2044 = vmatpush1.bf16.xpose.msra.mxu0 0
        %2045 = vmatprep.subr.bf16.mxu0 0
        %2046 = vmatpush1.bf16.xpose.msra.mxu0 0
        %2047 = vmatprep.subr.bf16.mxu0 0
        %2048 = vmatpush1.bf16.xpose.msra.mxu0 0
        %2049 = vmatprep.subr.bf16.mxu0 0
        %2050 = vmatpush1.bf16.xpose.msra.mxu0 0
        %2051 = vmatprep.subr.bf16.mxu0 0
        %2052 = vmatpush1.bf16.xpose.msra.mxu0 0
        %2053 = vmatprep.subr.bf16.mxu0 0
        %2054 = vmatpush1.bf16.xpose.msra.mxu0 0
        %2055 = vmatprep.subr.bf16.mxu0 0
        %2056 = vmatpush1.bf16.xpose.msra.mxu0 0
        %2057 = vmatprep.subr.bf16.mxu0 0
        %2058 = vmatpush1.bf16.xpose.msra.mxu0 0
        %2059 = vmatprep.subr.bf16.mxu0 0
        %2060 = vmatpush1.bf16.xpose.msra.mxu0 0
        %2061 = vmatprep.mubr.bf16.mxu0 0
        %2062 = vmatmul.mubr.bf16.gmra.mrb[0].mxu0 %v2024
        %v2063 = vpop.f32.mrb[0].mxu0
        %v2064 = vadd.f32 0.0, %v2063
        %v2065 = vpop.f32.mrb[0].mxu0
        %v2066 = vpop.f32.mrb[0].mxu0
        %v2067 = vpop.f32.mrb[0].mxu0
        %2068 = vdwg.mxu0
        %v2069 = vmul.f32 %v2064, 0.35355338
        %v2070 = vsel %vm1232, 1, 0
        %v2071 = vlaneseq
        %v2072 = vshrl.u32 %v2071, 7
        %v2073 = vsub.s32 0, %v2072
        %v2074 = vrot.slane %v2070, %v2073
        %vm2075 = vcmp.eq.s32.totalorder %v2074, 1
        %v2076 = vsel %vm2075, -1e+09, %v2069
        %v2077 = vsel %vm1310, %v2076, -inf
        %2078 = vmax.xlane.f32.xlu0 %v2077
        %v2079 = vpop.xlane.xlu0 %2078
        %v2080 = vsub.f32 %v2076, %v2079
        %v2081 = vmul.f32 %v2080, 1.442695
        %v2082 = vpow.pop %v2081
        %v2083 = vsel %vm1310, %v2082, 0.0
        %2084 = vadd.xlane.f32.xlu0 %v2083
        %v2085 = vpop.xlane.xlu0 %2084
        %v2086 = vrcp.pop %v2085
        %v2087 = vmul.f32 %v2082, %v2086
        %v2088 = vpack.c.bf16 %v2087, %v2087
        %2090 = vrot.lane.b32.xlu0 %v2017, 96
        %v2091 = vpop.permute.xlu0 %2090
        %v2093 = vsel %vm1310, %v2088, 0
        %v2096 = vsel %vm1376, %v2091, 0
        %2098 = vmatprep.subr.bf16.mxu0 0
        %2099 = vmatpush1.bf16.msra.mxu0 %v2096
        %2100 = vmatprep.subr.bf16.mxu0 0
        %2101 = vmatpush1.bf16.msra.mxu0 0
        %2102 = vmatprep.subr.bf16.mxu0 0
        %2103 = vmatpush1.bf16.msra.mxu0 0
        %2104 = vmatprep.subr.bf16.mxu0 0
        %2105 = vmatpush1.bf16.msra.mxu0 0
        %2106 = vmatprep.subr.bf16.mxu0 0
        %2107 = vmatpush1.bf16.msra.mxu0 0
        %2108 = vmatprep.subr.bf16.mxu0 0
        %2109 = vmatpush1.bf16.msra.mxu0 0
        %2110 = vmatprep.subr.bf16.mxu0 0
        %2111 = vmatpush1.bf16.msra.mxu0 0
        %2112 = vmatprep.subr.bf16.mxu0 0
        %2113 = vmatpush1.bf16.msra.mxu0 0
        %2114 = vmatprep.subr.bf16.mxu0 0
        %2115 = vmatpush1.bf16.msra.mxu0 0
        %2116 = vmatprep.subr.bf16.mxu0 0
        %2117 = vmatpush1.bf16.msra.mxu0 0
        %2118 = vmatprep.subr.bf16.mxu0 0
        %2119 = vmatpush1.bf16.msra.mxu0 0
        %2120 = vmatprep.subr.bf16.mxu0 0
        %2121 = vmatpush1.bf16.msra.mxu0 0
        %2122 = vmatprep.subr.bf16.mxu0 0
        %2123 = vmatpush1.bf16.msra.mxu0 0
        %2124 = vmatprep.subr.bf16.mxu0 0
        %2125 = vmatpush1.bf16.msra.mxu0 0
        %2126 = vmatprep.subr.bf16.mxu0 0
        %2127 = vmatpush1.bf16.msra.mxu0 0
        %2128 = vmatprep.subr.bf16.mxu0 0
        %2129 = vmatpush1.bf16.msra.mxu0 0
        %2130 = vmatprep.mubr.bf16.mxu0 0
        %2131 = vmatmul.mubr.bf16.gmra.mrb[0].mxu0 %v2093
        %v2132 = vpop.f32.mrb[0].mxu0
        %v2133 = vadd.f32 0.0, %v2132
        %v2134 = vpop.f32.mrb[0].mxu0
        %v2135 = vpop.f32.mrb[0].mxu0
        %v2136 = vpop.f32.mrb[0].mxu0
        %2137 = vdwg.mxu0
        %2139 = vrot.lane.b32.xlu0 %v1949, 120
        %v2140 = vpop.permute.xlu0 %2139
        %2141 = vrot.lane.b32.xlu0 %v2017, 120
        %v2142 = vpop.permute.xlu0 %2141
        %v2144 = vsel %vm1310, %v2140, 0
        %v2147 = vsel %vm1310, %v2142, 0
        %2149 = vmatprep.subr.bf16.mxu0 0
        %2150 = vmatpush1.bf16.xpose.msra.mxu0 %v2147
        %2151 = vmatprep.subr.bf16.mxu0 0
        %2152 = vmatpush1.bf16.xpose.msra.mxu0 0
        %2153 = vmatprep.subr.bf16.mxu0 0
        %2154 = vmatpush1.bf16.xpose.msra.mxu0 0
        %2155 = vmatprep.subr.bf16.mxu0 0
        %2156 = vmatpush1.bf16.xpose.msra.mxu0 0
        %2157 = vmatprep.subr.bf16.mxu0 0
        %2158 = vmatpush1.bf16.xpose.msra.mxu0 0
        %2159 = vmatprep.subr.bf16.mxu0 0
        %2160 = vmatpush1.bf16.xpose.msra.mxu0 0
        %2161 = vmatprep.subr.bf16.mxu0 0
        %2162 = vmatpush1.bf16.xpose.msra.mxu0 0
        %2163 = vmatprep.subr.bf16.mxu0 0
        %2164 = vmatpush1.bf16.xpose.msra.mxu0 0
        %2165 = vmatprep.subr.bf16.mxu0 0
        %2166 = vmatpush1.bf16.xpose.msra.mxu0 0
        %2167 = vmatprep.subr.bf16.mxu0 0
        %2168 = vmatpush1.bf16.xpose.msra.mxu0 0
        %2169 = vmatprep.subr.bf16.mxu0 0
        %2170 = vmatpush1.bf16.xpose.msra.mxu0 0
        %2171 = vmatprep.subr.bf16.mxu0 0
        %2172 = vmatpush1.bf16.xpose.msra.mxu0 0
        %2173 = vmatprep.subr.bf16.mxu0 0
        %2174 = vmatpush1.bf16.xpose.msra.mxu0 0
        %2175 = vmatprep.subr.bf16.mxu0 0
        %2176 = vmatpush1.bf16.xpose.msra.mxu0 0
        %2177 = vmatprep.subr.bf16.mxu0 0
        %2178 = vmatpush1.bf16.xpose.msra.mxu0 0
        %2179 = vmatprep.subr.bf16.mxu0 0
        %2180 = vmatpush1.bf16.xpose.msra.mxu0 0
        %2181 = vmatprep.mubr.bf16.mxu0 0
        %2182 = vmatmul.mubr.bf16.gmra.mrb[0].mxu0 %v2144
        %v2183 = vpop.f32.mrb[0].mxu0
        %v2184 = vadd.f32 0.0, %v2183
        %v2185 = vpop.f32.mrb[0].mxu0
        %v2186 = vpop.f32.mrb[0].mxu0
        %v2187 = vpop.f32.mrb[0].mxu0
        %2188 = vdwg.mxu0
        %v2189 = vmul.f32 %v2184, 0.35355338
        %v2190 = vsel %vm2075, -1e+09, %v2189
        %v2191 = vsel %vm1310, %v2190, -inf
        %2192 = vmax.xlane.f32.xlu0 %v2191
        %v2193 = vpop.xlane.xlu0 %2192
        %v2194 = vsub.f32 %v2190, %v2193
        %v2195 = vmul.f32 %v2194, 1.442695
        %v2196 = vpow.pop %v2195
        %v2197 = vsel %vm1310, %v2196, 0.0
        %2198 = vadd.xlane.f32.xlu0 %v2197
        %v2199 = vpop.xlane.xlu0 %2198
        %v2200 = vrcp.pop %v2199
        %v2201 = vmul.f32 %v2196, %v2200
        %v2202 = vpack.c.bf16 %v2201, %v2201
        %2203 = vrot.lane.b32.xlu0 %v2017, 88
        %v2204 = vpop.permute.xlu0 %2203
        %v2206 = vsel %vm1310, %v2202, 0
        %v2209 = vsel %vm1376, %v2204, 0
        %2211 = vmatprep.subr.bf16.mxu0 0
        %2212 = vmatpush1.bf16.msra.mxu0 %v2209
        %2213 = vmatprep.subr.bf16.mxu0 0
        %2214 = vmatpush1.bf16.msra.mxu0 0
        %2215 = vmatprep.subr.bf16.mxu0 0
        %2216 = vmatpush1.bf16.msra.mxu0 0
        %2217 = vmatprep.subr.bf16.mxu0 0
        %2218 = vmatpush1.bf16.msra.mxu0 0
        %2219 = vmatprep.subr.bf16.mxu0 0
        %2220 = vmatpush1.bf16.msra.mxu0 0
        %2221 = vmatprep.subr.bf16.mxu0 0
        %2222 = vmatpush1.bf16.msra.mxu0 0
        %2223 = vmatprep.subr.bf16.mxu0 0
        %2224 = vmatpush1.bf16.msra.mxu0 0
        %2225 = vmatprep.subr.bf16.mxu0 0
        %2226 = vmatpush1.bf16.msra.mxu0 0
        %2227 = vmatprep.subr.bf16.mxu0 0
        %2228 = vmatpush1.bf16.msra.mxu0 0
        %2229 = vmatprep.subr.bf16.mxu0 0
        %2230 = vmatpush1.bf16.msra.mxu0 0
        %2231 = vmatprep.subr.bf16.mxu0 0
        %2232 = vmatpush1.bf16.msra.mxu0 0
        %2233 = vmatprep.subr.bf16.mxu0 0
        %2234 = vmatpush1.bf16.msra.mxu0 0
        %2235 = vmatprep.subr.bf16.mxu0 0
        %2236 = vmatpush1.bf16.msra.mxu0 0
        %2237 = vmatprep.subr.bf16.mxu0 0
        %2238 = vmatpush1.bf16.msra.mxu0 0
        %2239 = vmatprep.subr.bf16.mxu0 0
        %2240 = vmatpush1.bf16.msra.mxu0 0
        %2241 = vmatprep.subr.bf16.mxu0 0
        %2242 = vmatpush1.bf16.msra.mxu0 0
        %2243 = vmatprep.mubr.bf16.mxu0 0
        %2244 = vmatmul.mubr.bf16.gmra.mrb[0].mxu0 %v2206
        %v2245 = vpop.f32.mrb[0].mxu0
        %v2246 = vadd.f32 0.0, %v2245
        %v2247 = vpop.f32.mrb[0].mxu0
        %v2248 = vpop.f32.mrb[0].mxu0
        %v2249 = vpop.f32.mrb[0].mxu0
        %2250 = vdwg.mxu0
        %2251 = vrot.lane.b32.xlu0 %v1949, 112
        %v2252 = vpop.permute.xlu0 %2251
        %2253 = vrot.lane.b32.xlu0 %v2017, 112
        %v2254 = vpop.permute.xlu0 %2253
        %v2256 = vsel %vm1310, %v2252, 0
        %v2259 = vsel %vm1310, %v2254, 0
        %2261 = vmatprep.subr.bf16.mxu0 0
        %2262 = vmatpush1.bf16.xpose.msra.mxu0 %v2259
        %2263 = vmatprep.subr.bf16.mxu0 0
        %2264 = vmatpush1.bf16.xpose.msra.mxu0 0
        %2265 = vmatprep.subr.bf16.mxu0 0
        %2266 = vmatpush1.bf16.xpose.msra.mxu0 0
        %2267 = vmatprep.subr.bf16.mxu0 0
        %2268 = vmatpush1.bf16.xpose.msra.mxu0 0
        %2269 = vmatprep.subr.bf16.mxu0 0
        %2270 = vmatpush1.bf16.xpose.msra.mxu0 0
        %2271 = vmatprep.subr.bf16.mxu0 0
        %2272 = vmatpush1.bf16.xpose.msra.mxu0 0
        %2273 = vmatprep.subr.bf16.mxu0 0
        %2274 = vmatpush1.bf16.xpose.msra.mxu0 0
        %2275 = vmatprep.subr.bf16.mxu0 0
        %2276 = vmatpush1.bf16.xpose.msra.mxu0 0
        %2277 = vmatprep.subr.bf16.mxu0 0
        %2278 = vmatpush1.bf16.xpose.msra.mxu0 0
        %2279 = vmatprep.subr.bf16.mxu0 0
        %2280 = vmatpush1.bf16.xpose.msra.mxu0 0
        %2281 = vmatprep.subr.bf16.mxu0 0
        %2282 = vmatpush1.bf16.xpose.msra.mxu0 0
        %2283 = vmatprep.subr.bf16.mxu0 0
        %2284 = vmatpush1.bf16.xpose.msra.mxu0 0
        %2285 = vmatprep.subr.bf16.mxu0 0
        %2286 = vmatpush1.bf16.xpose.msra.mxu0 0
        %2287 = vmatprep.subr.bf16.mxu0 0
        %2288 = vmatpush1.bf16.xpose.msra.mxu0 0
        %2289 = vmatprep.subr.bf16.mxu0 0
        %2290 = vmatpush1.bf16.xpose.msra.mxu0 0
        %2291 = vmatprep.subr.bf16.mxu0 0
        %2292 = vmatpush1.bf16.xpose.msra.mxu0 0
        %2293 = vmatprep.mubr.bf16.mxu0 0
        %2294 = vmatmul.mubr.bf16.gmra.mrb[0].mxu0 %v2256
        %v2295 = vpop.f32.mrb[0].mxu0
        %v2296 = vadd.f32 0.0, %v2295
        %v2297 = vpop.f32.mrb[0].mxu0
        %v2298 = vpop.f32.mrb[0].mxu0
        %v2299 = vpop.f32.mrb[0].mxu0
        %2300 = vdwg.mxu0
        %v2301 = vmul.f32 %v2296, 0.35355338
        %v2302 = vsel %vm2075, -1e+09, %v2301
        %v2303 = vsel %vm1310, %v2302, -inf
        %2304 = vmax.xlane.f32.xlu0 %v2303
        %v2305 = vpop.xlane.xlu0 %2304
        %v2306 = vsub.f32 %v2302, %v2305
        %v2307 = vmul.f32 %v2306, 1.442695
        %v2308 = vpow.pop %v2307
        %v2309 = vsel %vm1310, %v2308, 0.0
        %2310 = vadd.xlane.f32.xlu0 %v2309
        %v2311 = vpop.xlane.xlu0 %2310
        %v2312 = vrcp.pop %v2311
        %v2313 = vmul.f32 %v2308, %v2312
        %v2314 = vpack.c.bf16 %v2313, %v2313
        %2315 = vrot.lane.b32.xlu0 %v2017, 80
        %v2316 = vpop.permute.xlu0 %2315
        %v2318 = vsel %vm1310, %v2314, 0
        %v2321 = vsel %vm1376, %v2316, 0
        %2323 = vmatprep.subr.bf16.mxu0 0
        %2324 = vmatpush1.bf16.msra.mxu0 %v2321
        %2325 = vmatprep.subr.bf16.mxu0 0
        %2326 = vmatpush1.bf16.msra.mxu0 0
        %2327 = vmatprep.subr.bf16.mxu0 0
        %2328 = vmatpush1.bf16.msra.mxu0 0
        %2329 = vmatprep.subr.bf16.mxu0 0
        %2330 = vmatpush1.bf16.msra.mxu0 0
        %2331 = vmatprep.subr.bf16.mxu0 0
        %2332 = vmatpush1.bf16.msra.mxu0 0
        %2333 = vmatprep.subr.bf16.mxu0 0
        %2334 = vmatpush1.bf16.msra.mxu0 0
        %2335 = vmatprep.subr.bf16.mxu0 0
        %2336 = vmatpush1.bf16.msra.mxu0 0
        %2337 = vmatprep.subr.bf16.mxu0 0
        %2338 = vmatpush1.bf16.msra.mxu0 0
        %2339 = vmatprep.subr.bf16.mxu0 0
        %2340 = vmatpush1.bf16.msra.mxu0 0
        %2341 = vmatprep.subr.bf16.mxu0 0
        %2342 = vmatpush1.bf16.msra.mxu0 0
        %2343 = vmatprep.subr.bf16.mxu0 0
        %2344 = vmatpush1.bf16.msra.mxu0 0
        %2345 = vmatprep.subr.bf16.mxu0 0
        %2346 = vmatpush1.bf16.msra.mxu0 0
        %2347 = vmatprep.subr.bf16.mxu0 0
        %2348 = vmatpush1.bf16.msra.mxu0 0
        %2349 = vmatprep.subr.bf16.mxu0 0
        %2350 = vmatpush1.bf16.msra.mxu0 0
        %2351 = vmatprep.subr.bf16.mxu0 0
        %2352 = vmatpush1.bf16.msra.mxu0 0
        %2353 = vmatprep.subr.bf16.mxu0 0
        %2354 = vmatpush1.bf16.msra.mxu0 0
        %2355 = vmatprep.mubr.bf16.mxu0 0
        %2356 = vmatmul.mubr.bf16.gmra.mrb[0].mxu0 %v2318
        %v2357 = vpop.f32.mrb[0].mxu0
        %v2358 = vadd.f32 0.0, %v2357
        %v2359 = vpop.f32.mrb[0].mxu0
        %v2360 = vpop.f32.mrb[0].mxu0
        %v2361 = vpop.f32.mrb[0].mxu0
        %2362 = vdwg.mxu0
        %2363 = vrot.lane.b32.xlu0 %v1949, 104
        %v2364 = vpop.permute.xlu0 %2363
        %2365 = vrot.lane.b32.xlu0 %v2017, 104
        %v2366 = vpop.permute.xlu0 %2365
        %v2368 = vsel %vm1310, %v2364, 0
        %v2371 = vsel %vm1310, %v2366, 0
        %2373 = vmatprep.subr.bf16.mxu0 0
        %2374 = vmatpush1.bf16.xpose.msra.mxu0 %v2371
        %2375 = vmatprep.subr.bf16.mxu0 0
        %2376 = vmatpush1.bf16.xpose.msra.mxu0 0
        %2377 = vmatprep.subr.bf16.mxu0 0
        %2378 = vmatpush1.bf16.xpose.msra.mxu0 0
        %2379 = vmatprep.subr.bf16.mxu0 0
        %2380 = vmatpush1.bf16.xpose.msra.mxu0 0
        %2381 = vmatprep.subr.bf16.mxu0 0
        %2382 = vmatpush1.bf16.xpose.msra.mxu0 0
        %2383 = vmatprep.subr.bf16.mxu0 0
        %2384 = vmatpush1.bf16.xpose.msra.mxu0 0
        %2385 = vmatprep.subr.bf16.mxu0 0
        %2386 = vmatpush1.bf16.xpose.msra.mxu0 0
        %2387 = vmatprep.subr.bf16.mxu0 0
        %2388 = vmatpush1.bf16.xpose.msra.mxu0 0
        %2389 = vmatprep.subr.bf16.mxu0 0
        %2390 = vmatpush1.bf16.xpose.msra.mxu0 0
        %2391 = vmatprep.subr.bf16.mxu0 0
        %2392 = vmatpush1.bf16.xpose.msra.mxu0 0
        %2393 = vmatprep.subr.bf16.mxu0 0
        %2394 = vmatpush1.bf16.xpose.msra.mxu0 0
        %2395 = vmatprep.subr.bf16.mxu0 0
        %2396 = vmatpush1.bf16.xpose.msra.mxu0 0
        %2397 = vmatprep.subr.bf16.mxu0 0
        %2398 = vmatpush1.bf16.xpose.msra.mxu0 0
        %2399 = vmatprep.subr.bf16.mxu0 0
        %2400 = vmatpush1.bf16.xpose.msra.mxu0 0
        %2401 = vmatprep.subr.bf16.mxu0 0
        %2402 = vmatpush1.bf16.xpose.msra.mxu0 0
        %2403 = vmatprep.subr.bf16.mxu0 0
        %2404 = vmatpush1.bf16.xpose.msra.mxu0 0
        %2405 = vmatprep.mubr.bf16.mxu0 0
        %2406 = vmatmul.mubr.bf16.gmra.mrb[0].mxu0 %v2368
        %v2407 = vpop.f32.mrb[0].mxu0
        %v2408 = vadd.f32 0.0, %v2407
        %v2409 = vpop.f32.mrb[0].mxu0
        %v2410 = vpop.f32.mrb[0].mxu0
        %v2411 = vpop.f32.mrb[0].mxu0
        %2412 = vdwg.mxu0
        %v2413 = vmul.f32 %v2408, 0.35355338
        %v2414 = vsel %vm2075, -1e+09, %v2413
        %v2415 = vsel %vm1310, %v2414, -inf
        %2416 = vmax.xlane.f32.xlu0 %v2415
        %v2417 = vpop.xlane.xlu0 %2416
        %v2418 = vsub.f32 %v2414, %v2417
        %v2419 = vmul.f32 %v2418, 1.442695
        %v2420 = vpow.pop %v2419
        %v2421 = vsel %vm1310, %v2420, 0.0
        %2422 = vadd.xlane.f32.xlu0 %v2421
        %v2423 = vpop.xlane.xlu0 %2422
        %v2424 = vrcp.pop %v2423
        %v2425 = vmul.f32 %v2420, %v2424
        %v2426 = vpack.c.bf16 %v2425, %v2425
        %2427 = vrot.lane.b32.xlu0 %v2017, 72
        %v2428 = vpop.permute.xlu0 %2427
        %v2430 = vsel %vm1310, %v2426, 0
        %v2433 = vsel %vm1376, %v2428, 0
        %2435 = vmatprep.subr.bf16.mxu0 0
        %2436 = vmatpush1.bf16.msra.mxu0 %v2433
        %2437 = vmatprep.subr.bf16.mxu0 0
        %2438 = vmatpush1.bf16.msra.mxu0 0
        %2439 = vmatprep.subr.bf16.mxu0 0
        %2440 = vmatpush1.bf16.msra.mxu0 0
        %2441 = vmatprep.subr.bf16.mxu0 0
        %2442 = vmatpush1.bf16.msra.mxu0 0
        %2443 = vmatprep.subr.bf16.mxu0 0
        %2444 = vmatpush1.bf16.msra.mxu0 0
        %2445 = vmatprep.subr.bf16.mxu0 0
        %2446 = vmatpush1.bf16.msra.mxu0 0
        %2447 = vmatprep.subr.bf16.mxu0 0
        %2448 = vmatpush1.bf16.msra.mxu0 0
        %2449 = vmatprep.subr.bf16.mxu0 0
        %2450 = vmatpush1.bf16.msra.mxu0 0
        %2451 = vmatprep.subr.bf16.mxu0 0
        %2452 = vmatpush1.bf16.msra.mxu0 0
        %2453 = vmatprep.subr.bf16.mxu0 0
        %2454 = vmatpush1.bf16.msra.mxu0 0
        %2455 = vmatprep.subr.bf16.mxu0 0
        %2456 = vmatpush1.bf16.msra.mxu0 0
        %2457 = vmatprep.subr.bf16.mxu0 0
        %2458 = vmatpush1.bf16.msra.mxu0 0
        %2459 = vmatprep.subr.bf16.mxu0 0
        %2460 = vmatpush1.bf16.msra.mxu0 0
        %2461 = vmatprep.subr.bf16.mxu0 0
        %2462 = vmatpush1.bf16.msra.mxu0 0
        %2463 = vmatprep.subr.bf16.mxu0 0
        %2464 = vmatpush1.bf16.msra.mxu0 0
        %2465 = vmatprep.subr.bf16.mxu0 0
        %2466 = vmatpush1.bf16.msra.mxu0 0
        %2467 = vmatprep.mubr.bf16.mxu0 0
        %2468 = vmatmul.mubr.bf16.gmra.mrb[0].mxu0 %v2430
        %v2469 = vpop.f32.mrb[0].mxu0
        %v2470 = vadd.f32 0.0, %v2469
        %v2471 = vpop.f32.mrb[0].mxu0
        %v2472 = vpop.f32.mrb[0].mxu0
        %v2473 = vpop.f32.mrb[0].mxu0
        %2474 = vdwg.mxu0
        %2476 = vrot.lane.b32.xlu0 %v2201, 8
        %v2477 = vpop.permute.xlu0 %2476
        %2480 = vrot.lane.b32.xlu0 %v2313, 16
        %v2481 = vpop.permute.xlu0 %2480
        %2484 = vrot.lane.b32.xlu0 %v2425, 24
        %v2485 = vpop.permute.xlu0 %2484
        %v2487 = vsel %vm1310, %v2087, %v2477
        %v2488 = vsel %vm1769, %v2487, %v2481
        %v2489 = vsel %vm1771, %v2488, %v2485
        %2490 = vst.msk [vmem:[%s1206] sm:$0xff] %vm1257, %v2489
        %2492 = vrot.lane.b32.xlu0 %v2246, 8
        %v2493 = vpop.permute.xlu0 %2492
        %2496 = vrot.lane.b32.xlu0 %v2358, 16
        %v2497 = vpop.permute.xlu0 %2496
        %2500 = vrot.lane.b32.xlu0 %v2470, 24
        %v2501 = vpop.permute.xlu0 %2500
        %v2503 = vsel %vm1310, %v2133, %v2493
        %v2504 = vsel %vm1769, %v2503, %v2497
        %v2505 = vsel %vm1771, %v2504, %v2501
        %v2506 = vpack.c.bf16 %v2505, %v2505
        %v2508 = vlaneseq
        %v2509 = vshrl.u32 %v2508, 7
        %v2510 = vsub.s32 0, %v2509
        %v2511 = vrot.slane %v2022, %v2510
        %v2517 = vunpack.c.l.b16 %v2018
        %v2518 = vunpack.c.l.b16 %v2019
        %v2519 = vunpack.c.l.b16 %v2020
        %v2520 = vunpack.c.l.b16 %v2021
        %v2521 = vpack.c.b16 %v2518, %v2517
        %v2522 = vpack.c.b16 %v2520, %v2519
        %v2526 = vsel %vm1257, %v2506, 0
        %2528 = vmatprep.subr.bf16.mxu0 0
        %2529 = vmatpush1.bf16.msra.mxu0 %v2521
        %2530 = vmatprep.subr.bf16.mxu0 0
        %2531 = vmatpush1.bf16.msra.mxu0 %v2522
        %2532 = vmatprep.subr.bf16.mxu0 0
        %2533 = vmatpush1.bf16.msra.mxu0 0
        %2534 = vmatprep.subr.bf16.mxu0 0
        %2535 = vmatpush1.bf16.msra.mxu0 0
        %2536 = vmatprep.subr.bf16.mxu0 0
        %2537 = vmatpush1.bf16.msra.mxu0 0
        %2538 = vmatprep.subr.bf16.mxu0 0
        %2539 = vmatpush1.bf16.msra.mxu0 0
        %2540 = vmatprep.subr.bf16.mxu0 0
        %2541 = vmatpush1.bf16.msra.mxu0 0
        %2542 = vmatprep.subr.bf16.mxu0 0
        %2543 = vmatpush1.bf16.msra.mxu0 0
        %2544 = vmatprep.subr.bf16.mxu0 0
        %2545 = vmatpush1.bf16.msra.mxu0 0
        %2546 = vmatprep.subr.bf16.mxu0 0
        %2547 = vmatpush1.bf16.msra.mxu0 0
        %2548 = vmatprep.subr.bf16.mxu0 0
        %2549 = vmatpush1.bf16.msra.mxu0 0
        %2550 = vmatprep.subr.bf16.mxu0 0
        %2551 = vmatpush1.bf16.msra.mxu0 0
        %2552 = vmatprep.subr.bf16.mxu0 0
        %2553 = vmatpush1.bf16.msra.mxu0 0
        %2554 = vmatprep.subr.bf16.mxu0 0
        %2555 = vmatpush1.bf16.msra.mxu0 0
        %2556 = vmatprep.subr.bf16.mxu0 0
        %2557 = vmatpush1.bf16.msra.mxu0 0
        %2558 = vmatprep.subr.bf16.mxu0 0
        %2559 = vmatpush1.bf16.msra.mxu0 0
        %2560 = vmatprep.mubr.bf16.mxu0 0
        %2561 = vmatmul.mubr.bf16.gmra.mrb[0].mxu0 %v2526
        %v2562 = vpop.f32.mrb[0].mxu0
        %v2563 = vadd.f32 %v2511, %v2562
        %v2564 = vpop.f32.mrb[0].mxu0
        %v2565 = vpop.f32.mrb[0].mxu0
        %v2566 = vpop.f32.mrb[0].mxu0
        %2567 = vdwg.mxu0
        %v2568 = vadd.f32 %v1881, %v2563
        %v2569 = vld [vmem:[%s1165] sm:$0x1]
        %v2570 = vld [vmem:[%s1168] sm:$0x1]
        %v2571 = vsel %vm1257, %v2568, 0.0
        %2572 = vadd.xlane.f32.xlu0 %v2571
        %v2573 = vpop.xlane.xlu0 %2572
        %v2574 = vmul.f32 %v2573, %v1857
        %v2575 = vsub.f32 %v2568, %v2574
        %v2576 = vmul.f32 %v2575, %v2575
        %v2577 = vsel %vm1257, %v2576, 0.0
        %2578 = vadd.xlane.f32.xlu0 %v2577
        %v2579 = vpop.xlane.xlu0 %2578
        %v2580 = vmul.f32 %v2579, %v1857
        %v2581 = vadd.f32 %v2580, 1e-05
        %v2582 = vrsqrt.pop %v2581
        %v2583 = vmul.f32 %v2575, %v2582
        %v2585 = vlaneseq
        %v2586 = vshrl.u32 %v2585, 7
        %v2587 = vsub.s32 0, %v2586
        %v2588 = vrot.slane %v2569, %v2587
        %v2590 = vmul.f32 %v2583, %v2588
        %v2592 = vlaneseq
        %v2593 = vshrl.u32 %v2592, 7
        %v2594 = vsub.s32 0, %v2593
        %v2595 = vrot.slane %v2570, %v2594
        %v2597 = vadd.f32 %v2590, %v2595
        %v2598 = vpack.c.bf16 %v2597, %v2597
        %v2599 = vld [vmem:[%s1173] sm:$0xf]
        %v2600 = vld [vmem:[%s1173 + $0x4] sm:$0xf]
        %v2601 = vld [vmem:[%s1173 + $0x8] sm:$0xf]
        %v2602 = vld [vmem:[%s1173 + $0xc] sm:$0xf]
        %v2603 = vld [vmem:[%s1176] sm:$0x1]
        %v2605 = vlaneseq
        %v2606 = vshrl.u32 %v2605, 7
        %v2607 = vsub.s32 0, %v2606
        %v2608 = vrot.slane %v2603, %v2607
        %v2614 = vunpack.c.l.b16 %v2599
        %v2615 = vunpack.c.l.b16 %v2600
        %v2616 = vunpack.c.l.b16 %v2601
        %v2617 = vunpack.c.l.b16 %v2602
        %v2618 = vpack.c.b16 %v2615, %v2614
        %v2619 = vpack.c.b16 %v2617, %v2616
        %v2623 = vsel %vm1257, %v2598, 0
        %2625 = vmatprep.subr.bf16.mxu0 0
        %2626 = vmatpush1.bf16.msra.mxu0 %v2618
        %2627 = vmatprep.subr.bf16.mxu0 0
        %2628 = vmatpush1.bf16.msra.mxu0 %v2619
        %2629 = vmatprep.subr.bf16.mxu0 0
        %2630 = vmatpush1.bf16.msra.mxu0 0
        %2631 = vmatprep.subr.bf16.mxu0 0
        %2632 = vmatpush1.bf16.msra.mxu0 0
        %2633 = vmatprep.subr.bf16.mxu0 0
        %2634 = vmatpush1.bf16.msra.mxu0 0
        %2635 = vmatprep.subr.bf16.mxu0 0
        %2636 = vmatpush1.bf16.msra.mxu0 0
        %2637 = vmatprep.subr.bf16.mxu0 0
        %2638 = vmatpush1.bf16.msra.mxu0 0
        %2639 = vmatprep.subr.bf16.mxu0 0
        %2640 = vmatpush1.bf16.msra.mxu0 0
        %2641 = vmatprep.subr.bf16.mxu0 0
        %2642 = vmatpush1.bf16.msra.mxu0 0
        %2643 = vmatprep.subr.bf16.mxu0 0
        %2644 = vmatpush1.bf16.msra.mxu0 0
        %2645 = vmatprep.subr.bf16.mxu0 0
        %2646 = vmatpush1.bf16.msra.mxu0 0
        %2647 = vmatprep.subr.bf16.mxu0 0
        %2648 = vmatpush1.bf16.msra.mxu0 0
        %2649 = vmatprep.subr.bf16.mxu0 0
        %2650 = vmatpush1.bf16.msra.mxu0 0
        %2651 = vmatprep.subr.bf16.mxu0 0
        %2652 = vmatpush1.bf16.msra.mxu0 0
        %2653 = vmatprep.subr.bf16.mxu0 0
        %2654 = vmatpush1.bf16.msra.mxu0 0
        %2655 = vmatprep.subr.bf16.mxu0 0
        %2656 = vmatpush1.bf16.msra.mxu0 0
        %2657 = vmatprep.mubr.bf16.mxu0 0
        %2658 = vmatmul.mubr.bf16.gmra.mrb[0].mxu0 %v2623
        %v2659 = vpop.f32.mrb[0].mxu0
        %v2660 = vadd.f32 %v2608, %v2659
        %v2661 = vpop.f32.mrb[0].mxu0
        %v2662 = vpop.f32.mrb[0].mxu0
        %v2663 = vpop.f32.mrb[0].mxu0
        %2664 = vdwg.mxu0
        %v2665 = vmax.f32 %v2660, 0.0
        %v2666 = vpack.c.bf16 %v2665, %v2665
        %v2667 = vld [vmem:[%s1181] sm:$0xf]
        %v2668 = vld [vmem:[%s1181 + $0x4] sm:$0xf]
        %v2669 = vld [vmem:[%s1181 + $0x8] sm:$0xf]
        %v2670 = vld [vmem:[%s1181 + $0xc] sm:$0xf]
        %v2671 = vld [vmem:[%s1181 + $0x10] sm:$0xf]
        %v2672 = vld [vmem:[%s1181 + $0x14] sm:$0xf]
        %v2673 = vld [vmem:[%s1181 + $0x18] sm:$0xf]
        %v2674 = vld [vmem:[%s1181 + $0x1c] sm:$0xf]
        %v2675 = vld [vmem:[%s1184] sm:$0x1]
        %v2677 = vlaneseq
        %v2678 = vshrl.u32 %v2677, 7
        %v2679 = vsub.s32 0, %v2678
        %v2680 = vrot.slane %v2675, %v2679
        %v2690 = vunpack.c.l.b16 %v2667
        %v2691 = vunpack.c.l.b16 %v2668
        %v2692 = vunpack.c.l.b16 %v2669
        %v2693 = vunpack.c.l.b16 %v2670
        %v2694 = vunpack.c.l.b16 %v2671
        %v2695 = vunpack.c.l.b16 %v2672
        %v2696 = vunpack.c.l.b16 %v2673
        %v2697 = vunpack.c.l.b16 %v2674
        %v2698 = vpack.c.b16 %v2691, %v2690
        %v2699 = vpack.c.b16 %v2693, %v2692
        %v2700 = vpack.c.b16 %v2695, %v2694
        %v2701 = vpack.c.b16 %v2697, %v2696
        %vm2706 = vcmask 523264
        %v2708 = vsel %vm2706, %v2666, 0
        %2710 = vmatprep.subr.bf16.mxu0 0
        %2711 = vmatpush1.bf16.msra.mxu0 %v2698
        %2712 = vmatprep.subr.bf16.mxu0 0
        %2713 = vmatpush1.bf16.msra.mxu0 %v2699
        %2714 = vmatprep.subr.bf16.mxu0 0
        %2715 = vmatpush1.bf16.msra.mxu0 %v2700
        %2716 = vmatprep.subr.bf16.mxu0 0
        %2717 = vmatpush1.bf16.msra.mxu0 %v2701
        %2718 = vmatprep.subr.bf16.mxu0 0
        %2719 = vmatpush1.bf16.msra.mxu0 0
        %2720 = vmatprep.subr.bf16.mxu0 0
        %2721 = vmatpush1.bf16.msra.mxu0 0
        %2722 = vmatprep.subr.bf16.mxu0 0
        %2723 = vmatpush1.bf16.msra.mxu0 0
        %2724 = vmatprep.subr.bf16.mxu0 0
        %2725 = vmatpush1.bf16.msra.mxu0 0
        %2726 = vmatprep.subr.bf16.mxu0 0
        %2727 = vmatpush1.bf16.msra.mxu0 0
        %2728 = vmatprep.subr.bf16.mxu0 0
        %2729 = vmatpush1.bf16.msra.mxu0 0
        %2730 = vmatprep.subr.bf16.mxu0 0
        %2731 = vmatpush1.bf16.msra.mxu0 0
        %2732 = vmatprep.subr.bf16.mxu0 0
        %2733 = vmatpush1.bf16.msra.mxu0 0
        %2734 = vmatprep.subr.bf16.mxu0 0
        %2735 = vmatpush1.bf16.msra.mxu0 0
        %2736 = vmatprep.subr.bf16.mxu0 0
        %2737 = vmatpush1.bf16.msra.mxu0 0
        %2738 = vmatprep.subr.bf16.mxu0 0
        %2739 = vmatpush1.bf16.msra.mxu0 0
        %2740 = vmatprep.subr.bf16.mxu0 0
        %2741 = vmatpush1.bf16.msra.mxu0 0
        %2742 = vmatprep.mubr.bf16.mxu0 0
        %2743 = vmatmul.mubr.bf16.gmra.mrb[0].mxu0 %v2708
        %v2744 = vpop.f32.mrb[0].mxu0
        %v2745 = vadd.f32 %v2680, %v2744
        %v2746 = vpop.f32.mrb[0].mxu0
        %v2747 = vpop.f32.mrb[0].mxu0
        %v2748 = vpop.f32.mrb[0].mxu0
        %2749 = vdwg.mxu0
        %v2750 = vadd.f32 %v2597, %v2745
        %v2751 = vld [vmem:[%s1187] sm:$0x1]
        %v2752 = vld [vmem:[%s1190] sm:$0x1]
        %v2753 = vsel %vm1257, %v2750, 0.0
        %2754 = vadd.xlane.f32.xlu0 %v2753
        %v2755 = vpop.xlane.xlu0 %2754
        %v2756 = vmul.f32 %v2755, %v1857
        %v2757 = vsub.f32 %v2750, %v2756
        %v2758 = vmul.f32 %v2757, %v2757
        %v2759 = vsel %vm1257, %v2758, 0.0
        %2760 = vadd.xlane.f32.xlu0 %v2759
        %v2761 = vpop.xlane.xlu0 %2760
        %v2762 = vmul.f32 %v2761, %v1857
        %v2763 = vadd.f32 %v2762, 1e-05
        %v2764 = vrsqrt.pop %v2763
        %v2765 = vmul.f32 %v2757, %v2764
        %v2767 = vlaneseq
        %v2768 = vshrl.u32 %v2767, 7
        %v2769 = vsub.s32 0, %v2768
        %v2770 = vrot.slane %v2751, %v2769
        %v2772 = vmul.f32 %v2765, %v2770
        %v2774 = vlaneseq
        %v2775 = vshrl.u32 %v2774, 7
        %v2776 = vsub.s32 0, %v2775
        %v2777 = vrot.slane %v2752, %v2776
        %v2779 = vadd.f32 %v2772, %v2777
        %2780 = vst.msk [vmem:[#allocation2] sm:$0xff] %vm1257, %v2779
        %p2781 = scmp.eq.s32.totalorder %s46, 1
        // Predicated region
        $region121: #{decoder_forward.1} parent=115 // pred_check
          %p2782 = pneg %p2781
        $region122: #{decoder_forward.1} parent=115 // pred_check_branch
          %2784 = sbr.rel (%p2782) target = $region124
        $region123: #{decoder_forward.1} parent=115 // pred_region
          %2785 = vst.msk [vmem:[%s1082] sm:$0xff] %vm1257, %v2779
        $region124: #{decoder_forward.1} parent=115 // pred_fallthru
          _
        %s2786 = sand.u32 %s685, 1
        %s2787 = scalar_lea.sflag [#allocation4], %s2786
        %s2788 = sand.u32 %s685, 1
        %s2789 = smul.addr %s2788, 8
        %s2790 = scalar_lea.vmem [#allocation3], %s2789
        %p2791 = scmp.lt.s32.totalorder %s46, 1
        %s2792 = scalar_select %p2791, %s46, 1
        %p2793 = scmp.lt.s32.totalorder %s45, 1
        %s2794 = scalar_select %p2793, %s45, 1
        %s2795 = smul.addr %s2792, 2
        %s2796 = sadd.s32 %s2794, %s2795
        %s2797 = smul.addr %s2796, 8
        %s2798 = scalar_lea.vmem %s25, %s2797
        %p2799 = scmp.lt.s32.totalorder %s46, 1
        %s2800 = scalar_select %p2799, %s46, 1
        %p2801 = scmp.lt.s32.totalorder %s45, 1
        %s2802 = scalar_select %p2801, %s45, 1
        %s2803 = smul.addr %s2800, 2
        %s2804 = sadd.s32 %s2802, %s2803
        %s2805 = smul.addr %s2804, 8
        %s2806 = scalar_lea.vmem %s26, %s2805
        // Predicated region
        $region125: #{decoder_forward.1} parent=115 // pred_check
          %p2807 = pneg %p695
        $region126: #{decoder_forward.1} parent=115 // pred_check_branch
          %2809 = sbr.rel (%p2807) target = $region128
        $region127: #{decoder_forward.1} parent=115 // pred_region
          %s2811 = ssub.s32 128, 128
          %2812 = vsyncadd %s2787, %s2811
          %s2813 = smul.addr %s45, 128
          %s2814 = scalar_lea.hbm %s24, %s2813
          %s2816 = sshll.u32 %s2790, 4
          %s2817 = int_to_ptr.vmem [resolvable:$true] %s2816
          %2819 = dma.vmem_to_hbm [thread:$0]  %s2817, 128, %s2814, %s2787
        $region128: #{decoder_forward.1} parent=115 // pred_fallthru
          _
        // Predicated region
        $region129: #{decoder_forward.1} parent=115 // pred_check
          %p2820 = pneg %p723
        $region130: #{decoder_forward.1} parent=115 // pred_check_branch
          %2822 = sbr.rel (%p2820) target = $region132
        $region131: #{decoder_forward.1} parent=115 // pred_region
          _
        $region132: #{decoder_forward.1} parent=115 // pred_fallthru
          _
        // Predicated region
        $region133: #{decoder_forward.1} parent=115 // pred_check
          %p2823 = pneg %p751
        $region134: #{decoder_forward.1} parent=115 // pred_check_branch
          %2825 = sbr.rel (%p2823) target = $region136
        $region135: #{decoder_forward.1} parent=115 // pred_region
          _
        $region136: #{decoder_forward.1} parent=115 // pred_fallthru
          _
      $region116: #{decoder_forward.1} parent=5 // pred_fallthru
        _
      %p2826 = scmp.le.s32.totalorder 2, %s36
      // Predicated region
      $region137: #{decoder_forward.1} parent=5 // pred_check
        %p2827 = pneg %p2826
      $region138: #{decoder_forward.1} parent=5 // pred_check_branch
        %2829 = sbr.rel (%p2827) target = $region140
      $region139: #{decoder_forward.1} parent=5 // pred_region
        %s2830 = ssub.s32 %s36, 2
        // Predicated region
        $region141: #{decoder_forward.1} parent=139 // pred_check
          %p2831 = pneg %p701
        $region142: #{decoder_forward.1} parent=139 // pred_check_branch
          %2833 = sbr.rel (%p2831) target = $region144
        $region143: #{decoder_forward.1} parent=139 // pred_region
          %s2834 = sand.u32 %s686, 1
          %s2835 = scalar_lea.sflag [#allocation4], %s2834
          %s2836 = sand.u32 %s686, 1
          %s2837 = smul.addr %s2836, 8
          %s2838 = scalar_lea.vmem [#allocation3], %s2837
          %2839 = dma.done %s2835, 128
        $region144: #{decoder_forward.1} parent=139 // pred_fallthru
          _
        // Predicated region
        $region145: #{decoder_forward.1} parent=139 // pred_check
          %p2840 = pneg %p729
        $region146: #{decoder_forward.1} parent=139 // pred_check_branch
          %2842 = sbr.rel (%p2840) target = $region148
        $region147: #{decoder_forward.1} parent=139 // pred_region
          %p2843 = scmp.lt.s32.totalorder %s48, 1
          %s2844 = scalar_select %p2843, %s48, 1
          %p2845 = scmp.lt.s32.totalorder %s47, 1
          %s2846 = scalar_select %p2845, %s47, 1
          %s2847 = smul.addr %s2844, 2
          %s2848 = sadd.s32 %s2846, %s2847
          %s2849 = smul.addr %s2848, 8
          %s2850 = scalar_lea.vmem %s25, %s2849
        $region148: #{decoder_forward.1} parent=139 // pred_fallthru
          _
        // Predicated region
        $region149: #{decoder_forward.1} parent=139 // pred_check
          %p2851 = pneg %p757
        $region150: #{decoder_forward.1} parent=139 // pred_check_branch
          %2853 = sbr.rel (%p2851) target = $region152
        $region151: #{decoder_forward.1} parent=139 // pred_region
          %p2854 = scmp.lt.s32.totalorder %s48, 1
          %s2855 = scalar_select %p2854, %s48, 1
          %p2856 = scmp.lt.s32.totalorder %s47, 1
          %s2857 = scalar_select %p2856, %s47, 1
          %s2858 = smul.addr %s2855, 2
          %s2859 = sadd.s32 %s2857, %s2858
          %s2860 = smul.addr %s2859, 8
          %s2861 = scalar_lea.vmem %s26, %s2860
        $region152: #{decoder_forward.1} parent=139 // pred_fallthru
          _
      $region140: #{decoder_forward.1} parent=5 // pred_fallthru
        _
    $region6: #{decoder_forward.1} parent=1 // loop_footer
      %s40 = sadd.s32 1, %s36
    $region7: #{decoder_forward.1} parent=1 // loop_footer_branch
      %35 = sbr.rel target = $region3
    $region8: #{decoder_forward.1} parent=1 // loop_exit
      _
    %2862 = vsyncpa [#allocation4], 1
    %s2863 = scalar_lea.sflag [#allocation4], 1
    %2864 = vsyncpa %s2863, 1

</llo_original>
